<compile_context>
chip_gen: v5e
topology: v5e:2x2
jax: 0.10.0
libtpu: 0.0.40
codegen_flags: <defaults>
</compile_context>

<pallas_src>
import jax
import jax.numpy as jnp
from jax.experimental import pallas as pl
from jax.experimental.pallas import tpu as pltpu


# f32 keeps the strict reference check; jnp.bfloat16 halves GEMM DMA bytes on
# v6e/v7x (accumulation stays f32 via preferred_element_type).
_MXU_DTYPE = jnp.float32
_VMEM_LIMIT = 32 * 1024 * 1024   # comfortably above actual use, safe on v7x too
_ROW_TILE_TARGET = 512           # GEMM M-tile target (multiple of 8)


# -----------------------------------------------------------------------------
# Pallas kernels
# -----------------------------------------------------------------------------
def _conv_relu_pool_kernel(x_ref, w_ref, b_ref, o_ref):
    """Fused conv-GEMM + bias + ReLU + 2x2 maxpool.

    x: (4, Mt, K)  im2col patches, leading dim = pool tap (dh, dw)
    w: (K, N)      reshaped conv weight
    b: (1, N)      bias
    o: (Mt, N)     pooled, ReLU'd output rows (one row per pooled pixel)
    relu(max_t(g_t) + b) == max_t(relu(g_t + b)) since bias/ReLU are monotone.
    """
    w = w_ref[...].astype(_MXU_DTYPE)
    acc = None
    for t in range(4):  # static unroll over the 4 pool taps
        g = jnp.dot(x_ref[t].astype(_MXU_DTYPE), w,
                    preferred_element_type=jnp.float32)
        acc = g if acc is None else jnp.maximum(acc, g)
    o_ref[...] = jnp.maximum(acc + b_ref[...], 0.0).astype(o_ref.dtype)


def _mlp_kernel(x_ref, w1_ref, b1_ref, w2_ref, b2_ref, h_ref, o_ref):
    """Fused linear1 + bias + ReLU + out-layer (padded to 128 lanes)."""
    h = jnp.dot(x_ref[...].astype(_MXU_DTYPE), w1_ref[...].astype(_MXU_DTYPE),
                preferred_element_type=jnp.float32)
    h = jnp.maximum(h + b1_ref[...], 0.0)
    h_ref[...] = h.astype(h_ref.dtype)
    o = jnp.dot(h.astype(_MXU_DTYPE), w2_ref[...].astype(_MXU_DTYPE),
                preferred_element_type=jnp.float32)
    o_ref[...] = (o + b2_ref[...]).astype(o_ref.dtype)


# -----------------------------------------------------------------------------
# Helpers
# -----------------------------------------------------------------------------
def _pick_tile(m, target=_ROW_TILE_TARGET):
    """Largest multiple-of-8 divisor of m that is <= target, else m (full)."""
    if m <= target:
        return m
    for t in range(target, 7, -8):
        if m % t == 0:
            return t
    return m


def _im2col_pool_taps(x_nhwc):
    """(B,H,W,C) -> (4, B*Ho*Wo, 9*C) patches for 3x3/s1/p1 conv + 2x2/s2 pool.

    Tap index t = 2*dh + dw; row index = (b*Ho + ho)*Wo + wo;
    feature index = (kh*3 + kw)*C + c  (matches the (9*C, Cout) weight layout).
    Pure-JAX glue (padding / window extraction / regroup); compute is in Pallas.
    """
    B, H, W, C = x_nhwc.shape
    Ho, Wo = H // 2, W // 2
    xp = jnp.pad(x_nhwc, ((0, 0), (1, 1), (1, 1), (0, 0)))
    cols = [xp[:, kh:kh + H, kw:kw + W, :] for kh in range(3) for kw in range(3)]
    patches = jnp.concatenate(cols, axis=-1)                 # (B,H,W,9C)
    patches = patches.reshape(B, Ho, 2, Wo, 2, 9 * C)
    patches = jnp.transpose(patches, (2, 4, 0, 1, 3, 5))     # (dh,dw,B,Ho,Wo,9C)
    return patches.reshape(4, B * Ho * Wo, 9 * C)


# -----------------------------------------------------------------------------
# Pallas wrappers
# -----------------------------------------------------------------------------
def conv3x3_relu_pool(x_nhwc, w_kc, b):
    """3x3 conv (stride 1, pad 1) + bias + ReLU + 2x2/2 maxpool, one kernel."""
    B, H, W, C = x_nhwc.shape
    Ho, Wo = H // 2, W // 2
    K, Cout = w_kc.shape
    taps = _im2col_pool_taps(x_nhwc)                          # (4, Mp, K)
    Mp = B * Ho * Wo
    Mt = _pick_tile(Mp)
    grid = (Mp // Mt,)
    flops = 2 * 4 * Mp * K * Cout
    bytes_accessed = 4 * (4 * Mp * K + K * Cout + Cout + Mp * Cout)
    y = pl.pallas_call(
        _conv_relu_pool_kernel,
        out_shape=jax.ShapeDtypeStruct((Mp, Cout), jnp.float32),
        grid=grid,
        in_specs=[
            pl.BlockSpec((4, Mt, K), lambda i: (0, i, 0)),
            pl.BlockSpec((K, Cout), lambda i: (0, 0)),
            pl.BlockSpec((1, Cout), lambda i: (0, 0)),
        ],
        out_specs=pl.BlockSpec((Mt, Cout), lambda i: (i, 0)),
        compiler_params=pltpu.CompilerParams(
            dimension_semantics=("parallel",),
            vmem_limit_bytes=_VMEM_LIMIT),
        cost_estimate=pl.CostEstimate(flops=flops, transcendentals=0,
                                      bytes_accessed=bytes_accessed),
    )(taps, w_kc, b.reshape(1, Cout))
    return y.reshape(B, Ho, Wo, Cout)


def mlp_head(x_flat, w1, b1, w2p, b2p):
    """linear1 + ReLU + out layer fused; returns (hidden(B,128), logits_pad(B,128))."""
    B, K1 = x_flat.shape
    H = w1.shape[1]
    NP = w2p.shape[1]
    Bt = _pick_tile(B)
    grid = (B // Bt,)
    flops = 2 * B * (K1 * H + H * NP)
    bytes_accessed = 4 * (B * K1 + K1 * H + H + H * NP + NP + B * H + B * NP)
    hidden, logits_p = pl.pallas_call(
        _mlp_kernel,
        out_shape=(jax.ShapeDtypeStruct((B, H), jnp.float32),
                   jax.ShapeDtypeStruct((B, NP), jnp.float32)),
        grid=grid,
        in_specs=[
            pl.BlockSpec((Bt, K1), lambda i: (i, 0)),
            pl.BlockSpec((K1, H), lambda i: (0, 0)),
            pl.BlockSpec((1, H), lambda i: (0, 0)),
            pl.BlockSpec((H, NP), lambda i: (0, 0)),
            pl.BlockSpec((1, NP), lambda i: (0, 0)),
        ],
        out_specs=(pl.BlockSpec((Bt, H), lambda i: (i, 0)),
                   pl.BlockSpec((Bt, NP), lambda i: (i, 0))),
        compiler_params=pltpu.CompilerParams(
            dimension_semantics=("parallel",),
            vmem_limit_bytes=_VMEM_LIMIT),
        cost_estimate=pl.CostEstimate(flops=flops, transcendentals=0,
                                      bytes_accessed=bytes_accessed),
    )(x_flat, w1, b1.reshape(1, H), w2p, b2p.reshape(1, NP))
    return hidden, logits_p


# -----------------------------------------------------------------------------
# Parameters (PyTorch layout) + one-time kernel-layout preparation
# -----------------------------------------------------------------------------
def init_params(key):
    ks = jax.random.split(key, 8)
    s = 0.05
    return {
        "w_conv1": jax.random.normal(ks[0], (32, 1, 3, 3), jnp.float32) * s,
        "b_conv1": jax.random.normal(ks[1], (32,), jnp.float32) * s,
        "w_conv2": jax.random.normal(ks[2], (64, 32, 3, 3), jnp.float32) * s,
        "b_conv2": jax.random.normal(ks[3], (64,), jnp.float32) * s,
        "w_lin1": jax.random.normal(ks[4], (128, 64 * 7 * 7), jnp.float32) * s,  # (out,in)
        "b_lin1": jax.random.normal(ks[5], (128,), jnp.float32) * s,
        "w_out": jax.random.normal(ks[6], (10, 128), jnp.float32) * s,           # (out,in)
        "b_out": jax.random.normal(ks[7], (10,), jnp.float32) * s,
    }


def prepare_params(params):
    """One-time re-layout of PyTorch-style params into kernel layouts (hoisted
    out of the forward pass)."""
    # Conv weights: (O,I,3,3) -> (kh,kw,ci,o) -> (9*Cin, Cout)
    w1c = jnp.transpose(params["w_conv1"], (2, 3, 1, 0)).reshape(9 * 1, 32)
    w2c = jnp.transpose(params["w_conv2"], (2, 3, 1, 0)).reshape(9 * 32, 64)
    # linear1: transpose to (in,out) AND permute input columns so it directly
    # consumes the NHWC-flattened activation (kills the per-forward transpose).
    w_l1 = jnp.transpose(params["w_lin1"].reshape(128, 64, 7, 7),
                         (2, 3, 1, 0)).reshape(64 * 7 * 7, 128)
    # Output layer: transpose and zero-pad 10 -> 128 lanes for lane-dense stores.
    w_l2 = jnp.zeros((128, 128), jnp.float32).at[:, :10].set(params["w_out"].T)
    b_l2 = jnp.zeros((128,), jnp.float32).at[:10].set(params["b_out"])
    return {
        "w1c": w1c, "b1c": params["b_conv1"],
        "w2c": w2c, "b2c": params["b_conv2"],
        "w_l1": w_l1, "b_l1": params["b_lin1"],
        "w_l2": w_l2, "b_l2": b_l2,
    }


# -----------------------------------------------------------------------------
# Full CNN forward (mirrors the PyTorch module)
# -----------------------------------------------------------------------------
def cnn_forward(x_nchw, prep):
    B = x_nchw.shape[0]
    x = jnp.transpose(x_nchw, (0, 2, 3, 1))                        # NCHW -> NHWC
    x = conv3x3_relu_pool(x, prep["w1c"], prep["b1c"])             # (B,14,14,32)
    x = conv3x3_relu_pool(x, prep["w2c"], prep["b2c"])             # (B,7,7,64)
    x = x.reshape(B, 7 * 7 * 64)                                   # NHWC flatten (free)
    hidden, logits_p = mlp_head(x, prep["w_l1"], prep["b_l1"],
                                prep["w_l2"], prep["b_l2"])
    return logits_p[:, :10], hidden


# -----------------------------------------------------------------------------
# Pure-JAX reference (for correctness sanity check against PyTorch semantics)
# -----------------------------------------------------------------------------
def ref_forward(x_nchw, params):
    def conv(x, w, b):
        y = jax.lax.conv_general_dilated(
            x, w, (1, 1), ((1, 1), (1, 1)),
            dimension_numbers=("NCHW", "OIHW", "NCHW"))
        return jax.nn.relu(y + b.reshape(1, -1, 1, 1))

    def pool(x):
        return jax.lax.reduce_window(
            x, -jnp.inf, jax.lax.max, (1, 1, 2, 2), (1, 1, 2, 2), "VALID")

    x = pool(conv(x_nchw, params["w_conv1"], params["b_conv1"]))
    x = pool(conv(x, params["w_conv2"], params["b_conv2"]))
    x = x.reshape(x.shape[0], -1)
    h = jax.nn.relu(x @ params["w_lin1"].T + params["b_lin1"])
    out = h @ params["w_out"].T + params["b_out"]
    return out, h


if __name__ == "__main__":
    key = jax.random.PRNGKey(0)
    k_x, k_p = jax.random.split(key)

    # MNIST-like input: batch=2, 1 channel, 28x28 (required by the 64*7*7 Linear).
    x = jax.random.normal(k_x, (2, 1, 28, 28), jnp.float32)
    params = init_params(k_p)
    prep = jax.block_until_ready(prepare_params(params))   # one-time layout work

    fwd = jax.jit(cnn_forward)
    out, hidden = fwd(x, prep)
    out = jax.block_until_ready(out)
    hidden = jax.block_until_ready(hidden)

    assert out.shape == (2, 10) and hidden.shape == (2, 128)

    ref_out, ref_hidden = ref_forward(x, params)
    assert jnp.allclose(out, ref_out, rtol=1e-3, atol=1e-3)
    assert jnp.allclose(hidden, ref_hidden, rtol=1e-3, atol=1e-3)

    print("KERNEL_OK")
</pallas_src>

<mosaic_0001>
module attributes {stable_mosaic.version = 11 : i64} {
  func.func @_conv_relu_pool_kernel(%arg0: i32, %arg1: memref<4x392x9xf32, #tpu.memory_space<vmem>>, %arg2: memref<9x32xf32, #tpu.memory_space<vmem>>, %arg3: memref<1x32xf32, #tpu.memory_space<vmem>>, %arg4: memref<392x32xf32, #tpu.memory_space<vmem>>) attributes {dimension_semantics = [#tpu.dimension_semantics<parallel>], iteration_bounds = array<i64: 1>, scalar_prefetch = 0 : i64, scratch_operands = 0 : i64, tpu.core_type = #tpu.core_type<tc>, window_params = [{transform_indices = @transform_0, window_bounds = array<i64: 4, 392, 9>}, {pipeline_mode = #tpu.pipeline_mode<synchronous>, transform_indices = @transform_1, window_bounds = array<i64: 9, 32>}, {pipeline_mode = #tpu.pipeline_mode<synchronous>, transform_indices = @transform_2, window_bounds = array<i64: 1, 32>}, {transform_indices = @transform_3, window_bounds = array<i64: 392, 32>}]} {
    %c0 = arith.constant 0 : index
    %c0_0 = arith.constant 0 : index
    %0 = vector.load %arg2[%c0, %c0_0] : memref<9x32xf32, #tpu.memory_space<vmem>>, vector<9x32xf32>
    %c0_1 = arith.constant 0 : index
    %c0_2 = arith.constant 0 : index
    %c0_3 = arith.constant 0 : index
    %1 = vector.load %arg1[%c0_1, %c0_2, %c0_3] : memref<4x392x9xf32, #tpu.memory_space<vmem>>, vector<1x392x9xf32>
    %2 = vector.shape_cast %1 : vector<1x392x9xf32> to vector<392x9xf32>
    %cst = arith.constant dense<0.000000e+00> : vector<392x32xf32>
    %3 = tpu.matmul %2, %0, %cst {dimension_numbers = #tpu.dot_dimension_numbers<[1], [0], [0], [1], [0, 0, 1, 1], [], []>} : vector<392x9xf32>, vector<9x32xf32>, vector<392x32xf32> -> vector<392x32xf32>
    %c1 = arith.constant 1 : index
    %c0_4 = arith.constant 0 : index
    %c0_5 = arith.constant 0 : index
    %4 = vector.load %arg1[%c1, %c0_4, %c0_5] : memref<4x392x9xf32, #tpu.memory_space<vmem>>, vector<1x392x9xf32>
    %5 = vector.shape_cast %4 : vector<1x392x9xf32> to vector<392x9xf32>
    %cst_6 = arith.constant dense<0.000000e+00> : vector<392x32xf32>
    %6 = tpu.matmul %5, %0, %cst_6 {dimension_numbers = #tpu.dot_dimension_numbers<[1], [0], [0], [1], [0, 0, 1, 1], [], []>} : vector<392x9xf32>, vector<9x32xf32>, vector<392x32xf32> -> vector<392x32xf32>
    %7 = arith.maximumf %3, %6 : vector<392x32xf32>
    %c2 = arith.constant 2 : index
    %c0_7 = arith.constant 0 : index
    %c0_8 = arith.constant 0 : index
    %8 = vector.load %arg1[%c2, %c0_7, %c0_8] : memref<4x392x9xf32, #tpu.memory_space<vmem>>, vector<1x392x9xf32>
    %9 = vector.shape_cast %8 : vector<1x392x9xf32> to vector<392x9xf32>
    %cst_9 = arith.constant dense<0.000000e+00> : vector<392x32xf32>
    %10 = tpu.matmul %9, %0, %cst_9 {dimension_numbers = #tpu.dot_dimension_numbers<[1], [0], [0], [1], [0, 0, 1, 1], [], []>} : vector<392x9xf32>, vector<9x32xf32>, vector<392x32xf32> -> vector<392x32xf32>
    %11 = arith.maximumf %7, %10 : vector<392x32xf32>
    %c3 = arith.constant 3 : index
    %c0_10 = arith.constant 0 : index
    %c0_11 = arith.constant 0 : index
    %12 = vector.load %arg1[%c3, %c0_10, %c0_11] : memref<4x392x9xf32, #tpu.memory_space<vmem>>, vector<1x392x9xf32>
    %13 = vector.shape_cast %12 : vector<1x392x9xf32> to vector<392x9xf32>
    %cst_12 = arith.constant dense<0.000000e+00> : vector<392x32xf32>
    %14 = tpu.matmul %13, %0, %cst_12 {dimension_numbers = #tpu.dot_dimension_numbers<[1], [0], [0], [1], [0, 0, 1, 1], [], []>} : vector<392x9xf32>, vector<9x32xf32>, vector<392x32xf32> -> vector<392x32xf32>
    %15 = arith.maximumf %11, %14 : vector<392x32xf32>
    %c0_13 = arith.constant 0 : index
    %c0_14 = arith.constant 0 : index
    %16 = vector.load %arg3[%c0_13, %c0_14] : memref<1x32xf32, #tpu.memory_space<vmem>>, vector<1x32xf32>
    %17 = vector.broadcast %16 : vector<1x32xf32> to vector<392x32xf32>
    %18 = arith.addf %15, %17 : vector<392x32xf32>
    %cst_15 = arith.constant 0.000000e+00 : f32
    %19 = vector.broadcast %cst_15 : f32 to vector<392x32xf32>
    %20 = arith.maximumf %18, %19 : vector<392x32xf32>
    %c0_16 = arith.constant 0 : index
    %c0_17 = arith.constant 0 : index
    %21 = vector.load %arg4[%c0_16, %c0_17] : memref<392x32xf32, #tpu.memory_space<vmem>>, vector<392x32xf32>
    tpu.vector_store %arg4[%c0_16, %c0_17], %20 {strides = array<i32>} : memref<392x32xf32, #tpu.memory_space<vmem>>, vector<392x32xf32>,
    return
  }
  func.func @transform_0(%arg0: i32) -> (i32, i32, i32) {
    %c0_i32 = arith.constant 0 : i32
    %c0_i32_0 = arith.constant 0 : i32
    %c0_i32_1 = arith.constant 0 : i32
    return %c0_i32, %arg0, %c0_i32_0 : i32, i32, i32
  }
  func.func @transform_1(%arg0: i32) -> (i32, i32) {
    %c0_i32 = arith.constant 0 : i32
    %c0_i32_0 = arith.constant 0 : i32
    %c0_i32_1 = arith.constant 0 : i32
    return %c0_i32, %c0_i32_0 : i32, i32
  }
  func.func @transform_2(%arg0: i32) -> (i32, i32) {
    %c0_i32 = arith.constant 0 : i32
    %c0_i32_0 = arith.constant 0 : i32
    %c0_i32_1 = arith.constant 0 : i32
    return %c0_i32, %c0_i32_0 : i32, i32
  }
  func.func @transform_3(%arg0: i32) -> (i32, i32) {
    %c0_i32 = arith.constant 0 : i32
    %c0_i32_0 = arith.constant 0 : i32
    return %arg0, %c0_i32 : i32, i32
  }
}

module attributes {stable_mosaic.version = 11 : i64} {
  func.func @_conv_relu_pool_kernel(%arg0: i32, %arg1: memref<4x98x288xf32, #tpu.memory_space<vmem>>, %arg2: memref<288x64xf32, #tpu.memory_space<vmem>>, %arg3: memref<1x64xf32, #tpu.memory_space<vmem>>, %arg4: memref<98x64xf32, #tpu.memory_space<vmem>>) attributes {dimension_semantics = [#tpu.dimension_semantics<parallel>], iteration_bounds = array<i64: 1>, scalar_prefetch = 0 : i64, scratch_operands = 0 : i64, tpu.core_type = #tpu.core_type<tc>, window_params = [{transform_indices = @transform_0, window_bounds = array<i64: 4, 98, 288>}, {pipeline_mode = #tpu.pipeline_mode<synchronous>, transform_indices = @transform_1, window_bounds = array<i64: 288, 64>}, {pipeline_mode = #tpu.pipeline_mode<synchronous>, transform_indices = @transform_2, window_bounds = array<i64: 1, 64>}, {transform_indices = @transform_3, window_bounds = array<i64: 98, 64>}]} {
    %c0 = arith.constant 0 : index
    %c0_0 = arith.constant 0 : index
    %0 = vector.load %arg2[%c0, %c0_0] : memref<288x64xf32, #tpu.memory_space<vmem>>, vector<288x64xf32>
    %c0_1 = arith.constant 0 : index
    %c0_2 = arith.constant 0 : index
    %c0_3 = arith.constant 0 : index
    %1 = vector.load %arg1[%c0_1, %c0_2, %c0_3] : memref<4x98x288xf32, #tpu.memory_space<vmem>>, vector<1x98x288xf32>
    %2 = vector.shape_cast %1 : vector<1x98x288xf32> to vector<98x288xf32>
    %cst = arith.constant dense<0.000000e+00> : vector<98x64xf32>
    %3 = tpu.matmul %2, %0, %cst {dimension_numbers = #tpu.dot_dimension_numbers<[1], [0], [0], [1], [0, 0, 1, 1], [], []>} : vector<98x288xf32>, vector<288x64xf32>, vector<98x64xf32> -> vector<98x64xf32>
    %c1 = arith.constant 1 : index
    %c0_4 = arith.constant 0 : index
    %c0_5 = arith.constant 0 : index
    %4 = vector.load %arg1[%c1, %c0_4, %c0_5] : memref<4x98x288xf32, #tpu.memory_space<vmem>>, vector<1x98x288xf32>
    %5 = vector.shape_cast %4 : vector<1x98x288xf32> to vector<98x288xf32>
    %cst_6 = arith.constant dense<0.000000e+00> : vector<98x64xf32>
    %6 = tpu.matmul %5, %0, %cst_6 {dimension_numbers = #tpu.dot_dimension_numbers<[1], [0], [0], [1], [0, 0, 1, 1], [], []>} : vector<98x288xf32>, vector<288x64xf32>, vector<98x64xf32> -> vector<98x64xf32>
    %7 = arith.maximumf %3, %6 : vector<98x64xf32>
    %c2 = arith.constant 2 : index
    %c0_7 = arith.constant 0 : index
    %c0_8 = arith.constant 0 : index
    %8 = vector.load %arg1[%c2, %c0_7, %c0_8] : memref<4x98x288xf32, #tpu.memory_space<vmem>>, vector<1x98x288xf32>
    %9 = vector.shape_cast %8 : vector<1x98x288xf32> to vector<98x288xf32>
    %cst_9 = arith.constant dense<0.000000e+00> : vector<98x64xf32>
    %10 = tpu.matmul %9, %0, %cst_9 {dimension_numbers = #tpu.dot_dimension_numbers<[1], [0], [0], [1], [0, 0, 1, 1], [], []>} : vector<98x288xf32>, vector<288x64xf32>, vector<98x64xf32> -> vector<98x64xf32>
    %11 = arith.maximumf %7, %10 : vector<98x64xf32>
    %c3 = arith.constant 3 : index
    %c0_10 = arith.constant 0 : index
    %c0_11 = arith.constant 0 : index
    %12 = vector.load %arg1[%c3, %c0_10, %c0_11] : memref<4x98x288xf32, #tpu.memory_space<vmem>>, vector<1x98x288xf32>
    %13 = vector.shape_cast %12 : vector<1x98x288xf32> to vector<98x288xf32>
    %cst_12 = arith.constant dense<0.000000e+00> : vector<98x64xf32>
    %14 = tpu.matmul %13, %0, %cst_12 {dimension_numbers = #tpu.dot_dimension_numbers<[1], [0], [0], [1], [0, 0, 1, 1], [], []>} : vector<98x288xf32>, vector<288x64xf32>, vector<98x64xf32> -> vector<98x64xf32>
    %15 = arith.maximumf %11, %14 : vector<98x64xf32>
    %c0_13 = arith.constant 0 : index
    %c0_14 = arith.constant 0 : index
    %16 = vector.load %arg3[%c0_13, %c0_14] : memref<1x64xf32, #tpu.memory_space<vmem>>, vector<1x64xf32>
    %17 = vector.broadcast %16 : vector<1x64xf32> to vector<98x64xf32>
    %18 = arith.addf %15, %17 : vector<98x64xf32>
    %cst_15 = arith.constant 0.000000e+00 : f32
    %19 = vector.broadcast %cst_15 : f32 to vector<98x64xf32>
    %20 = arith.maximumf %18, %19 : vector<98x64xf32>
    %c0_16 = arith.constant 0 : index
    %c0_17 = arith.constant 0 : index
    %21 = vector.load %arg4[%c0_16, %c0_17] : memref<98x64xf32, #tpu.memory_space<vmem>>, vector<98x64xf32>
    tpu.vector_store %arg4[%c0_16, %c0_17], %20 {strides = array<i32>} : memref<98x64xf32, #tpu.memory_space<vmem>>, vector<98x64xf32>,
    return
  }
  func.func @transform_0(%arg0: i32) -> (i32, i32, i32) {
    %c0_i32 = arith.constant 0 : i32
    %c0_i32_0 = arith.constant 0 : i32
    %c0_i32_1 = arith.constant 0 : i32
    return %c0_i32, %arg0, %c0_i32_0 : i32, i32, i32
  }
  func.func @transform_1(%arg0: i32) -> (i32, i32) {
    %c0_i32 = arith.constant 0 : i32
    %c0_i32_0 = arith.constant 0 : i32
    %c0_i32_1 = arith.constant 0 : i32
    return %c0_i32, %c0_i32_0 : i32, i32
  }
  func.func @transform_2(%arg0: i32) -> (i32, i32) {
    %c0_i32 = arith.constant 0 : i32
    %c0_i32_0 = arith.constant 0 : i32
    %c0_i32_1 = arith.constant 0 : i32
    return %c0_i32, %c0_i32_0 : i32, i32
  }
  func.func @transform_3(%arg0: i32) -> (i32, i32) {
    %c0_i32 = arith.constant 0 : i32
    %c0_i32_0 = arith.constant 0 : i32
    return %arg0, %c0_i32 : i32, i32
  }
}

module attributes {stable_mosaic.version = 11 : i64} {
  func.func @_mlp_kernel(%arg0: i32, %arg1: memref<2x3136xf32, #tpu.memory_space<vmem>>, %arg2: memref<3136x128xf32, #tpu.memory_space<vmem>>, %arg3: memref<1x128xf32, #tpu.memory_space<vmem>>, %arg4: memref<128x128xf32, #tpu.memory_space<vmem>>, %arg5: memref<1x128xf32, #tpu.memory_space<vmem>>, %arg6: memref<2x128xf32, #tpu.memory_space<vmem>>, %arg7: memref<2x128xf32, #tpu.memory_space<vmem>>) attributes {dimension_semantics = [#tpu.dimension_semantics<parallel>], iteration_bounds = array<i64: 1>, scalar_prefetch = 0 : i64, scratch_operands = 0 : i64, tpu.core_type = #tpu.core_type<tc>, window_params = [{transform_indices = @transform_0, window_bounds = array<i64: 2, 3136>}, {pipeline_mode = #tpu.pipeline_mode<synchronous>, transform_indices = @transform_1, window_bounds = array<i64: 3136, 128>}, {pipeline_mode = #tpu.pipeline_mode<synchronous>, transform_indices = @transform_2, window_bounds = array<i64: 1, 128>}, {pipeline_mode = #tpu.pipeline_mode<synchronous>, transform_indices = @transform_3, window_bounds = array<i64: 128, 128>}, {pipeline_mode = #tpu.pipeline_mode<synchronous>, transform_indices = @transform_4, window_bounds = array<i64: 1, 128>}, {transform_indices = @transform_5, window_bounds = array<i64: 2, 128>}, {transform_indices = @transform_6, window_bounds = array<i64: 2, 128>}]} {
    %c0 = arith.constant 0 : index
    %c0_0 = arith.constant 0 : index
    %0 = vector.load %arg1[%c0, %c0_0] : memref<2x3136xf32, #tpu.memory_space<vmem>>, vector<2x3136xf32>
    %c0_1 = arith.constant 0 : index
    %c0_2 = arith.constant 0 : index
    %1 = vector.load %arg2[%c0_1, %c0_2] : memref<3136x128xf32, #tpu.memory_space<vmem>>, vector<3136x128xf32>
    %cst = arith.constant dense<0.000000e+00> : vector<2x128xf32>
    %2 = tpu.matmul %0, %1, %cst {dimension_numbers = #tpu.dot_dimension_numbers<[1], [0], [0], [1], [0, 0, 1, 1], [], []>} : vector<2x3136xf32>, vector<3136x128xf32>, vector<2x128xf32> -> vector<2x128xf32>
    %c0_3 = arith.constant 0 : index
    %c0_4 = arith.constant 0 : index
    %3 = vector.load %arg3[%c0_3, %c0_4] : memref<1x128xf32, #tpu.memory_space<vmem>>, vector<1x128xf32>
    %4 = vector.broadcast %3 : vector<1x128xf32> to vector<2x128xf32>
    %5 = arith.addf %2, %4 : vector<2x128xf32>
    %cst_5 = arith.constant 0.000000e+00 : f32
    %6 = vector.broadcast %cst_5 : f32 to vector<2x128xf32>
    %7 = arith.maximumf %5, %6 : vector<2x128xf32>
    %c0_6 = arith.constant 0 : index
    %c0_7 = arith.constant 0 : index
    %8 = vector.load %arg6[%c0_6, %c0_7] : memref<2x128xf32, #tpu.memory_space<vmem>>, vector<2x128xf32>
    tpu.vector_store %arg6[%c0_6, %c0_7], %7 {strides = array<i32>} : memref<2x128xf32, #tpu.memory_space<vmem>>, vector<2x128xf32>,
    %c0_8 = arith.constant 0 : index
    %c0_9 = arith.constant 0 : index
    %9 = vector.load %arg4[%c0_8, %c0_9] : memref<128x128xf32, #tpu.memory_space<vmem>>, vector<128x128xf32>
    %cst_10 = arith.constant dense<0.000000e+00> : vector<2x128xf32>
    %10 = tpu.matmul %7, %9, %cst_10 {dimension_numbers = #tpu.dot_dimension_numbers<[1], [0], [0], [1], [0, 0, 1, 1], [], []>} : vector<2x128xf32>, vector<128x128xf32>, vector<2x128xf32> -> vector<2x128xf32>
    %c0_11 = arith.constant 0 : index
    %c0_12 = arith.constant 0 : index
    %11 = vector.load %arg5[%c0_11, %c0_12] : memref<1x128xf32, #tpu.memory_space<vmem>>, vector<1x128xf32>
    %12 = vector.broadcast %11 : vector<1x128xf32> to vector<2x128xf32>
    %13 = arith.addf %10, %12 : vector<2x128xf32>
    %c0_13 = arith.constant 0 : index
    %c0_14 = arith.constant 0 : index
    %14 = vector.load %arg7[%c0_13, %c0_14] : memref<2x128xf32, #tpu.memory_space<vmem>>, vector<2x128xf32>
    tpu.vector_store %arg7[%c0_13, %c0_14], %13 {strides = array<i32>} : memref<2x128xf32, #tpu.memory_space<vmem>>, vector<2x128xf32>,
    return
  }
  func.func @transform_0(%arg0: i32) -> (i32, i32) {
    %c0_i32 = arith.constant 0 : i32
    %c0_i32_0 = arith.constant 0 : i32
    return %arg0, %c0_i32 : i32, i32
  }
  func.func @transform_1(%arg0: i32) -> (i32, i32) {
    %c0_i32 = arith.constant 0 : i32
    %c0_i32_0 = arith.constant 0 : i32
    %c0_i32_1 = arith.constant 0 : i32
    return %c0_i32, %c0_i32_0 : i32, i32
  }
  func.func @transform_2(%arg0: i32) -> (i32, i32) {
    %c0_i32 = arith.constant 0 : i32
    %c0_i32_0 = arith.constant 0 : i32
    %c0_i32_1 = arith.constant 0 : i32
    return %c0_i32, %c0_i32_0 : i32, i32
  }
  func.func @transform_3(%arg0: i32) -> (i32, i32) {
    %c0_i32 = arith.constant 0 : i32
    %c0_i32_0 = arith.constant 0 : i32
    %c0_i32_1 = arith.constant 0 : i32
    return %c0_i32, %c0_i32_0 : i32, i32
  }
  func.func @transform_4(%arg0: i32) -> (i32, i32) {
    %c0_i32 = arith.constant 0 : i32
    %c0_i32_0 = arith.constant 0 : i32
    %c0_i32_1 = arith.constant 0 : i32
    return %c0_i32, %c0_i32_0 : i32, i32
  }
  func.func @transform_5(%arg0: i32) -> (i32, i32) {
    %c0_i32 = arith.constant 0 : i32
    %c0_i32_0 = arith.constant 0 : i32
    return %arg0, %c0_i32 : i32, i32
  }
  func.func @transform_6(%arg0: i32) -> (i32, i32) {
    %c0_i32 = arith.constant 0 : i32
    %c0_i32_0 = arith.constant 0 : i32
    return %arg0, %c0_i32 : i32, i32
  }
}

</mosaic_0001>

<llo_original>
// kernel: cnn_forward.3
$region0: #{cnn_forward.3}
  #allocation0 [shape = 'u32[]', space=smem, size = 0x4, offset = 0x4, fixed_abs, tag = 'smem constant byte address 0x4 - core index']
  #allocation1 [shape = 'u32[72,128]{1,0:T(1,128)}', space=vmem, size = 0x9000, scoped, tag = 'internal scratch']
  %s0 = inlined_call_operand.vmem [shape: f32[4,392,9], index: 0, kind: input, shape index: {}]
  %s1 = inlined_call_operand.vmem [shape: f32[9,32], index: 1, kind: input, shape index: {}]
  %s2 = inlined_call_operand.vmem [shape: f32[1,32], index: 2, kind: input, shape index: {}]
  %s3 = inlined_call_operand.vmem [shape: f32[392,32], index: 3, kind: output, shape index: {}]
  %s4 = sld [smem:[#allocation0]]
  $region22: #{cnn_forward.3} parent=0
    _
  %s6 = ssub.s32 1, %s4
  %s7 = scalar_select 0, %s6, %s4
  // Predicated region
  $region2: #{cnn_forward.3} parent=0 // pred_check
    _
  $region3: #{cnn_forward.3} parent=0 // pred_check_branch
    %9 = sbr.rel (0) target = $region5
  $region4: #{cnn_forward.3} parent=0 // pred_region
    _
  $region5: #{cnn_forward.3} parent=0 // pred_fallthru
    _
  // Predicated region
  $region6: #{cnn_forward.3} parent=0 // pred_check
    _
  $region7: #{cnn_forward.3} parent=0 // pred_check_branch
    %11 = sbr.rel (0) target = $region9
  $region8: #{cnn_forward.3} parent=0 // pred_region
    _
  $region9: #{cnn_forward.3} parent=0 // pred_fallthru
    _
  // Predicated region
  $region10: #{cnn_forward.3} parent=0 // pred_check
    _
  $region11: #{cnn_forward.3} parent=0 // pred_check_branch
    %13 = sbr.rel (0) target = $region13
  $region12: #{cnn_forward.3} parent=0 // pred_region
    _
  $region13: #{cnn_forward.3} parent=0 // pred_fallthru
    _
  %v14 = vld [vmem:[%s1] sm:$0xff]
  %v15 = vld [vmem:[%s1 + $0x8] sm:$0x1]
  %v16 = vld [vmem:[%s0] sm:$0xff]
  %v17 = vld [vmem:[%s0 + $0x8] sm:$0xff]
  %v18 = vld [vmem:[%s0 + $0x10] sm:$0xff]
  %v19 = vld [vmem:[%s0 + $0x18] sm:$0xff]
  %v20 = vld [vmem:[%s0 + $0x20] sm:$0xff]
  %v21 = vld [vmem:[%s0 + $0x28] sm:$0xff]
  %v22 = vld [vmem:[%s0 + $0x30] sm:$0xff]
  %v23 = vld [vmem:[%s0 + $0x38] sm:$0xff]
  %v24 = vld [vmem:[%s0 + $0x40] sm:$0xff]
  %v25 = vld [vmem:[%s0 + $0x48] sm:$0xff]
  %v26 = vld [vmem:[%s0 + $0x50] sm:$0xff]
  %v27 = vld [vmem:[%s0 + $0x58] sm:$0xff]
  %v28 = vld [vmem:[%s0 + $0x60] sm:$0xff]
  %v29 = vld [vmem:[%s0 + $0x68] sm:$0xff]
  %v30 = vld [vmem:[%s0 + $0x70] sm:$0xff]
  %v31 = vld [vmem:[%s0 + $0x78] sm:$0xff]
  %v32 = vld [vmem:[%s0 + $0x80] sm:$0xff]
  %v33 = vld [vmem:[%s0 + $0x88] sm:$0xff]
  %v34 = vld [vmem:[%s0 + $0x90] sm:$0xff]
  %v35 = vld [vmem:[%s0 + $0x98] sm:$0xff]
  %v36 = vld [vmem:[%s0 + $0xa0] sm:$0xff]
  %v37 = vld [vmem:[%s0 + $0xa8] sm:$0xff]
  %v38 = vld [vmem:[%s0 + $0xb0] sm:$0xff]
  %v39 = vld [vmem:[%s0 + $0xb8] sm:$0xff]
  %v40 = vld [vmem:[%s0 + $0xc0] sm:$0xff]
  %v41 = vld [vmem:[%s0 + $0xc8] sm:$0xff]
  %v42 = vld [vmem:[%s0 + $0xd0] sm:$0xff]
  %v43 = vld [vmem:[%s0 + $0xd8] sm:$0xff]
  %v44 = vld [vmem:[%s0 + $0xe0] sm:$0xff]
  %v45 = vld [vmem:[%s0 + $0xe8] sm:$0xff]
  %v46 = vld [vmem:[%s0 + $0xf0] sm:$0xff]
  %v47 = vld [vmem:[%s0 + $0xf8] sm:$0xff]
  %v48 = vld [vmem:[%s0 + $0x100] sm:$0xff]
  %v49 = vld [vmem:[%s0 + $0x108] sm:$0xff]
  %v50 = vld [vmem:[%s0 + $0x110] sm:$0xff]
  %v51 = vld [vmem:[%s0 + $0x118] sm:$0xff]
  %v52 = vld [vmem:[%s0 + $0x120] sm:$0xff]
  %v53 = vld [vmem:[%s0 + $0x128] sm:$0xff]
  %v54 = vld [vmem:[%s0 + $0x130] sm:$0xff]
  %v55 = vld [vmem:[%s0 + $0x138] sm:$0xff]
  %v56 = vld [vmem:[%s0 + $0x140] sm:$0xff]
  %v57 = vld [vmem:[%s0 + $0x148] sm:$0xff]
  %v58 = vld [vmem:[%s0 + $0x150] sm:$0xff]
  %v59 = vld [vmem:[%s0 + $0x158] sm:$0xff]
  %v60 = vld [vmem:[%s0 + $0x160] sm:$0xff]
  %v61 = vld [vmem:[%s0 + $0x168] sm:$0xff]
  %v62 = vld [vmem:[%s0 + $0x170] sm:$0xff]
  %v63 = vld [vmem:[%s0 + $0x178] sm:$0xff]
  %v64 = vld [vmem:[%s0 + $0x180] sm:$0xff]
  %vm65 = vcmask 72704
  %v67 = vsel %vm65, %v16, 0
  %v70 = vsel %vm65, %v17, 0
  %v73 = vsel %vm65, %v18, 0
  %v76 = vsel %vm65, %v19, 0
  %v79 = vsel %vm65, %v20, 0
  %v82 = vsel %vm65, %v21, 0
  %v85 = vsel %vm65, %v22, 0
  %v88 = vsel %vm65, %v23, 0
  %v91 = vsel %vm65, %v24, 0
  %v94 = vsel %vm65, %v25, 0
  %v97 = vsel %vm65, %v26, 0
  %v100 = vsel %vm65, %v27, 0
  %v103 = vsel %vm65, %v28, 0
  %v106 = vsel %vm65, %v29, 0
  %v109 = vsel %vm65, %v30, 0
  %v112 = vsel %vm65, %v31, 0
  %v115 = vsel %vm65, %v32, 0
  %v118 = vsel %vm65, %v33, 0
  %v121 = vsel %vm65, %v34, 0
  %v124 = vsel %vm65, %v35, 0
  %v127 = vsel %vm65, %v36, 0
  %v130 = vsel %vm65, %v37, 0
  %v133 = vsel %vm65, %v38, 0
  %v136 = vsel %vm65, %v39, 0
  %v139 = vsel %vm65, %v40, 0
  %v142 = vsel %vm65, %v41, 0
  %v145 = vsel %vm65, %v42, 0
  %v148 = vsel %vm65, %v43, 0
  %v151 = vsel %vm65, %v44, 0
  %v154 = vsel %vm65, %v45, 0
  %v157 = vsel %vm65, %v46, 0
  %v160 = vsel %vm65, %v47, 0
  %v163 = vsel %vm65, %v48, 0
  %v166 = vsel %vm65, %v49, 0
  %v169 = vsel %vm65, %v50, 0
  %v172 = vsel %vm65, %v51, 0
  %v175 = vsel %vm65, %v52, 0
  %v178 = vsel %vm65, %v53, 0
  %v181 = vsel %vm65, %v54, 0
  %v184 = vsel %vm65, %v55, 0
  %v187 = vsel %vm65, %v56, 0
  %v190 = vsel %vm65, %v57, 0
  %v193 = vsel %vm65, %v58, 0
  %v196 = vsel %vm65, %v59, 0
  %v199 = vsel %vm65, %v60, 0
  %v202 = vsel %vm65, %v61, 0
  %v205 = vsel %vm65, %v62, 0
  %v208 = vsel %vm65, %v63, 0
  %v211 = vsel %vm65, %v64, 0
  %vm213 = vcmask 1040384
  %v215 = vsel %vm213, %v15, 0
  %217 = vmatpush.msra.mxu0 0.0
  %218 = vmatpush.msra.mxu0 0.0
  %219 = vmatpush.msra.mxu0 0.0
  %220 = vmatpush.msra.mxu0 0.0
  %221 = vmatpush.msra.mxu0 0.0
  %222 = vmatpush.msra.mxu0 0.0
  %223 = vmatpush.msra.mxu0 0.0
  %224 = vmatpush.msra.mxu0 0.0
  %225 = vmatpush.msra.mxu0 0.0
  %226 = vmatpush.msra.mxu0 0.0
  %227 = vmatpush.msra.mxu0 0.0
  %228 = vmatpush.msra.mxu0 0.0
  %229 = vmatpush.msra.mxu0 0.0
  %230 = vmatpush.msra.mxu0 0.0
  %231 = vmatpush.msra.mxu0 %v215
  %232 = vmatpush.msra.mxu0 %v14
  %233 = vmatmul.f32.gmra.mxu0 %v67
  %v234 = vpop.f32.mrf.mxu0
  %v235 = vadd.f32 0.0, %v234
  %236 = vmatmul.f32.gmra.mxu0 %v70
  %v237 = vpop.f32.mrf.mxu0
  %v238 = vadd.f32 0.0, %v237
  %239 = vmatmul.f32.gmra.mxu0 %v73
  %v240 = vpop.f32.mrf.mxu0
  %v241 = vadd.f32 0.0, %v240
  %242 = vmatmul.f32.gmra.mxu0 %v76
  %v243 = vpop.f32.mrf.mxu0
  %v244 = vadd.f32 0.0, %v243
  %245 = vmatmul.f32.gmra.mxu0 %v79
  %v246 = vpop.f32.mrf.mxu0
  %v247 = vadd.f32 0.0, %v246
  %248 = vmatmul.f32.gmra.mxu0 %v82
  %v249 = vpop.f32.mrf.mxu0
  %v250 = vadd.f32 0.0, %v249
  %251 = vmatmul.f32.gmra.mxu0 %v85
  %v252 = vpop.f32.mrf.mxu0
  %v253 = vadd.f32 0.0, %v252
  %254 = vmatmul.f32.gmra.mxu0 %v88
  %v255 = vpop.f32.mrf.mxu0
  %v256 = vadd.f32 0.0, %v255
  %257 = vmatmul.f32.gmra.mxu0 %v91
  %v258 = vpop.f32.mrf.mxu0
  %v259 = vadd.f32 0.0, %v258
  %260 = vmatmul.f32.gmra.mxu0 %v94
  %v261 = vpop.f32.mrf.mxu0
  %v262 = vadd.f32 0.0, %v261
  %263 = vmatmul.f32.gmra.mxu0 %v97
  %v264 = vpop.f32.mrf.mxu0
  %v265 = vadd.f32 0.0, %v264
  %266 = vmatmul.f32.gmra.mxu0 %v100
  %v267 = vpop.f32.mrf.mxu0
  %v268 = vadd.f32 0.0, %v267
  %269 = vmatmul.f32.gmra.mxu0 %v103
  %v270 = vpop.f32.mrf.mxu0
  %v271 = vadd.f32 0.0, %v270
  %272 = vmatmul.f32.gmra.mxu0 %v106
  %v273 = vpop.f32.mrf.mxu0
  %v274 = vadd.f32 0.0, %v273
  %275 = vmatmul.f32.gmra.mxu0 %v109
  %v276 = vpop.f32.mrf.mxu0
  %v277 = vadd.f32 0.0, %v276
  %278 = vmatmul.f32.gmra.mxu0 %v112
  %v279 = vpop.f32.mrf.mxu0
  %v280 = vadd.f32 0.0, %v279
  %281 = vmatmul.f32.gmra.mxu0 %v115
  %v282 = vpop.f32.mrf.mxu0
  %v283 = vadd.f32 0.0, %v282
  %284 = vmatmul.f32.gmra.mxu0 %v118
  %v285 = vpop.f32.mrf.mxu0
  %v286 = vadd.f32 0.0, %v285
  %287 = vmatmul.f32.gmra.mxu0 %v121
  %v288 = vpop.f32.mrf.mxu0
  %v289 = vadd.f32 0.0, %v288
  %290 = vmatmul.f32.gmra.mxu0 %v124
  %v291 = vpop.f32.mrf.mxu0
  %v292 = vadd.f32 0.0, %v291
  %293 = vmatmul.f32.gmra.mxu0 %v127
  %v294 = vpop.f32.mrf.mxu0
  %v295 = vadd.f32 0.0, %v294
  %296 = vmatmul.f32.gmra.mxu0 %v130
  %v297 = vpop.f32.mrf.mxu0
  %v298 = vadd.f32 0.0, %v297
  %299 = vmatmul.f32.gmra.mxu0 %v133
  %v300 = vpop.f32.mrf.mxu0
  %v301 = vadd.f32 0.0, %v300
  %302 = vmatmul.f32.gmra.mxu0 %v136
  %v303 = vpop.f32.mrf.mxu0
  %v304 = vadd.f32 0.0, %v303
  %305 = vmatmul.f32.gmra.mxu0 %v139
  %v306 = vpop.f32.mrf.mxu0
  %v307 = vadd.f32 0.0, %v306
  %308 = vmatmul.f32.gmra.mxu0 %v142
  %v309 = vpop.f32.mrf.mxu0
  %v310 = vadd.f32 0.0, %v309
  %311 = vmatmul.f32.gmra.mxu0 %v145
  %v312 = vpop.f32.mrf.mxu0
  %v313 = vadd.f32 0.0, %v312
  %314 = vmatmul.f32.gmra.mxu0 %v148
  %v315 = vpop.f32.mrf.mxu0
  %v316 = vadd.f32 0.0, %v315
  %317 = vmatmul.f32.gmra.mxu0 %v151
  %v318 = vpop.f32.mrf.mxu0
  %v319 = vadd.f32 0.0, %v318
  %320 = vmatmul.f32.gmra.mxu0 %v154
  %v321 = vpop.f32.mrf.mxu0
  %v322 = vadd.f32 0.0, %v321
  %323 = vmatmul.f32.gmra.mxu0 %v157
  %v324 = vpop.f32.mrf.mxu0
  %v325 = vadd.f32 0.0, %v324
  %326 = vmatmul.f32.gmra.mxu0 %v160
  %v327 = vpop.f32.mrf.mxu0
  %v328 = vadd.f32 0.0, %v327
  %329 = vmatmul.f32.gmra.mxu0 %v163
  %v330 = vpop.f32.mrf.mxu0
  %v331 = vadd.f32 0.0, %v330
  %332 = vmatmul.f32.gmra.mxu0 %v166
  %v333 = vpop.f32.mrf.mxu0
  %v334 = vadd.f32 0.0, %v333
  %335 = vmatmul.f32.gmra.mxu0 %v169
  %v336 = vpop.f32.mrf.mxu0
  %v337 = vadd.f32 0.0, %v336
  %338 = vmatmul.f32.gmra.mxu0 %v172
  %v339 = vpop.f32.mrf.mxu0
  %v340 = vadd.f32 0.0, %v339
  %341 = vmatmul.f32.gmra.mxu0 %v175
  %v342 = vpop.f32.mrf.mxu0
  %v343 = vadd.f32 0.0, %v342
  %344 = vmatmul.f32.gmra.mxu0 %v178
  %v345 = vpop.f32.mrf.mxu0
  %v346 = vadd.f32 0.0, %v345
  %347 = vmatmul.f32.gmra.mxu0 %v181
  %v348 = vpop.f32.mrf.mxu0
  %v349 = vadd.f32 0.0, %v348
  %350 = vmatmul.f32.gmra.mxu0 %v184
  %v351 = vpop.f32.mrf.mxu0
  %v352 = vadd.f32 0.0, %v351
  %353 = vmatmul.f32.gmra.mxu0 %v187
  %v354 = vpop.f32.mrf.mxu0
  %v355 = vadd.f32 0.0, %v354
  %356 = vmatmul.f32.gmra.mxu0 %v190
  %v357 = vpop.f32.mrf.mxu0
  %v358 = vadd.f32 0.0, %v357
  %359 = vmatmul.f32.gmra.mxu0 %v193
  %v360 = vpop.f32.mrf.mxu0
  %v361 = vadd.f32 0.0, %v360
  %362 = vmatmul.f32.gmra.mxu0 %v196
  %v363 = vpop.f32.mrf.mxu0
  %v364 = vadd.f32 0.0, %v363
  %365 = vmatmul.f32.gmra.mxu0 %v199
  %v366 = vpop.f32.mrf.mxu0
  %v367 = vadd.f32 0.0, %v366
  %368 = vmatmul.f32.gmra.mxu0 %v202
  %v369 = vpop.f32.mrf.mxu0
  %v370 = vadd.f32 0.0, %v369
  %371 = vmatmul.f32.gmra.mxu0 %v205
  %v372 = vpop.f32.mrf.mxu0
  %v373 = vadd.f32 0.0, %v372
  %374 = vmatmul.f32.gmra.mxu0 %v208
  %v375 = vpop.f32.mrf.mxu0
  %v376 = vadd.f32 0.0, %v375
  %377 = vmatmul.f32.gmra.mxu0 %v211
  %v378 = vpop.f32.mrf.mxu0
  %v379 = vadd.f32 0.0, %v378
  %380 = vdwg.mxu0
  %s381 = scalar_lea.vmem %s0, 392
  %v382 = vld [vmem:[%s381] sm:$0xff]
  %v383 = vld [vmem:[%s381 + $0x8] sm:$0xff]
  %v384 = vld [vmem:[%s381 + $0x10] sm:$0xff]
  %v385 = vld [vmem:[%s381 + $0x18] sm:$0xff]
  %v386 = vld [vmem:[%s381 + $0x20] sm:$0xff]
  %v387 = vld [vmem:[%s381 + $0x28] sm:$0xff]
  %v388 = vld [vmem:[%s381 + $0x30] sm:$0xff]
  %v389 = vld [vmem:[%s381 + $0x38] sm:$0xff]
  %v390 = vld [vmem:[%s381 + $0x40] sm:$0xff]
  %v391 = vld [vmem:[%s381 + $0x48] sm:$0xff]
  %v392 = vld [vmem:[%s381 + $0x50] sm:$0xff]
  %v393 = vld [vmem:[%s381 + $0x58] sm:$0xff]
  %v394 = vld [vmem:[%s381 + $0x60] sm:$0xff]
  %v395 = vld [vmem:[%s381 + $0x68] sm:$0xff]
  %v396 = vld [vmem:[%s381 + $0x70] sm:$0xff]
  %v397 = vld [vmem:[%s381 + $0x78] sm:$0xff]
  %v398 = vld [vmem:[%s381 + $0x80] sm:$0xff]
  %v399 = vld [vmem:[%s381 + $0x88] sm:$0xff]
  %v400 = vld [vmem:[%s381 + $0x90] sm:$0xff]
  %v401 = vld [vmem:[%s381 + $0x98] sm:$0xff]
  %v402 = vld [vmem:[%s381 + $0xa0] sm:$0xff]
  %v403 = vld [vmem:[%s381 + $0xa8] sm:$0xff]
  %v404 = vld [vmem:[%s381 + $0xb0] sm:$0xff]
  %v405 = vld [vmem:[%s381 + $0xb8] sm:$0xff]
  %v406 = vld [vmem:[%s381 + $0xc0] sm:$0xff]
  %v407 = vld [vmem:[%s381 + $0xc8] sm:$0xff]
  %v408 = vld [vmem:[%s381 + $0xd0] sm:$0xff]
  %v409 = vld [vmem:[%s381 + $0xd8] sm:$0xff]
  %v410 = vld [vmem:[%s381 + $0xe0] sm:$0xff]
  %v411 = vld [vmem:[%s381 + $0xe8] sm:$0xff]
  %v412 = vld [vmem:[%s381 + $0xf0] sm:$0xff]
  %v413 = vld [vmem:[%s381 + $0xf8] sm:$0xff]
  %v414 = vld [vmem:[%s381 + $0x100] sm:$0xff]
  %v415 = vld [vmem:[%s381 + $0x108] sm:$0xff]
  %v416 = vld [vmem:[%s381 + $0x110] sm:$0xff]
  %v417 = vld [vmem:[%s381 + $0x118] sm:$0xff]
  %v418 = vld [vmem:[%s381 + $0x120] sm:$0xff]
  %v419 = vld [vmem:[%s381 + $0x128] sm:$0xff]
  %v420 = vld [vmem:[%s381 + $0x130] sm:$0xff]
  %v421 = vld [vmem:[%s381 + $0x138] sm:$0xff]
  %v422 = vld [vmem:[%s381 + $0x140] sm:$0xff]
  %v423 = vld [vmem:[%s381 + $0x148] sm:$0xff]
  %v424 = vld [vmem:[%s381 + $0x150] sm:$0xff]
  %v425 = vld [vmem:[%s381 + $0x158] sm:$0xff]
  %v426 = vld [vmem:[%s381 + $0x160] sm:$0xff]
  %v427 = vld [vmem:[%s381 + $0x168] sm:$0xff]
  %v428 = vld [vmem:[%s381 + $0x170] sm:$0xff]
  %v429 = vld [vmem:[%s381 + $0x178] sm:$0xff]
  %v430 = vld [vmem:[%s381 + $0x180] sm:$0xff]
  %v432 = vsel %vm65, %v382, 0
  %v435 = vsel %vm65, %v383, 0
  %v438 = vsel %vm65, %v384, 0
  %v441 = vsel %vm65, %v385, 0
  %v444 = vsel %vm65, %v386, 0
  %v447 = vsel %vm65, %v387, 0
  %v450 = vsel %vm65, %v388, 0
  %v453 = vsel %vm65, %v389, 0
  %v456 = vsel %vm65, %v390, 0
  %v459 = vsel %vm65, %v391, 0
  %v462 = vsel %vm65, %v392, 0
  %v465 = vsel %vm65, %v393, 0
  %v468 = vsel %vm65, %v394, 0
  %v471 = vsel %vm65, %v395, 0
  %v474 = vsel %vm65, %v396, 0
  %v477 = vsel %vm65, %v397, 0
  %v480 = vsel %vm65, %v398, 0
  %v483 = vsel %vm65, %v399, 0
  %v486 = vsel %vm65, %v400, 0
  %v489 = vsel %vm65, %v401, 0
  %v492 = vsel %vm65, %v402, 0
  %v495 = vsel %vm65, %v403, 0
  %v498 = vsel %vm65, %v404, 0
  %v501 = vsel %vm65, %v405, 0
  %v504 = vsel %vm65, %v406, 0
  %v507 = vsel %vm65, %v407, 0
  %v510 = vsel %vm65, %v408, 0
  %v513 = vsel %vm65, %v409, 0
  %v516 = vsel %vm65, %v410, 0
  %v519 = vsel %vm65, %v411, 0
  %v522 = vsel %vm65, %v412, 0
  %v525 = vsel %vm65, %v413, 0
  %v528 = vsel %vm65, %v414, 0
  %v531 = vsel %vm65, %v415, 0
  %v534 = vsel %vm65, %v416, 0
  %v537 = vsel %vm65, %v417, 0
  %v540 = vsel %vm65, %v418, 0
  %v543 = vsel %vm65, %v419, 0
  %v546 = vsel %vm65, %v420, 0
  %v549 = vsel %vm65, %v421, 0
  %v552 = vsel %vm65, %v422, 0
  %v555 = vsel %vm65, %v423, 0
  %v558 = vsel %vm65, %v424, 0
  %v561 = vsel %vm65, %v425, 0
  %v564 = vsel %vm65, %v426, 0
  %v567 = vsel %vm65, %v427, 0
  %v570 = vsel %vm65, %v428, 0
  %v573 = vsel %vm65, %v429, 0
  %v576 = vsel %vm65, %v430, 0
  %578 = vmatpush.msra.mxu0 0.0
  %579 = vmatpush.msra.mxu0 0.0
  %580 = vmatpush.msra.mxu0 0.0
  %581 = vmatpush.msra.mxu0 0.0
  %582 = vmatpush.msra.mxu0 0.0
  %583 = vmatpush.msra.mxu0 0.0
  %584 = vmatpush.msra.mxu0 0.0
  %585 = vmatpush.msra.mxu0 0.0
  %586 = vmatpush.msra.mxu0 0.0
  %587 = vmatpush.msra.mxu0 0.0
  %588 = vmatpush.msra.mxu0 0.0
  %589 = vmatpush.msra.mxu0 0.0
  %590 = vmatpush.msra.mxu0 0.0
  %591 = vmatpush.msra.mxu0 0.0
  %592 = vmatpush.msra.mxu0 %v215
  %593 = vmatpush.msra.mxu0 %v14
  %594 = vmatmul.f32.gmra.mxu0 %v432
  %v595 = vpop.f32.mrf.mxu0
  %v596 = vadd.f32 0.0, %v595
  %597 = vmatmul.f32.gmra.mxu0 %v435
  %v598 = vpop.f32.mrf.mxu0
  %v599 = vadd.f32 0.0, %v598
  %600 = vmatmul.f32.gmra.mxu0 %v438
  %v601 = vpop.f32.mrf.mxu0
  %v602 = vadd.f32 0.0, %v601
  %603 = vmatmul.f32.gmra.mxu0 %v441
  %v604 = vpop.f32.mrf.mxu0
  %v605 = vadd.f32 0.0, %v604
  %606 = vmatmul.f32.gmra.mxu0 %v444
  %v607 = vpop.f32.mrf.mxu0
  %v608 = vadd.f32 0.0, %v607
  %609 = vmatmul.f32.gmra.mxu0 %v447
  %v610 = vpop.f32.mrf.mxu0
  %v611 = vadd.f32 0.0, %v610
  %612 = vmatmul.f32.gmra.mxu0 %v450
  %v613 = vpop.f32.mrf.mxu0
  %v614 = vadd.f32 0.0, %v613
  %615 = vmatmul.f32.gmra.mxu0 %v453
  %v616 = vpop.f32.mrf.mxu0
  %v617 = vadd.f32 0.0, %v616
  %618 = vmatmul.f32.gmra.mxu0 %v456
  %v619 = vpop.f32.mrf.mxu0
  %v620 = vadd.f32 0.0, %v619
  %621 = vmatmul.f32.gmra.mxu0 %v459
  %v622 = vpop.f32.mrf.mxu0
  %v623 = vadd.f32 0.0, %v622
  %624 = vmatmul.f32.gmra.mxu0 %v462
  %v625 = vpop.f32.mrf.mxu0
  %v626 = vadd.f32 0.0, %v625
  %627 = vmatmul.f32.gmra.mxu0 %v465
  %v628 = vpop.f32.mrf.mxu0
  %v629 = vadd.f32 0.0, %v628
  %630 = vmatmul.f32.gmra.mxu0 %v468
  %v631 = vpop.f32.mrf.mxu0
  %v632 = vadd.f32 0.0, %v631
  %633 = vmatmul.f32.gmra.mxu0 %v471
  %v634 = vpop.f32.mrf.mxu0
  %v635 = vadd.f32 0.0, %v634
  %636 = vmatmul.f32.gmra.mxu0 %v474
  %v637 = vpop.f32.mrf.mxu0
  %v638 = vadd.f32 0.0, %v637
  %639 = vmatmul.f32.gmra.mxu0 %v477
  %v640 = vpop.f32.mrf.mxu0
  %v641 = vadd.f32 0.0, %v640
  %642 = vmatmul.f32.gmra.mxu0 %v480
  %v643 = vpop.f32.mrf.mxu0
  %v644 = vadd.f32 0.0, %v643
  %645 = vmatmul.f32.gmra.mxu0 %v483
  %v646 = vpop.f32.mrf.mxu0
  %v647 = vadd.f32 0.0, %v646
  %648 = vmatmul.f32.gmra.mxu0 %v486
  %v649 = vpop.f32.mrf.mxu0
  %v650 = vadd.f32 0.0, %v649
  %651 = vmatmul.f32.gmra.mxu0 %v489
  %v652 = vpop.f32.mrf.mxu0
  %v653 = vadd.f32 0.0, %v652
  %654 = vmatmul.f32.gmra.mxu0 %v492
  %v655 = vpop.f32.mrf.mxu0
  %v656 = vadd.f32 0.0, %v655
  %657 = vmatmul.f32.gmra.mxu0 %v495
  %v658 = vpop.f32.mrf.mxu0
  %v659 = vadd.f32 0.0, %v658
  %660 = vmatmul.f32.gmra.mxu0 %v498
  %v661 = vpop.f32.mrf.mxu0
  %v662 = vadd.f32 0.0, %v661
  %663 = vmatmul.f32.gmra.mxu0 %v501
  %v664 = vpop.f32.mrf.mxu0
  %v665 = vadd.f32 0.0, %v664
  %666 = vmatmul.f32.gmra.mxu0 %v504
  %v667 = vpop.f32.mrf.mxu0
  %v668 = vadd.f32 0.0, %v667
  %669 = vmatmul.f32.gmra.mxu0 %v507
  %v670 = vpop.f32.mrf.mxu0
  %v671 = vadd.f32 0.0, %v670
  %672 = vmatmul.f32.gmra.mxu0 %v510
  %v673 = vpop.f32.mrf.mxu0
  %v674 = vadd.f32 0.0, %v673
  %675 = vmatmul.f32.gmra.mxu0 %v513
  %v676 = vpop.f32.mrf.mxu0
  %v677 = vadd.f32 0.0, %v676
  %678 = vmatmul.f32.gmra.mxu0 %v516
  %v679 = vpop.f32.mrf.mxu0
  %v680 = vadd.f32 0.0, %v679
  %681 = vmatmul.f32.gmra.mxu0 %v519
  %v682 = vpop.f32.mrf.mxu0
  %v683 = vadd.f32 0.0, %v682
  %684 = vmatmul.f32.gmra.mxu0 %v522
  %v685 = vpop.f32.mrf.mxu0
  %v686 = vadd.f32 0.0, %v685
  %687 = vmatmul.f32.gmra.mxu0 %v525
  %v688 = vpop.f32.mrf.mxu0
  %v689 = vadd.f32 0.0, %v688
  %690 = vmatmul.f32.gmra.mxu0 %v528
  %v691 = vpop.f32.mrf.mxu0
  %v692 = vadd.f32 0.0, %v691
  %693 = vmatmul.f32.gmra.mxu0 %v531
  %v694 = vpop.f32.mrf.mxu0
  %v695 = vadd.f32 0.0, %v694
  %696 = vmatmul.f32.gmra.mxu0 %v534
  %v697 = vpop.f32.mrf.mxu0
  %v698 = vadd.f32 0.0, %v697
  %699 = vmatmul.f32.gmra.mxu0 %v537
  %v700 = vpop.f32.mrf.mxu0
  %v701 = vadd.f32 0.0, %v700
  %702 = vmatmul.f32.gmra.mxu0 %v540
  %v703 = vpop.f32.mrf.mxu0
  %v704 = vadd.f32 0.0, %v703
  %705 = vmatmul.f32.gmra.mxu0 %v543
  %v706 = vpop.f32.mrf.mxu0
  %v707 = vadd.f32 0.0, %v706
  %708 = vmatmul.f32.gmra.mxu0 %v546
  %v709 = vpop.f32.mrf.mxu0
  %v710 = vadd.f32 0.0, %v709
  %711 = vmatmul.f32.gmra.mxu0 %v549
  %v712 = vpop.f32.mrf.mxu0
  %v713 = vadd.f32 0.0, %v712
  %714 = vmatmul.f32.gmra.mxu0 %v552
  %v715 = vpop.f32.mrf.mxu0
  %v716 = vadd.f32 0.0, %v715
  %717 = vmatmul.f32.gmra.mxu0 %v555
  %v718 = vpop.f32.mrf.mxu0
  %v719 = vadd.f32 0.0, %v718
  %720 = vmatmul.f32.gmra.mxu0 %v558
  %v721 = vpop.f32.mrf.mxu0
  %v722 = vadd.f32 0.0, %v721
  %723 = vmatmul.f32.gmra.mxu0 %v561
  %v724 = vpop.f32.mrf.mxu0
  %v725 = vadd.f32 0.0, %v724
  %726 = vmatmul.f32.gmra.mxu0 %v564
  %v727 = vpop.f32.mrf.mxu0
  %v728 = vadd.f32 0.0, %v727
  %729 = vmatmul.f32.gmra.mxu0 %v567
  %v730 = vpop.f32.mrf.mxu0
  %v731 = vadd.f32 0.0, %v730
  %732 = vmatmul.f32.gmra.mxu0 %v570
  %v733 = vpop.f32.mrf.mxu0
  %v734 = vadd.f32 0.0, %v733
  %735 = vmatmul.f32.gmra.mxu0 %v573
  %v736 = vpop.f32.mrf.mxu0
  %v737 = vadd.f32 0.0, %v736
  %738 = vmatmul.f32.gmra.mxu0 %v576
  %v739 = vpop.f32.mrf.mxu0
  %v740 = vadd.f32 0.0, %v739
  %741 = vdwg.mxu0
  %v742 = vmax.f32 %v235, %v596
  %v743 = vmax.f32 %v238, %v599
  %v744 = vmax.f32 %v241, %v602
  %v745 = vmax.f32 %v244, %v605
  %v746 = vmax.f32 %v247, %v608
  %v747 = vmax.f32 %v250, %v611
  %v748 = vmax.f32 %v253, %v614
  %v749 = vmax.f32 %v256, %v617
  %v750 = vmax.f32 %v259, %v620
  %v751 = vmax.f32 %v262, %v623
  %v752 = vmax.f32 %v265, %v626
  %v753 = vmax.f32 %v268, %v629
  %v754 = vmax.f32 %v271, %v632
  %v755 = vmax.f32 %v274, %v635
  %v756 = vmax.f32 %v277, %v638
  %v757 = vmax.f32 %v280, %v641
  %v758 = vmax.f32 %v283, %v644
  %v759 = vmax.f32 %v286, %v647
  %v760 = vmax.f32 %v289, %v650
  %v761 = vmax.f32 %v292, %v653
  %v762 = vmax.f32 %v295, %v656
  %v763 = vmax.f32 %v298, %v659
  %v764 = vmax.f32 %v301, %v662
  %v765 = vmax.f32 %v304, %v665
  %v766 = vmax.f32 %v307, %v668
  %v767 = vmax.f32 %v310, %v671
  %v768 = vmax.f32 %v313, %v674
  %v769 = vmax.f32 %v316, %v677
  %v770 = vmax.f32 %v319, %v680
  %v771 = vmax.f32 %v322, %v683
  %v772 = vmax.f32 %v325, %v686
  %v773 = vmax.f32 %v328, %v689
  %v774 = vmax.f32 %v331, %v692
  %v775 = vmax.f32 %v334, %v695
  %v776 = vmax.f32 %v337, %v698
  %v777 = vmax.f32 %v340, %v701
  %v778 = vmax.f32 %v343, %v704
  %v779 = vmax.f32 %v346, %v707
  %v780 = vmax.f32 %v349, %v710
  %v781 = vmax.f32 %v352, %v713
  %v782 = vmax.f32 %v355, %v716
  %v783 = vmax.f32 %v358, %v719
  %v784 = vmax.f32 %v361, %v722
  %v785 = vmax.f32 %v364, %v725
  %v786 = vmax.f32 %v367, %v728
  %v787 = vmax.f32 %v370, %v731
  %v788 = vmax.f32 %v373, %v734
  %v789 = vmax.f32 %v376, %v737
  %v790 = vmax.f32 %v379, %v740
  %s791 = scalar_lea.vmem %s0, 784
  %v792 = vld [vmem:[%s791] sm:$0xff]
  %v793 = vld [vmem:[%s791 + $0x8] sm:$0xff]
  %v794 = vld [vmem:[%s791 + $0x10] sm:$0xff]
  %v795 = vld [vmem:[%s791 + $0x18] sm:$0xff]
  %v796 = vld [vmem:[%s791 + $0x20] sm:$0xff]
  %v797 = vld [vmem:[%s791 + $0x28] sm:$0xff]
  %v798 = vld [vmem:[%s791 + $0x30] sm:$0xff]
  %v799 = vld [vmem:[%s791 + $0x38] sm:$0xff]
  %v800 = vld [vmem:[%s791 + $0x40] sm:$0xff]
  %v801 = vld [vmem:[%s791 + $0x48] sm:$0xff]
  %v802 = vld [vmem:[%s791 + $0x50] sm:$0xff]
  %v803 = vld [vmem:[%s791 + $0x58] sm:$0xff]
  %v804 = vld [vmem:[%s791 + $0x60] sm:$0xff]
  %v805 = vld [vmem:[%s791 + $0x68] sm:$0xff]
  %v806 = vld [vmem:[%s791 + $0x70] sm:$0xff]
  %v807 = vld [vmem:[%s791 + $0x78] sm:$0xff]
  %v808 = vld [vmem:[%s791 + $0x80] sm:$0xff]
  %v809 = vld [vmem:[%s791 + $0x88] sm:$0xff]
  %v810 = vld [vmem:[%s791 + $0x90] sm:$0xff]
  %v811 = vld [vmem:[%s791 + $0x98] sm:$0xff]
  %v812 = vld [vmem:[%s791 + $0xa0] sm:$0xff]
  %v813 = vld [vmem:[%s791 + $0xa8] sm:$0xff]
  %v814 = vld [vmem:[%s791 + $0xb0] sm:$0xff]
  %v815 = vld [vmem:[%s791 + $0xb8] sm:$0xff]
  %v816 = vld [vmem:[%s791 + $0xc0] sm:$0xff]
  %v817 = vld [vmem:[%s791 + $0xc8] sm:$0xff]
  %v818 = vld [vmem:[%s791 + $0xd0] sm:$0xff]
  %v819 = vld [vmem:[%s791 + $0xd8] sm:$0xff]
  %v820 = vld [vmem:[%s791 + $0xe0] sm:$0xff]
  %v821 = vld [vmem:[%s791 + $0xe8] sm:$0xff]
  %v822 = vld [vmem:[%s791 + $0xf0] sm:$0xff]
  %v823 = vld [vmem:[%s791 + $0xf8] sm:$0xff]
  %v824 = vld [vmem:[%s791 + $0x100] sm:$0xff]
  %v825 = vld [vmem:[%s791 + $0x108] sm:$0xff]
  %v826 = vld [vmem:[%s791 + $0x110] sm:$0xff]
  %v827 = vld [vmem:[%s791 + $0x118] sm:$0xff]
  %v828 = vld [vmem:[%s791 + $0x120] sm:$0xff]
  %v829 = vld [vmem:[%s791 + $0x128] sm:$0xff]
  %v830 = vld [vmem:[%s791 + $0x130] sm:$0xff]
  %v831 = vld [vmem:[%s791 + $0x138] sm:$0xff]
  %v832 = vld [vmem:[%s791 + $0x140] sm:$0xff]
  %v833 = vld [vmem:[%s791 + $0x148] sm:$0xff]
  %v834 = vld [vmem:[%s791 + $0x150] sm:$0xff]
  %v835 = vld [vmem:[%s791 + $0x158] sm:$0xff]
  %v836 = vld [vmem:[%s791 + $0x160] sm:$0xff]
  %v837 = vld [vmem:[%s791 + $0x168] sm:$0xff]
  %v838 = vld [vmem:[%s791 + $0x170] sm:$0xff]
  %v839 = vld [vmem:[%s791 + $0x178] sm:$0xff]
  %v840 = vld [vmem:[%s791 + $0x180] sm:$0xff]
  %v842 = vsel %vm65, %v792, 0
  %v845 = vsel %vm65, %v793, 0
  %v848 = vsel %vm65, %v794, 0
  %v851 = vsel %vm65, %v795, 0
  %v854 = vsel %vm65, %v796, 0
  %v857 = vsel %vm65, %v797, 0
  %v860 = vsel %vm65, %v798, 0
  %v863 = vsel %vm65, %v799, 0
  %v866 = vsel %vm65, %v800, 0
  %v869 = vsel %vm65, %v801, 0
  %v872 = vsel %vm65, %v802, 0
  %v875 = vsel %vm65, %v803, 0
  %v878 = vsel %vm65, %v804, 0
  %v881 = vsel %vm65, %v805, 0
  %v884 = vsel %vm65, %v806, 0
  %v887 = vsel %vm65, %v807, 0
  %v890 = vsel %vm65, %v808, 0
  %v893 = vsel %vm65, %v809, 0
  %v896 = vsel %vm65, %v810, 0
  %v899 = vsel %vm65, %v811, 0
  %v902 = vsel %vm65, %v812, 0
  %v905 = vsel %vm65, %v813, 0
  %v908 = vsel %vm65, %v814, 0
  %v911 = vsel %vm65, %v815, 0
  %v914 = vsel %vm65, %v816, 0
  %v917 = vsel %vm65, %v817, 0
  %v920 = vsel %vm65, %v818, 0
  %v923 = vsel %vm65, %v819, 0
  %v926 = vsel %vm65, %v820, 0
  %v929 = vsel %vm65, %v821, 0
  %v932 = vsel %vm65, %v822, 0
  %v935 = vsel %vm65, %v823, 0
  %v938 = vsel %vm65, %v824, 0
  %v941 = vsel %vm65, %v825, 0
  %v944 = vsel %vm65, %v826, 0
  %v947 = vsel %vm65, %v827, 0
  %v950 = vsel %vm65, %v828, 0
  %v953 = vsel %vm65, %v829, 0
  %v956 = vsel %vm65, %v830, 0
  %v959 = vsel %vm65, %v831, 0
  %v962 = vsel %vm65, %v832, 0
  %v965 = vsel %vm65, %v833, 0
  %v968 = vsel %vm65, %v834, 0
  %v971 = vsel %vm65, %v835, 0
  %v974 = vsel %vm65, %v836, 0
  %v977 = vsel %vm65, %v837, 0
  %v980 = vsel %vm65, %v838, 0
  %v983 = vsel %vm65, %v839, 0
  %v986 = vsel %vm65, %v840, 0
  %988 = vmatpush.msra.mxu0 0.0
  %989 = vmatpush.msra.mxu0 0.0
  %990 = vmatpush.msra.mxu0 0.0
  %991 = vmatpush.msra.mxu0 0.0
  %992 = vmatpush.msra.mxu0 0.0
  %993 = vmatpush.msra.mxu0 0.0
  %994 = vmatpush.msra.mxu0 0.0
  %995 = vmatpush.msra.mxu0 0.0
  %996 = vmatpush.msra.mxu0 0.0
  %997 = vmatpush.msra.mxu0 0.0
  %998 = vmatpush.msra.mxu0 0.0
  %999 = vmatpush.msra.mxu0 0.0
  %1000 = vmatpush.msra.mxu0 0.0
  %1001 = vmatpush.msra.mxu0 0.0
  %1002 = vmatpush.msra.mxu0 %v215
  %1003 = vmatpush.msra.mxu0 %v14
  %1004 = vmatmul.f32.gmra.mxu0 %v842
  %v1005 = vpop.f32.mrf.mxu0
  %v1006 = vadd.f32 0.0, %v1005
  %1007 = vmatmul.f32.gmra.mxu0 %v845
  %v1008 = vpop.f32.mrf.mxu0
  %v1009 = vadd.f32 0.0, %v1008
  %1010 = vmatmul.f32.gmra.mxu0 %v848
  %v1011 = vpop.f32.mrf.mxu0
  %v1012 = vadd.f32 0.0, %v1011
  %1013 = vmatmul.f32.gmra.mxu0 %v851
  %v1014 = vpop.f32.mrf.mxu0
  %v1015 = vadd.f32 0.0, %v1014
  %1016 = vmatmul.f32.gmra.mxu0 %v854
  %v1017 = vpop.f32.mrf.mxu0
  %v1018 = vadd.f32 0.0, %v1017
  %1019 = vmatmul.f32.gmra.mxu0 %v857
  %v1020 = vpop.f32.mrf.mxu0
  %v1021 = vadd.f32 0.0, %v1020
  %1022 = vmatmul.f32.gmra.mxu0 %v860
  %v1023 = vpop.f32.mrf.mxu0
  %v1024 = vadd.f32 0.0, %v1023
  %1025 = vmatmul.f32.gmra.mxu0 %v863
  %v1026 = vpop.f32.mrf.mxu0
  %v1027 = vadd.f32 0.0, %v1026
  %1028 = vmatmul.f32.gmra.mxu0 %v866
  %v1029 = vpop.f32.mrf.mxu0
  %v1030 = vadd.f32 0.0, %v1029
  %1031 = vmatmul.f32.gmra.mxu0 %v869
  %v1032 = vpop.f32.mrf.mxu0
  %v1033 = vadd.f32 0.0, %v1032
  %1034 = vmatmul.f32.gmra.mxu0 %v872
  %v1035 = vpop.f32.mrf.mxu0
  %v1036 = vadd.f32 0.0, %v1035
  %1037 = vmatmul.f32.gmra.mxu0 %v875
  %v1038 = vpop.f32.mrf.mxu0
  %v1039 = vadd.f32 0.0, %v1038
  %1040 = vmatmul.f32.gmra.mxu0 %v878
  %v1041 = vpop.f32.mrf.mxu0
  %v1042 = vadd.f32 0.0, %v1041
  %1043 = vmatmul.f32.gmra.mxu0 %v881
  %v1044 = vpop.f32.mrf.mxu0
  %v1045 = vadd.f32 0.0, %v1044
  %1046 = vmatmul.f32.gmra.mxu0 %v884
  %v1047 = vpop.f32.mrf.mxu0
  %v1048 = vadd.f32 0.0, %v1047
  %1049 = vmatmul.f32.gmra.mxu0 %v887
  %v1050 = vpop.f32.mrf.mxu0
  %v1051 = vadd.f32 0.0, %v1050
  %1052 = vmatmul.f32.gmra.mxu0 %v890
  %v1053 = vpop.f32.mrf.mxu0
  %v1054 = vadd.f32 0.0, %v1053
  %1055 = vmatmul.f32.gmra.mxu0 %v893
  %v1056 = vpop.f32.mrf.mxu0
  %v1057 = vadd.f32 0.0, %v1056
  %1058 = vmatmul.f32.gmra.mxu0 %v896
  %v1059 = vpop.f32.mrf.mxu0
  %v1060 = vadd.f32 0.0, %v1059
  %1061 = vmatmul.f32.gmra.mxu0 %v899
  %v1062 = vpop.f32.mrf.mxu0
  %v1063 = vadd.f32 0.0, %v1062
  %1064 = vmatmul.f32.gmra.mxu0 %v902
  %v1065 = vpop.f32.mrf.mxu0
  %v1066 = vadd.f32 0.0, %v1065
  %1067 = vmatmul.f32.gmra.mxu0 %v905
  %v1068 = vpop.f32.mrf.mxu0
  %v1069 = vadd.f32 0.0, %v1068
  %1070 = vmatmul.f32.gmra.mxu0 %v908
  %v1071 = vpop.f32.mrf.mxu0
  %v1072 = vadd.f32 0.0, %v1071
  %1073 = vmatmul.f32.gmra.mxu0 %v911
  %v1074 = vpop.f32.mrf.mxu0
  %v1075 = vadd.f32 0.0, %v1074
  %1076 = vmatmul.f32.gmra.mxu0 %v914
  %v1077 = vpop.f32.mrf.mxu0
  %v1078 = vadd.f32 0.0, %v1077
  %1079 = vmatmul.f32.gmra.mxu0 %v917
  %v1080 = vpop.f32.mrf.mxu0
  %v1081 = vadd.f32 0.0, %v1080
  %1082 = vmatmul.f32.gmra.mxu0 %v920
  %v1083 = vpop.f32.mrf.mxu0
  %v1084 = vadd.f32 0.0, %v1083
  %1085 = vmatmul.f32.gmra.mxu0 %v923
  %v1086 = vpop.f32.mrf.mxu0
  %v1087 = vadd.f32 0.0, %v1086
  %1088 = vmatmul.f32.gmra.mxu0 %v926
  %v1089 = vpop.f32.mrf.mxu0
  %v1090 = vadd.f32 0.0, %v1089
  %1091 = vmatmul.f32.gmra.mxu0 %v929
  %v1092 = vpop.f32.mrf.mxu0
  %v1093 = vadd.f32 0.0, %v1092
  %1094 = vmatmul.f32.gmra.mxu0 %v932
  %v1095 = vpop.f32.mrf.mxu0
  %v1096 = vadd.f32 0.0, %v1095
  %1097 = vmatmul.f32.gmra.mxu0 %v935
  %v1098 = vpop.f32.mrf.mxu0
  %v1099 = vadd.f32 0.0, %v1098
  %1100 = vmatmul.f32.gmra.mxu0 %v938
  %v1101 = vpop.f32.mrf.mxu0
  %v1102 = vadd.f32 0.0, %v1101
  %1103 = vmatmul.f32.gmra.mxu0 %v941
  %v1104 = vpop.f32.mrf.mxu0
  %v1105 = vadd.f32 0.0, %v1104
  %1106 = vmatmul.f32.gmra.mxu0 %v944
  %v1107 = vpop.f32.mrf.mxu0
  %v1108 = vadd.f32 0.0, %v1107
  %1109 = vmatmul.f32.gmra.mxu0 %v947
  %v1110 = vpop.f32.mrf.mxu0
  %v1111 = vadd.f32 0.0, %v1110
  %1112 = vmatmul.f32.gmra.mxu0 %v950
  %v1113 = vpop.f32.mrf.mxu0
  %v1114 = vadd.f32 0.0, %v1113
  %1115 = vmatmul.f32.gmra.mxu0 %v953
  %v1116 = vpop.f32.mrf.mxu0
  %v1117 = vadd.f32 0.0, %v1116
  %1118 = vmatmul.f32.gmra.mxu0 %v956
  %v1119 = vpop.f32.mrf.mxu0
  %v1120 = vadd.f32 0.0, %v1119
  %1121 = vmatmul.f32.gmra.mxu0 %v959
  %v1122 = vpop.f32.mrf.mxu0
  %v1123 = vadd.f32 0.0, %v1122
  %1124 = vmatmul.f32.gmra.mxu0 %v962
  %v1125 = vpop.f32.mrf.mxu0
  %v1126 = vadd.f32 0.0, %v1125
  %1127 = vmatmul.f32.gmra.mxu0 %v965
  %v1128 = vpop.f32.mrf.mxu0
  %v1129 = vadd.f32 0.0, %v1128
  %1130 = vmatmul.f32.gmra.mxu0 %v968
  %v1131 = vpop.f32.mrf.mxu0
  %v1132 = vadd.f32 0.0, %v1131
  %1133 = vmatmul.f32.gmra.mxu0 %v971
  %v1134 = vpop.f32.mrf.mxu0
  %v1135 = vadd.f32 0.0, %v1134
  %1136 = vmatmul.f32.gmra.mxu0 %v974
  %v1137 = vpop.f32.mrf.mxu0
  %v1138 = vadd.f32 0.0, %v1137
  %1139 = vmatmul.f32.gmra.mxu0 %v977
  %v1140 = vpop.f32.mrf.mxu0
  %v1141 = vadd.f32 0.0, %v1140
  %1142 = vmatmul.f32.gmra.mxu0 %v980
  %v1143 = vpop.f32.mrf.mxu0
  %v1144 = vadd.f32 0.0, %v1143
  %1145 = vmatmul.f32.gmra.mxu0 %v983
  %v1146 = vpop.f32.mrf.mxu0
  %v1147 = vadd.f32 0.0, %v1146
  %1148 = vmatmul.f32.gmra.mxu0 %v986
  %v1149 = vpop.f32.mrf.mxu0
  %v1150 = vadd.f32 0.0, %v1149
  %1151 = vdwg.mxu0
  %v1152 = vmax.f32 %v742, %v1006
  %v1153 = vmax.f32 %v743, %v1009
  %v1154 = vmax.f32 %v744, %v1012
  %v1155 = vmax.f32 %v745, %v1015
  %v1156 = vmax.f32 %v746, %v1018
  %v1157 = vmax.f32 %v747, %v1021
  %v1158 = vmax.f32 %v748, %v1024
  %v1159 = vmax.f32 %v749, %v1027
  %v1160 = vmax.f32 %v750, %v1030
  %v1161 = vmax.f32 %v751, %v1033
  %v1162 = vmax.f32 %v752, %v1036
  %v1163 = vmax.f32 %v753, %v1039
  %v1164 = vmax.f32 %v754, %v1042
  %v1165 = vmax.f32 %v755, %v1045
  %v1166 = vmax.f32 %v756, %v1048
  %v1167 = vmax.f32 %v757, %v1051
  %v1168 = vmax.f32 %v758, %v1054
  %v1169 = vmax.f32 %v759, %v1057
  %v1170 = vmax.f32 %v760, %v1060
  %v1171 = vmax.f32 %v761, %v1063
  %v1172 = vmax.f32 %v762, %v1066
  %v1173 = vmax.f32 %v763, %v1069
  %v1174 = vmax.f32 %v764, %v1072
  %v1175 = vmax.f32 %v765, %v1075
  %v1176 = vmax.f32 %v766, %v1078
  %v1177 = vmax.f32 %v767, %v1081
  %v1178 = vmax.f32 %v768, %v1084
  %v1179 = vmax.f32 %v769, %v1087
  %v1180 = vmax.f32 %v770, %v1090
  %v1181 = vmax.f32 %v771, %v1093
  %v1182 = vmax.f32 %v772, %v1096
  %v1183 = vmax.f32 %v773, %v1099
  %v1184 = vmax.f32 %v774, %v1102
  %v1185 = vmax.f32 %v775, %v1105
  %v1186 = vmax.f32 %v776, %v1108
  %v1187 = vmax.f32 %v777, %v1111
  %v1188 = vmax.f32 %v778, %v1114
  %v1189 = vmax.f32 %v779, %v1117
  %v1190 = vmax.f32 %v780, %v1120
  %v1191 = vmax.f32 %v781, %v1123
  %v1192 = vmax.f32 %v782, %v1126
  %v1193 = vmax.f32 %v783, %v1129
  %v1194 = vmax.f32 %v784, %v1132
  %v1195 = vmax.f32 %v785, %v1135
  %v1196 = vmax.f32 %v786, %v1138
  %v1197 = vmax.f32 %v787, %v1141
  %v1198 = vmax.f32 %v788, %v1144
  %v1199 = vmax.f32 %v789, %v1147
  %v1200 = vmax.f32 %v790, %v1150
  %s1201 = scalar_lea.vmem %s0, 1176
  %v1202 = vld [vmem:[%s1201] sm:$0xff]
  %v1203 = vld [vmem:[%s1201 + $0x8] sm:$0xff]
  %v1204 = vld [vmem:[%s1201 + $0x10] sm:$0xff]
  %v1205 = vld [vmem:[%s1201 + $0x18] sm:$0xff]
  %v1206 = vld [vmem:[%s1201 + $0x20] sm:$0xff]
  %v1207 = vld [vmem:[%s1201 + $0x28] sm:$0xff]
  %v1208 = vld [vmem:[%s1201 + $0x30] sm:$0xff]
  %v1209 = vld [vmem:[%s1201 + $0x38] sm:$0xff]
  %v1210 = vld [vmem:[%s1201 + $0x40] sm:$0xff]
  %v1211 = vld [vmem:[%s1201 + $0x48] sm:$0xff]
  %v1212 = vld [vmem:[%s1201 + $0x50] sm:$0xff]
  %v1213 = vld [vmem:[%s1201 + $0x58] sm:$0xff]
  %v1214 = vld [vmem:[%s1201 + $0x60] sm:$0xff]
  %v1215 = vld [vmem:[%s1201 + $0x68] sm:$0xff]
  %v1216 = vld [vmem:[%s1201 + $0x70] sm:$0xff]
  %v1217 = vld [vmem:[%s1201 + $0x78] sm:$0xff]
  %v1218 = vld [vmem:[%s1201 + $0x80] sm:$0xff]
  %v1219 = vld [vmem:[%s1201 + $0x88] sm:$0xff]
  %v1220 = vld [vmem:[%s1201 + $0x90] sm:$0xff]
  %v1221 = vld [vmem:[%s1201 + $0x98] sm:$0xff]
  %v1222 = vld [vmem:[%s1201 + $0xa0] sm:$0xff]
  %v1223 = vld [vmem:[%s1201 + $0xa8] sm:$0xff]
  %v1224 = vld [vmem:[%s1201 + $0xb0] sm:$0xff]
  %v1225 = vld [vmem:[%s1201 + $0xb8] sm:$0xff]
  %v1226 = vld [vmem:[%s1201 + $0xc0] sm:$0xff]
  %v1227 = vld [vmem:[%s1201 + $0xc8] sm:$0xff]
  %v1228 = vld [vmem:[%s1201 + $0xd0] sm:$0xff]
  %v1229 = vld [vmem:[%s1201 + $0xd8] sm:$0xff]
  %v1230 = vld [vmem:[%s1201 + $0xe0] sm:$0xff]
  %v1231 = vld [vmem:[%s1201 + $0xe8] sm:$0xff]
  %v1232 = vld [vmem:[%s1201 + $0xf0] sm:$0xff]
  %v1233 = vld [vmem:[%s1201 + $0xf8] sm:$0xff]
  %v1234 = vld [vmem:[%s1201 + $0x100] sm:$0xff]
  %v1235 = vld [vmem:[%s1201 + $0x108] sm:$0xff]
  %v1236 = vld [vmem:[%s1201 + $0x110] sm:$0xff]
  %v1237 = vld [vmem:[%s1201 + $0x118] sm:$0xff]
  %v1238 = vld [vmem:[%s1201 + $0x120] sm:$0xff]
  %v1239 = vld [vmem:[%s1201 + $0x128] sm:$0xff]
  %v1240 = vld [vmem:[%s1201 + $0x130] sm:$0xff]
  %v1241 = vld [vmem:[%s1201 + $0x138] sm:$0xff]
  %v1242 = vld [vmem:[%s1201 + $0x140] sm:$0xff]
  %v1243 = vld [vmem:[%s1201 + $0x148] sm:$0xff]
  %v1244 = vld [vmem:[%s1201 + $0x150] sm:$0xff]
  %v1245 = vld [vmem:[%s1201 + $0x158] sm:$0xff]
  %v1246 = vld [vmem:[%s1201 + $0x160] sm:$0xff]
  %v1247 = vld [vmem:[%s1201 + $0x168] sm:$0xff]
  %v1248 = vld [vmem:[%s1201 + $0x170] sm:$0xff]
  %v1249 = vld [vmem:[%s1201 + $0x178] sm:$0xff]
  %v1250 = vld [vmem:[%s1201 + $0x180] sm:$0xff]
  %v1252 = vsel %vm65, %v1202, 0
  %v1255 = vsel %vm65, %v1203, 0
  %v1258 = vsel %vm65, %v1204, 0
  %v1261 = vsel %vm65, %v1205, 0
  %v1264 = vsel %vm65, %v1206, 0
  %v1267 = vsel %vm65, %v1207, 0
  %v1270 = vsel %vm65, %v1208, 0
  %v1273 = vsel %vm65, %v1209, 0
  %v1276 = vsel %vm65, %v1210, 0
  %v1279 = vsel %vm65, %v1211, 0
  %v1282 = vsel %vm65, %v1212, 0
  %v1285 = vsel %vm65, %v1213, 0
  %v1288 = vsel %vm65, %v1214, 0
  %v1291 = vsel %vm65, %v1215, 0
  %v1294 = vsel %vm65, %v1216, 0
  %v1297 = vsel %vm65, %v1217, 0
  %v1300 = vsel %vm65, %v1218, 0
  %v1303 = vsel %vm65, %v1219, 0
  %v1306 = vsel %vm65, %v1220, 0
  %v1309 = vsel %vm65, %v1221, 0
  %v1312 = vsel %vm65, %v1222, 0
  %v1315 = vsel %vm65, %v1223, 0
  %v1318 = vsel %vm65, %v1224, 0
  %v1321 = vsel %vm65, %v1225, 0
  %v1324 = vsel %vm65, %v1226, 0
  %v1327 = vsel %vm65, %v1227, 0
  %v1330 = vsel %vm65, %v1228, 0
  %v1333 = vsel %vm65, %v1229, 0
  %v1336 = vsel %vm65, %v1230, 0
  %v1339 = vsel %vm65, %v1231, 0
  %v1342 = vsel %vm65, %v1232, 0
  %v1345 = vsel %vm65, %v1233, 0
  %v1348 = vsel %vm65, %v1234, 0
  %v1351 = vsel %vm65, %v1235, 0
  %v1354 = vsel %vm65, %v1236, 0
  %v1357 = vsel %vm65, %v1237, 0
  %v1360 = vsel %vm65, %v1238, 0
  %v1363 = vsel %vm65, %v1239, 0
  %v1366 = vsel %vm65, %v1240, 0
  %v1369 = vsel %vm65, %v1241, 0
  %v1372 = vsel %vm65, %v1242, 0
  %v1375 = vsel %vm65, %v1243, 0
  %v1378 = vsel %vm65, %v1244, 0
  %v1381 = vsel %vm65, %v1245, 0
  %v1384 = vsel %vm65, %v1246, 0
  %v1387 = vsel %vm65, %v1247, 0
  %v1390 = vsel %vm65, %v1248, 0
  %v1393 = vsel %vm65, %v1249, 0
  %v1396 = vsel %vm65, %v1250, 0
  %1398 = vmatpush.msra.mxu0 0.0
  %1399 = vmatpush.msra.mxu0 0.0
  %1400 = vmatpush.msra.mxu0 0.0
  %1401 = vmatpush.msra.mxu0 0.0
  %1402 = vmatpush.msra.mxu0 0.0
  %1403 = vmatpush.msra.mxu0 0.0
  %1404 = vmatpush.msra.mxu0 0.0
  %1405 = vmatpush.msra.mxu0 0.0
  %1406 = vmatpush.msra.mxu0 0.0
  %1407 = vmatpush.msra.mxu0 0.0
  %1408 = vmatpush.msra.mxu0 0.0
  %1409 = vmatpush.msra.mxu0 0.0
  %1410 = vmatpush.msra.mxu0 0.0
  %1411 = vmatpush.msra.mxu0 0.0
  %1412 = vmatpush.msra.mxu0 %v215
  %1413 = vmatpush.msra.mxu0 %v14
  %1414 = vmatmul.f32.gmra.mxu0 %v1252
  %v1415 = vpop.f32.mrf.mxu0
  %v1416 = vadd.f32 0.0, %v1415
  %1417 = vmatmul.f32.gmra.mxu0 %v1255
  %v1418 = vpop.f32.mrf.mxu0
  %v1419 = vadd.f32 0.0, %v1418
  %1420 = vmatmul.f32.gmra.mxu0 %v1258
  %v1421 = vpop.f32.mrf.mxu0
  %v1422 = vadd.f32 0.0, %v1421
  %1423 = vmatmul.f32.gmra.mxu0 %v1261
  %v1424 = vpop.f32.mrf.mxu0
  %v1425 = vadd.f32 0.0, %v1424
  %1426 = vmatmul.f32.gmra.mxu0 %v1264
  %v1427 = vpop.f32.mrf.mxu0
  %v1428 = vadd.f32 0.0, %v1427
  %1429 = vmatmul.f32.gmra.mxu0 %v1267
  %v1430 = vpop.f32.mrf.mxu0
  %v1431 = vadd.f32 0.0, %v1430
  %1432 = vmatmul.f32.gmra.mxu0 %v1270
  %v1433 = vpop.f32.mrf.mxu0
  %v1434 = vadd.f32 0.0, %v1433
  %1435 = vmatmul.f32.gmra.mxu0 %v1273
  %v1436 = vpop.f32.mrf.mxu0
  %v1437 = vadd.f32 0.0, %v1436
  %1438 = vmatmul.f32.gmra.mxu0 %v1276
  %v1439 = vpop.f32.mrf.mxu0
  %v1440 = vadd.f32 0.0, %v1439
  %1441 = vmatmul.f32.gmra.mxu0 %v1279
  %v1442 = vpop.f32.mrf.mxu0
  %v1443 = vadd.f32 0.0, %v1442
  %1444 = vmatmul.f32.gmra.mxu0 %v1282
  %v1445 = vpop.f32.mrf.mxu0
  %v1446 = vadd.f32 0.0, %v1445
  %1447 = vmatmul.f32.gmra.mxu0 %v1285
  %v1448 = vpop.f32.mrf.mxu0
  %v1449 = vadd.f32 0.0, %v1448
  %1450 = vmatmul.f32.gmra.mxu0 %v1288
  %v1451 = vpop.f32.mrf.mxu0
  %v1452 = vadd.f32 0.0, %v1451
  %1453 = vmatmul.f32.gmra.mxu0 %v1291
  %v1454 = vpop.f32.mrf.mxu0
  %v1455 = vadd.f32 0.0, %v1454
  %1456 = vmatmul.f32.gmra.mxu0 %v1294
  %v1457 = vpop.f32.mrf.mxu0
  %v1458 = vadd.f32 0.0, %v1457
  %1459 = vmatmul.f32.gmra.mxu0 %v1297
  %v1460 = vpop.f32.mrf.mxu0
  %v1461 = vadd.f32 0.0, %v1460
  %1462 = vmatmul.f32.gmra.mxu0 %v1300
  %v1463 = vpop.f32.mrf.mxu0
  %v1464 = vadd.f32 0.0, %v1463
  %1465 = vmatmul.f32.gmra.mxu0 %v1303
  %v1466 = vpop.f32.mrf.mxu0
  %v1467 = vadd.f32 0.0, %v1466
  %1468 = vmatmul.f32.gmra.mxu0 %v1306
  %v1469 = vpop.f32.mrf.mxu0
  %v1470 = vadd.f32 0.0, %v1469
  %1471 = vmatmul.f32.gmra.mxu0 %v1309
  %v1472 = vpop.f32.mrf.mxu0
  %v1473 = vadd.f32 0.0, %v1472
  %1474 = vmatmul.f32.gmra.mxu0 %v1312
  %v1475 = vpop.f32.mrf.mxu0
  %v1476 = vadd.f32 0.0, %v1475
  %1477 = vmatmul.f32.gmra.mxu0 %v1315
  %v1478 = vpop.f32.mrf.mxu0
  %v1479 = vadd.f32 0.0, %v1478
  %1480 = vmatmul.f32.gmra.mxu0 %v1318
  %v1481 = vpop.f32.mrf.mxu0
  %v1482 = vadd.f32 0.0, %v1481
  %1483 = vmatmul.f32.gmra.mxu0 %v1321
  %v1484 = vpop.f32.mrf.mxu0
  %v1485 = vadd.f32 0.0, %v1484
  %1486 = vmatmul.f32.gmra.mxu0 %v1324
  %v1487 = vpop.f32.mrf.mxu0
  %v1488 = vadd.f32 0.0, %v1487
  %1489 = vmatmul.f32.gmra.mxu0 %v1327
  %v1490 = vpop.f32.mrf.mxu0
  %v1491 = vadd.f32 0.0, %v1490
  %1492 = vmatmul.f32.gmra.mxu0 %v1330
  %v1493 = vpop.f32.mrf.mxu0
  %v1494 = vadd.f32 0.0, %v1493
  %1495 = vmatmul.f32.gmra.mxu0 %v1333
  %v1496 = vpop.f32.mrf.mxu0
  %v1497 = vadd.f32 0.0, %v1496
  %1498 = vmatmul.f32.gmra.mxu0 %v1336
  %v1499 = vpop.f32.mrf.mxu0
  %v1500 = vadd.f32 0.0, %v1499
  %1501 = vmatmul.f32.gmra.mxu0 %v1339
  %v1502 = vpop.f32.mrf.mxu0
  %v1503 = vadd.f32 0.0, %v1502
  %1504 = vmatmul.f32.gmra.mxu0 %v1342
  %v1505 = vpop.f32.mrf.mxu0
  %v1506 = vadd.f32 0.0, %v1505
  %1507 = vmatmul.f32.gmra.mxu0 %v1345
  %v1508 = vpop.f32.mrf.mxu0
  %v1509 = vadd.f32 0.0, %v1508
  %1510 = vmatmul.f32.gmra.mxu0 %v1348
  %v1511 = vpop.f32.mrf.mxu0
  %v1512 = vadd.f32 0.0, %v1511
  %1513 = vmatmul.f32.gmra.mxu0 %v1351
  %v1514 = vpop.f32.mrf.mxu0
  %v1515 = vadd.f32 0.0, %v1514
  %1516 = vmatmul.f32.gmra.mxu0 %v1354
  %v1517 = vpop.f32.mrf.mxu0
  %v1518 = vadd.f32 0.0, %v1517
  %1519 = vmatmul.f32.gmra.mxu0 %v1357
  %v1520 = vpop.f32.mrf.mxu0
  %v1521 = vadd.f32 0.0, %v1520
  %1522 = vmatmul.f32.gmra.mxu0 %v1360
  %v1523 = vpop.f32.mrf.mxu0
  %v1524 = vadd.f32 0.0, %v1523
  %1525 = vmatmul.f32.gmra.mxu0 %v1363
  %v1526 = vpop.f32.mrf.mxu0
  %v1527 = vadd.f32 0.0, %v1526
  %1528 = vmatmul.f32.gmra.mxu0 %v1366
  %v1529 = vpop.f32.mrf.mxu0
  %v1530 = vadd.f32 0.0, %v1529
  %1531 = vmatmul.f32.gmra.mxu0 %v1369
  %v1532 = vpop.f32.mrf.mxu0
  %v1533 = vadd.f32 0.0, %v1532
  %1534 = vmatmul.f32.gmra.mxu0 %v1372
  %v1535 = vpop.f32.mrf.mxu0
  %v1536 = vadd.f32 0.0, %v1535
  %1537 = vmatmul.f32.gmra.mxu0 %v1375
  %v1538 = vpop.f32.mrf.mxu0
  %v1539 = vadd.f32 0.0, %v1538
  %1540 = vmatmul.f32.gmra.mxu0 %v1378
  %v1541 = vpop.f32.mrf.mxu0
  %v1542 = vadd.f32 0.0, %v1541
  %1543 = vmatmul.f32.gmra.mxu0 %v1381
  %v1544 = vpop.f32.mrf.mxu0
  %v1545 = vadd.f32 0.0, %v1544
  %1546 = vmatmul.f32.gmra.mxu0 %v1384
  %v1547 = vpop.f32.mrf.mxu0
  %v1548 = vadd.f32 0.0, %v1547
  %1549 = vmatmul.f32.gmra.mxu0 %v1387
  %v1550 = vpop.f32.mrf.mxu0
  %v1551 = vadd.f32 0.0, %v1550
  %1552 = vmatmul.f32.gmra.mxu0 %v1390
  %v1553 = vpop.f32.mrf.mxu0
  %v1554 = vadd.f32 0.0, %v1553
  %1555 = vmatmul.f32.gmra.mxu0 %v1393
  %v1556 = vpop.f32.mrf.mxu0
  %v1557 = vadd.f32 0.0, %v1556
  %1558 = vmatmul.f32.gmra.mxu0 %v1396
  %v1559 = vpop.f32.mrf.mxu0
  %v1560 = vadd.f32 0.0, %v1559
  %1561 = vdwg.mxu0
  %v1562 = vmax.f32 %v1152, %v1416
  %v1563 = vmax.f32 %v1153, %v1419
  %v1564 = vmax.f32 %v1154, %v1422
  %v1565 = vmax.f32 %v1155, %v1425
  %v1566 = vmax.f32 %v1156, %v1428
  %v1567 = vmax.f32 %v1157, %v1431
  %v1568 = vmax.f32 %v1158, %v1434
  %v1569 = vmax.f32 %v1159, %v1437
  %v1570 = vmax.f32 %v1160, %v1440
  %v1571 = vmax.f32 %v1161, %v1443
  %v1572 = vmax.f32 %v1162, %v1446
  %v1573 = vmax.f32 %v1163, %v1449
  %v1574 = vmax.f32 %v1164, %v1452
  %v1575 = vmax.f32 %v1165, %v1455
  %v1576 = vmax.f32 %v1166, %v1458
  %v1577 = vmax.f32 %v1167, %v1461
  %v1578 = vmax.f32 %v1168, %v1464
  %v1579 = vmax.f32 %v1169, %v1467
  %v1580 = vmax.f32 %v1170, %v1470
  %v1581 = vmax.f32 %v1171, %v1473
  %v1582 = vmax.f32 %v1172, %v1476
  %v1583 = vmax.f32 %v1173, %v1479
  %v1584 = vmax.f32 %v1174, %v1482
  %v1585 = vmax.f32 %v1175, %v1485
  %v1586 = vmax.f32 %v1176, %v1488
  %v1587 = vmax.f32 %v1177, %v1491
  %v1588 = vmax.f32 %v1178, %v1494
  %v1589 = vmax.f32 %v1179, %v1497
  %v1590 = vmax.f32 %v1180, %v1500
  %v1591 = vmax.f32 %v1181, %v1503
  %v1592 = vmax.f32 %v1182, %v1506
  %v1593 = vmax.f32 %v1183, %v1509
  %v1594 = vmax.f32 %v1184, %v1512
  %v1595 = vmax.f32 %v1185, %v1515
  %v1596 = vmax.f32 %v1186, %v1518
  %v1597 = vmax.f32 %v1187, %v1521
  %v1598 = vmax.f32 %v1188, %v1524
  %v1599 = vmax.f32 %v1189, %v1527
  %v1600 = vmax.f32 %v1190, %v1530
  %v1601 = vmax.f32 %v1191, %v1533
  %v1602 = vmax.f32 %v1192, %v1536
  %v1603 = vmax.f32 %v1193, %v1539
  %v1604 = vmax.f32 %v1194, %v1542
  %v1605 = vmax.f32 %v1195, %v1545
  %v1606 = vmax.f32 %v1196, %v1548
  %v1607 = vmax.f32 %v1197, %v1551
  %v1608 = vmax.f32 %v1198, %v1554
  %v1609 = vmax.f32 %v1199, %v1557
  %v1610 = vmax.f32 %v1200, %v1560
  %v1611 = vld [vmem:[%s2] sm:$0x1]
  %v1613 = vperm.slane %v1611, 0
  %v1615 = vadd.f32 %v1562, %v1613
  %v1616 = vadd.f32 %v1563, %v1613
  %v1617 = vadd.f32 %v1564, %v1613
  %v1618 = vadd.f32 %v1565, %v1613
  %v1619 = vadd.f32 %v1566, %v1613
  %v1620 = vadd.f32 %v1567, %v1613
  %v1621 = vadd.f32 %v1568, %v1613
  %v1622 = vadd.f32 %v1569, %v1613
  %v1623 = vadd.f32 %v1570, %v1613
  %v1624 = vadd.f32 %v1571, %v1613
  %v1625 = vadd.f32 %v1572, %v1613
  %v1626 = vadd.f32 %v1573, %v1613
  %v1627 = vadd.f32 %v1574, %v1613
  %v1628 = vadd.f32 %v1575, %v1613
  %v1629 = vadd.f32 %v1576, %v1613
  %v1630 = vadd.f32 %v1577, %v1613
  %v1631 = vadd.f32 %v1578, %v1613
  %v1632 = vadd.f32 %v1579, %v1613
  %v1633 = vadd.f32 %v1580, %v1613
  %v1634 = vadd.f32 %v1581, %v1613
  %v1635 = vadd.f32 %v1582, %v1613
  %v1636 = vadd.f32 %v1583, %v1613
  %v1637 = vadd.f32 %v1584, %v1613
  %v1638 = vadd.f32 %v1585, %v1613
  %v1639 = vadd.f32 %v1586, %v1613
  %v1640 = vadd.f32 %v1587, %v1613
  %v1641 = vadd.f32 %v1588, %v1613
  %v1642 = vadd.f32 %v1589, %v1613
  %v1643 = vadd.f32 %v1590, %v1613
  %v1644 = vadd.f32 %v1591, %v1613
  %v1645 = vadd.f32 %v1592, %v1613
  %v1646 = vadd.f32 %v1593, %v1613
  %v1647 = vadd.f32 %v1594, %v1613
  %v1648 = vadd.f32 %v1595, %v1613
  %v1649 = vadd.f32 %v1596, %v1613
  %v1650 = vadd.f32 %v1597, %v1613
  %v1651 = vadd.f32 %v1598, %v1613
  %v1652 = vadd.f32 %v1599, %v1613
  %v1653 = vadd.f32 %v1600, %v1613
  %v1654 = vadd.f32 %v1601, %v1613
  %v1655 = vadd.f32 %v1602, %v1613
  %v1656 = vadd.f32 %v1603, %v1613
  %v1657 = vadd.f32 %v1604, %v1613
  %v1658 = vadd.f32 %v1605, %v1613
  %v1659 = vadd.f32 %v1606, %v1613
  %v1660 = vadd.f32 %v1607, %v1613
  %v1661 = vadd.f32 %v1608, %v1613
  %v1662 = vadd.f32 %v1609, %v1613
  %v1663 = vadd.f32 %v1610, %v1613
  %v1664 = vmax.f32 %v1615, 0.0
  %v1665 = vmax.f32 %v1616, 0.0
  %v1666 = vmax.f32 %v1617, 0.0
  %v1667 = vmax.f32 %v1618, 0.0
  %v1668 = vmax.f32 %v1619, 0.0
  %v1669 = vmax.f32 %v1620, 0.0
  %v1670 = vmax.f32 %v1621, 0.0
  %v1671 = vmax.f32 %v1622, 0.0
  %v1672 = vmax.f32 %v1623, 0.0
  %v1673 = vmax.f32 %v1624, 0.0
  %v1674 = vmax.f32 %v1625, 0.0
  %v1675 = vmax.f32 %v1626, 0.0
  %v1676 = vmax.f32 %v1627, 0.0
  %v1677 = vmax.f32 %v1628, 0.0
  %v1678 = vmax.f32 %v1629, 0.0
  %v1679 = vmax.f32 %v1630, 0.0
  %v1680 = vmax.f32 %v1631, 0.0
  %v1681 = vmax.f32 %v1632, 0.0
  %v1682 = vmax.f32 %v1633, 0.0
  %v1683 = vmax.f32 %v1634, 0.0
  %v1684 = vmax.f32 %v1635, 0.0
  %v1685 = vmax.f32 %v1636, 0.0
  %v1686 = vmax.f32 %v1637, 0.0
  %v1687 = vmax.f32 %v1638, 0.0
  %v1688 = vmax.f32 %v1639, 0.0
  %v1689 = vmax.f32 %v1640, 0.0
  %v1690 = vmax.f32 %v1641, 0.0
  %v1691 = vmax.f32 %v1642, 0.0
  %v1692 = vmax.f32 %v1643, 0.0
  %v1693 = vmax.f32 %v1644, 0.0
  %v1694 = vmax.f32 %v1645, 0.0
  %v1695 = vmax.f32 %v1646, 0.0
  %v1696 = vmax.f32 %v1647, 0.0
  %v1697 = vmax.f32 %v1648, 0.0
  %v1698 = vmax.f32 %v1649, 0.0
  %v1699 = vmax.f32 %v1650, 0.0
  %v1700 = vmax.f32 %v1651, 0.0
  %v1701 = vmax.f32 %v1652, 0.0
  %v1702 = vmax.f32 %v1653, 0.0
  %v1703 = vmax.f32 %v1654, 0.0
  %v1704 = vmax.f32 %v1655, 0.0
  %v1705 = vmax.f32 %v1656, 0.0
  %v1706 = vmax.f32 %v1657, 0.0
  %v1707 = vmax.f32 %v1658, 0.0
  %v1708 = vmax.f32 %v1659, 0.0
  %v1709 = vmax.f32 %v1660, 0.0
  %v1710 = vmax.f32 %v1661, 0.0
  %v1711 = vmax.f32 %v1662, 0.0
  %v1712 = vmax.f32 %v1663, 0.0
  %vm1713 = vcmask 261120
  %1714 = vst.msk [vmem:[%s3] sm:$0xff] %vm1713, %v1664
  %1715 = vst.msk [vmem:[%s3 + $0x8] sm:$0xff] %vm1713, %v1665
  %1716 = vst.msk [vmem:[%s3 + $0x10] sm:$0xff] %vm1713, %v1666
  %1717 = vst.msk [vmem:[%s3 + $0x18] sm:$0xff] %vm1713, %v1667
  %1718 = vst.msk [vmem:[%s3 + $0x20] sm:$0xff] %vm1713, %v1668
  %1719 = vst.msk [vmem:[%s3 + $0x28] sm:$0xff] %vm1713, %v1669
  %1720 = vst.msk [vmem:[%s3 + $0x30] sm:$0xff] %vm1713, %v1670
  %1721 = vst.msk [vmem:[%s3 + $0x38] sm:$0xff] %vm1713, %v1671
  %1722 = vst.msk [vmem:[%s3 + $0x40] sm:$0xff] %vm1713, %v1672
  %1723 = vst.msk [vmem:[%s3 + $0x48] sm:$0xff] %vm1713, %v1673
  %1724 = vst.msk [vmem:[%s3 + $0x50] sm:$0xff] %vm1713, %v1674
  %1725 = vst.msk [vmem:[%s3 + $0x58] sm:$0xff] %vm1713, %v1675
  %1726 = vst.msk [vmem:[%s3 + $0x60] sm:$0xff] %vm1713, %v1676
  %1727 = vst.msk [vmem:[%s3 + $0x68] sm:$0xff] %vm1713, %v1677
  %1728 = vst.msk [vmem:[%s3 + $0x70] sm:$0xff] %vm1713, %v1678
  %1729 = vst.msk [vmem:[%s3 + $0x78] sm:$0xff] %vm1713, %v1679
  %1730 = vst.msk [vmem:[%s3 + $0x80] sm:$0xff] %vm1713, %v1680
  %1731 = vst.msk [vmem:[%s3 + $0x88] sm:$0xff] %vm1713, %v1681
  %1732 = vst.msk [vmem:[%s3 + $0x90] sm:$0xff] %vm1713, %v1682
  %1733 = vst.msk [vmem:[%s3 + $0x98] sm:$0xff] %vm1713, %v1683
  %1734 = vst.msk [vmem:[%s3 + $0xa0] sm:$0xff] %vm1713, %v1684
  %1735 = vst.msk [vmem:[%s3 + $0xa8] sm:$0xff] %vm1713, %v1685
  %1736 = vst.msk [vmem:[%s3 + $0xb0] sm:$0xff] %vm1713, %v1686
  %1737 = vst.msk [vmem:[%s3 + $0xb8] sm:$0xff] %vm1713, %v1687
  %1738 = vst.msk [vmem:[%s3 + $0xc0] sm:$0xff] %vm1713, %v1688
  %1739 = vst.msk [vmem:[%s3 + $0xc8] sm:$0xff] %vm1713, %v1689
  %1740 = vst.msk [vmem:[%s3 + $0xd0] sm:$0xff] %vm1713, %v1690
  %1741 = vst.msk [vmem:[%s3 + $0xd8] sm:$0xff] %vm1713, %v1691
  %1742 = vst.msk [vmem:[%s3 + $0xe0] sm:$0xff] %vm1713, %v1692
  %1743 = vst.msk [vmem:[%s3 + $0xe8] sm:$0xff] %vm1713, %v1693
  %1744 = vst.msk [vmem:[%s3 + $0xf0] sm:$0xff] %vm1713, %v1694
  %1745 = vst.msk [vmem:[%s3 + $0xf8] sm:$0xff] %vm1713, %v1695
  %1746 = vst.msk [vmem:[%s3 + $0x100] sm:$0xff] %vm1713, %v1696
  %1747 = vst.msk [vmem:[%s3 + $0x108] sm:$0xff] %vm1713, %v1697
  %1748 = vst.msk [vmem:[%s3 + $0x110] sm:$0xff] %vm1713, %v1698
  %1749 = vst.msk [vmem:[%s3 + $0x118] sm:$0xff] %vm1713, %v1699
  %1750 = vst.msk [vmem:[%s3 + $0x120] sm:$0xff] %vm1713, %v1700
  %1751 = vst.msk [vmem:[%s3 + $0x128] sm:$0xff] %vm1713, %v1701
  %1752 = vst.msk [vmem:[%s3 + $0x130] sm:$0xff] %vm1713, %v1702
  %1753 = vst.msk [vmem:[%s3 + $0x138] sm:$0xff] %vm1713, %v1703
  %1754 = vst.msk [vmem:[%s3 + $0x140] sm:$0xff] %vm1713, %v1704
  %1755 = vst.msk [vmem:[%s3 + $0x148] sm:$0xff] %vm1713, %v1705
  %1756 = vst.msk [vmem:[%s3 + $0x150] sm:$0xff] %vm1713, %v1706
  %1757 = vst.msk [vmem:[%s3 + $0x158] sm:$0xff] %vm1713, %v1707
  %1758 = vst.msk [vmem:[%s3 + $0x160] sm:$0xff] %vm1713, %v1708
  %1759 = vst.msk [vmem:[%s3 + $0x168] sm:$0xff] %vm1713, %v1709
  %1760 = vst.msk [vmem:[%s3 + $0x170] sm:$0xff] %vm1713, %v1710
  %1761 = vst.msk [vmem:[%s3 + $0x178] sm:$0xff] %vm1713, %v1711
  %1762 = vst.msk [vmem:[%s3 + $0x180] sm:$0xff] %vm1713, %v1712
  // Predicated region
  $region14: #{cnn_forward.3} parent=0 // pred_check
    _
  $region15: #{cnn_forward.3} parent=0 // pred_check_branch
    %1764 = sbr.rel (0) target = $region17
  $region16: #{cnn_forward.3} parent=0 // pred_region
    _
  $region17: #{cnn_forward.3} parent=0 // pred_fallthru
    _
  // Predicated region
  $region18: #{cnn_forward.3} parent=0 // pred_check
    _
  $region19: #{cnn_forward.3} parent=0 // pred_check_branch
    %1766 = sbr.rel (0) target = $region21
  $region20: #{cnn_forward.3} parent=0 // pred_region
    _
  $region21: #{cnn_forward.3} parent=0 // pred_fallthru
    _

// kernel: cnn_forward.4
$region0: #{cnn_forward.4}
  #allocation0 [shape = 'u32[]', space=smem, size = 0x4, offset = 0x4, fixed_abs, tag = 'smem constant byte address 0x4 - core index']
  #allocation1 [shape = 'u32[72,128]{1,0:T(1,128)}', space=vmem, size = 0x9000, scoped, tag = 'internal scratch']
  %s0 = inlined_call_operand.vmem [shape: f32[4,98,288], index: 0, kind: input, shape index: {}]
  %s1 = inlined_call_operand.vmem [shape: f32[288,64], index: 1, kind: input, shape index: {}]
  %s2 = inlined_call_operand.vmem [shape: f32[1,64], index: 2, kind: input, shape index: {}]
  %s3 = inlined_call_operand.vmem [shape: f32[98,64], index: 3, kind: output, shape index: {}]
  %s4 = sld [smem:[#allocation0]]
  $region22: #{cnn_forward.4} parent=0
    _
  %s6 = ssub.s32 1, %s4
  %s7 = scalar_select 0, %s6, %s4
  // Predicated region
  $region2: #{cnn_forward.4} parent=0 // pred_check
    _
  $region3: #{cnn_forward.4} parent=0 // pred_check_branch
    %9 = sbr.rel (0) target = $region5
  $region4: #{cnn_forward.4} parent=0 // pred_region
    _
  $region5: #{cnn_forward.4} parent=0 // pred_fallthru
    _
  // Predicated region
  $region6: #{cnn_forward.4} parent=0 // pred_check
    _
  $region7: #{cnn_forward.4} parent=0 // pred_check_branch
    %11 = sbr.rel (0) target = $region9
  $region8: #{cnn_forward.4} parent=0 // pred_region
    _
  $region9: #{cnn_forward.4} parent=0 // pred_fallthru
    _
  // Predicated region
  $region10: #{cnn_forward.4} parent=0 // pred_check
    _
  $region11: #{cnn_forward.4} parent=0 // pred_check_branch
    %13 = sbr.rel (0) target = $region13
  $region12: #{cnn_forward.4} parent=0 // pred_region
    _
  $region13: #{cnn_forward.4} parent=0 // pred_fallthru
    _
  %v14 = vld [vmem:[%s1] sm:$0xff]
  %v15 = vld [vmem:[%s1 + $0x8] sm:$0xff]
  %v16 = vld [vmem:[%s1 + $0x10] sm:$0xff]
  %v17 = vld [vmem:[%s1 + $0x18] sm:$0xff]
  %v18 = vld [vmem:[%s1 + $0x20] sm:$0xff]
  %v19 = vld [vmem:[%s1 + $0x28] sm:$0xff]
  %v20 = vld [vmem:[%s1 + $0x30] sm:$0xff]
  %v21 = vld [vmem:[%s1 + $0x38] sm:$0xff]
  %v22 = vld [vmem:[%s1 + $0x40] sm:$0xff]
  %v23 = vld [vmem:[%s1 + $0x48] sm:$0xff]
  %v24 = vld [vmem:[%s1 + $0x50] sm:$0xff]
  %v25 = vld [vmem:[%s1 + $0x58] sm:$0xff]
  %v26 = vld [vmem:[%s1 + $0x60] sm:$0xff]
  %v27 = vld [vmem:[%s1 + $0x68] sm:$0xff]
  %v28 = vld [vmem:[%s1 + $0x70] sm:$0xff]
  %v29 = vld [vmem:[%s1 + $0x78] sm:$0xff]
  %v30 = vld [vmem:[%s1 + $0x80] sm:$0xff]
  %v31 = vld [vmem:[%s1 + $0x88] sm:$0xff]
  %v32 = vld [vmem:[%s1 + $0x90] sm:$0xff]
  %v33 = vld [vmem:[%s1 + $0x98] sm:$0xff]
  %v34 = vld [vmem:[%s1 + $0xa0] sm:$0xff]
  %v35 = vld [vmem:[%s1 + $0xa8] sm:$0xff]
  %v36 = vld [vmem:[%s1 + $0xb0] sm:$0xff]
  %v37 = vld [vmem:[%s1 + $0xb8] sm:$0xff]
  %v38 = vld [vmem:[%s1 + $0xc0] sm:$0xff]
  %v39 = vld [vmem:[%s1 + $0xc8] sm:$0xff]
  %v40 = vld [vmem:[%s1 + $0xd0] sm:$0xff]
  %v41 = vld [vmem:[%s1 + $0xd8] sm:$0xff]
  %v42 = vld [vmem:[%s1 + $0xe0] sm:$0xff]
  %v43 = vld [vmem:[%s1 + $0xe8] sm:$0xff]
  %v44 = vld [vmem:[%s1 + $0xf0] sm:$0xff]
  %v45 = vld [vmem:[%s1 + $0xf8] sm:$0xff]
  %v46 = vld [vmem:[%s1 + $0x100] sm:$0xff]
  %v47 = vld [vmem:[%s1 + $0x108] sm:$0xff]
  %v48 = vld [vmem:[%s1 + $0x110] sm:$0xff]
  %v49 = vld [vmem:[%s1 + $0x118] sm:$0xff]
  %v50 = vld [vmem:[%s0] sm:$0xff]
  %v51 = vld [vmem:[%s0 + $0x8] sm:$0xff]
  %v52 = vld [vmem:[%s0 + $0x10] sm:$0xff]
  %v53 = vld [vmem:[%s0 + $0x18] sm:$0xff]
  %v54 = vld [vmem:[%s0 + $0x20] sm:$0xff]
  %v55 = vld [vmem:[%s0 + $0x28] sm:$0xff]
  %v56 = vld [vmem:[%s0 + $0x30] sm:$0xff]
  %v57 = vld [vmem:[%s0 + $0x38] sm:$0xff]
  %v58 = vld [vmem:[%s0 + $0x40] sm:$0xff]
  %v59 = vld [vmem:[%s0 + $0x48] sm:$0xff]
  %v60 = vld [vmem:[%s0 + $0x50] sm:$0xff]
  %v61 = vld [vmem:[%s0 + $0x58] sm:$0xff]
  %v62 = vld [vmem:[%s0 + $0x60] sm:$0xff]
  %v63 = vld [vmem:[%s0 + $0x68] sm:$0xff]
  %v64 = vld [vmem:[%s0 + $0x70] sm:$0xff]
  %v65 = vld [vmem:[%s0 + $0x78] sm:$0xff]
  %v66 = vld [vmem:[%s0 + $0x80] sm:$0xff]
  %v67 = vld [vmem:[%s0 + $0x88] sm:$0xff]
  %v68 = vld [vmem:[%s0 + $0x90] sm:$0xff]
  %v69 = vld [vmem:[%s0 + $0x98] sm:$0xff]
  %v70 = vld [vmem:[%s0 + $0xa0] sm:$0xff]
  %v71 = vld [vmem:[%s0 + $0xa8] sm:$0xff]
  %v72 = vld [vmem:[%s0 + $0xb0] sm:$0xff]
  %v73 = vld [vmem:[%s0 + $0xb8] sm:$0xff]
  %v74 = vld [vmem:[%s0 + $0xc0] sm:$0xff]
  %v75 = vld [vmem:[%s0 + $0xc8] sm:$0xff]
  %v76 = vld [vmem:[%s0 + $0xd0] sm:$0xff]
  %v77 = vld [vmem:[%s0 + $0xd8] sm:$0xff]
  %v78 = vld [vmem:[%s0 + $0xe0] sm:$0xff]
  %v79 = vld [vmem:[%s0 + $0xe8] sm:$0xff]
  %v80 = vld [vmem:[%s0 + $0xf0] sm:$0xff]
  %v81 = vld [vmem:[%s0 + $0xf8] sm:$0xff]
  %v82 = vld [vmem:[%s0 + $0x100] sm:$0xff]
  %v83 = vld [vmem:[%s0 + $0x108] sm:$0xff]
  %v84 = vld [vmem:[%s0 + $0x110] sm:$0xff]
  %v85 = vld [vmem:[%s0 + $0x118] sm:$0xff]
  %v86 = vld [vmem:[%s0 + $0x120] sm:$0x3]
  %v87 = vld [vmem:[%s0 + $0x128] sm:$0x3]
  %v88 = vld [vmem:[%s0 + $0x130] sm:$0x3]
  %vm89 = vcmask 261120
  %v91 = vsel %vm89, %v52, 0
  %v94 = vsel %vm89, %v55, 0
  %v97 = vsel %vm89, %v58, 0
  %v100 = vsel %vm89, %v61, 0
  %v103 = vsel %vm89, %v64, 0
  %v106 = vsel %vm89, %v67, 0
  %v109 = vsel %vm89, %v70, 0
  %v112 = vsel %vm89, %v73, 0
  %v115 = vsel %vm89, %v76, 0
  %v118 = vsel %vm89, %v79, 0
  %v121 = vsel %vm89, %v82, 0
  %v124 = vsel %vm89, %v85, 0
  %v127 = vsel %vm89, %v88, 0
  %129 = vmatpush.msra.mxu0 %v29
  %130 = vmatpush.msra.mxu0 %v28
  %131 = vmatpush.msra.mxu0 %v27
  %132 = vmatpush.msra.mxu0 %v26
  %133 = vmatpush.msra.mxu0 %v25
  %134 = vmatpush.msra.mxu0 %v24
  %135 = vmatpush.msra.mxu0 %v23
  %136 = vmatpush.msra.mxu0 %v22
  %137 = vmatpush.msra.mxu0 %v21
  %138 = vmatpush.msra.mxu0 %v20
  %139 = vmatpush.msra.mxu0 %v19
  %140 = vmatpush.msra.mxu0 %v18
  %141 = vmatpush.msra.mxu0 %v17
  %142 = vmatpush.msra.mxu0 %v16
  %143 = vmatpush.msra.mxu0 %v15
  %144 = vmatpush.msra.mxu0 %v14
  %145 = vmatmul.f32.gmra.mxu0 %v50
  %v146 = vpop.f32.mrf.mxu0
  %v147 = vadd.f32 0.0, %v146
  %148 = vmatmul.f32.gmra.mxu0 %v53
  %v149 = vpop.f32.mrf.mxu0
  %v150 = vadd.f32 0.0, %v149
  %151 = vmatmul.f32.gmra.mxu0 %v56
  %v152 = vpop.f32.mrf.mxu0
  %v153 = vadd.f32 0.0, %v152
  %154 = vmatmul.f32.gmra.mxu0 %v59
  %v155 = vpop.f32.mrf.mxu0
  %v156 = vadd.f32 0.0, %v155
  %157 = vmatmul.f32.gmra.mxu0 %v62
  %v158 = vpop.f32.mrf.mxu0
  %v159 = vadd.f32 0.0, %v158
  %160 = vmatmul.f32.gmra.mxu0 %v65
  %v161 = vpop.f32.mrf.mxu0
  %v162 = vadd.f32 0.0, %v161
  %163 = vmatmul.f32.gmra.mxu0 %v68
  %v164 = vpop.f32.mrf.mxu0
  %v165 = vadd.f32 0.0, %v164
  %166 = vmatmul.f32.gmra.mxu0 %v71
  %v167 = vpop.f32.mrf.mxu0
  %v168 = vadd.f32 0.0, %v167
  %169 = vmatmul.f32.gmra.mxu0 %v74
  %v170 = vpop.f32.mrf.mxu0
  %v171 = vadd.f32 0.0, %v170
  %172 = vmatmul.f32.gmra.mxu0 %v77
  %v173 = vpop.f32.mrf.mxu0
  %v174 = vadd.f32 0.0, %v173
  %175 = vmatmul.f32.gmra.mxu0 %v80
  %v176 = vpop.f32.mrf.mxu0
  %v177 = vadd.f32 0.0, %v176
  %178 = vmatmul.f32.gmra.mxu0 %v83
  %v179 = vpop.f32.mrf.mxu0
  %v180 = vadd.f32 0.0, %v179
  %181 = vmatmul.f32.gmra.mxu0 %v86
  %v182 = vpop.f32.mrf.mxu0
  %v183 = vadd.f32 0.0, %v182
  %184 = vdwg.mxu0
  %185 = vmatpush.msra.mxu0 %v45
  %186 = vmatpush.msra.mxu0 %v44
  %187 = vmatpush.msra.mxu0 %v43
  %188 = vmatpush.msra.mxu0 %v42
  %189 = vmatpush.msra.mxu0 %v41
  %190 = vmatpush.msra.mxu0 %v40
  %191 = vmatpush.msra.mxu0 %v39
  %192 = vmatpush.msra.mxu0 %v38
  %193 = vmatpush.msra.mxu0 %v37
  %194 = vmatpush.msra.mxu0 %v36
  %195 = vmatpush.msra.mxu0 %v35
  %196 = vmatpush.msra.mxu0 %v34
  %197 = vmatpush.msra.mxu0 %v33
  %198 = vmatpush.msra.mxu0 %v32
  %199 = vmatpush.msra.mxu0 %v31
  %200 = vmatpush.msra.mxu0 %v30
  %201 = vmatmul.f32.gmra.mxu0 %v51
  %v202 = vpop.f32.mrf.mxu0
  %v203 = vadd.f32 %v147, %v202
  %204 = vmatmul.f32.gmra.mxu0 %v54
  %v205 = vpop.f32.mrf.mxu0
  %v206 = vadd.f32 %v150, %v205
  %207 = vmatmul.f32.gmra.mxu0 %v57
  %v208 = vpop.f32.mrf.mxu0
  %v209 = vadd.f32 %v153, %v208
  %210 = vmatmul.f32.gmra.mxu0 %v60
  %v211 = vpop.f32.mrf.mxu0
  %v212 = vadd.f32 %v156, %v211
  %213 = vmatmul.f32.gmra.mxu0 %v63
  %v214 = vpop.f32.mrf.mxu0
  %v215 = vadd.f32 %v159, %v214
  %216 = vmatmul.f32.gmra.mxu0 %v66
  %v217 = vpop.f32.mrf.mxu0
  %v218 = vadd.f32 %v162, %v217
  %219 = vmatmul.f32.gmra.mxu0 %v69
  %v220 = vpop.f32.mrf.mxu0
  %v221 = vadd.f32 %v165, %v220
  %222 = vmatmul.f32.gmra.mxu0 %v72
  %v223 = vpop.f32.mrf.mxu0
  %v224 = vadd.f32 %v168, %v223
  %225 = vmatmul.f32.gmra.mxu0 %v75
  %v226 = vpop.f32.mrf.mxu0
  %v227 = vadd.f32 %v171, %v226
  %228 = vmatmul.f32.gmra.mxu0 %v78
  %v229 = vpop.f32.mrf.mxu0
  %v230 = vadd.f32 %v174, %v229
  %231 = vmatmul.f32.gmra.mxu0 %v81
  %v232 = vpop.f32.mrf.mxu0
  %v233 = vadd.f32 %v177, %v232
  %234 = vmatmul.f32.gmra.mxu0 %v84
  %v235 = vpop.f32.mrf.mxu0
  %v236 = vadd.f32 %v180, %v235
  %237 = vmatmul.f32.gmra.mxu0 %v87
  %v238 = vpop.f32.mrf.mxu0
  %v239 = vadd.f32 %v183, %v238
  %240 = vdwg.mxu0
  %241 = vmatpush.msra.mxu0 0.0
  %242 = vmatpush.msra.mxu0 0.0
  %243 = vmatpush.msra.mxu0 0.0
  %244 = vmatpush.msra.mxu0 0.0
  %245 = vmatpush.msra.mxu0 0.0
  %246 = vmatpush.msra.mxu0 0.0
  %247 = vmatpush.msra.mxu0 0.0
  %248 = vmatpush.msra.mxu0 0.0
  %249 = vmatpush.msra.mxu0 0.0
  %250 = vmatpush.msra.mxu0 0.0
  %251 = vmatpush.msra.mxu0 0.0
  %252 = vmatpush.msra.mxu0 0.0
  %253 = vmatpush.msra.mxu0 %v49
  %254 = vmatpush.msra.mxu0 %v48
  %255 = vmatpush.msra.mxu0 %v47
  %256 = vmatpush.msra.mxu0 %v46
  %257 = vmatmul.f32.gmra.mxu0 %v91
  %v258 = vpop.f32.mrf.mxu0
  %v259 = vadd.f32 %v203, %v258
  %260 = vmatmul.f32.gmra.mxu0 %v94
  %v261 = vpop.f32.mrf.mxu0
  %v262 = vadd.f32 %v206, %v261
  %263 = vmatmul.f32.gmra.mxu0 %v97
  %v264 = vpop.f32.mrf.mxu0
  %v265 = vadd.f32 %v209, %v264
  %266 = vmatmul.f32.gmra.mxu0 %v100
  %v267 = vpop.f32.mrf.mxu0
  %v268 = vadd.f32 %v212, %v267
  %269 = vmatmul.f32.gmra.mxu0 %v103
  %v270 = vpop.f32.mrf.mxu0
  %v271 = vadd.f32 %v215, %v270
  %272 = vmatmul.f32.gmra.mxu0 %v106
  %v273 = vpop.f32.mrf.mxu0
  %v274 = vadd.f32 %v218, %v273
  %275 = vmatmul.f32.gmra.mxu0 %v109
  %v276 = vpop.f32.mrf.mxu0
  %v277 = vadd.f32 %v221, %v276
  %278 = vmatmul.f32.gmra.mxu0 %v112
  %v279 = vpop.f32.mrf.mxu0
  %v280 = vadd.f32 %v224, %v279
  %281 = vmatmul.f32.gmra.mxu0 %v115
  %v282 = vpop.f32.mrf.mxu0
  %v283 = vadd.f32 %v227, %v282
  %284 = vmatmul.f32.gmra.mxu0 %v118
  %v285 = vpop.f32.mrf.mxu0
  %v286 = vadd.f32 %v230, %v285
  %287 = vmatmul.f32.gmra.mxu0 %v121
  %v288 = vpop.f32.mrf.mxu0
  %v289 = vadd.f32 %v233, %v288
  %290 = vmatmul.f32.gmra.mxu0 %v124
  %v291 = vpop.f32.mrf.mxu0
  %v292 = vadd.f32 %v236, %v291
  %293 = vmatmul.f32.gmra.mxu0 %v127
  %v294 = vpop.f32.mrf.mxu0
  %v295 = vadd.f32 %v239, %v294
  %296 = vdwg.mxu0
  %s297 = scalar_lea.vmem %s0, 312
  %v298 = vld [vmem:[%s297] sm:$0xff]
  %v299 = vld [vmem:[%s297 + $0x8] sm:$0xff]
  %v300 = vld [vmem:[%s297 + $0x10] sm:$0xff]
  %v301 = vld [vmem:[%s297 + $0x18] sm:$0xff]
  %v302 = vld [vmem:[%s297 + $0x20] sm:$0xff]
  %v303 = vld [vmem:[%s297 + $0x28] sm:$0xff]
  %v304 = vld [vmem:[%s297 + $0x30] sm:$0xff]
  %v305 = vld [vmem:[%s297 + $0x38] sm:$0xff]
  %v306 = vld [vmem:[%s297 + $0x40] sm:$0xff]
  %v307 = vld [vmem:[%s297 + $0x48] sm:$0xff]
  %v308 = vld [vmem:[%s297 + $0x50] sm:$0xff]
  %v309 = vld [vmem:[%s297 + $0x58] sm:$0xff]
  %v310 = vld [vmem:[%s297 + $0x60] sm:$0xff]
  %v311 = vld [vmem:[%s297 + $0x68] sm:$0xff]
  %v312 = vld [vmem:[%s297 + $0x70] sm:$0xff]
  %v313 = vld [vmem:[%s297 + $0x78] sm:$0xff]
  %v314 = vld [vmem:[%s297 + $0x80] sm:$0xff]
  %v315 = vld [vmem:[%s297 + $0x88] sm:$0xff]
  %v316 = vld [vmem:[%s297 + $0x90] sm:$0xff]
  %v317 = vld [vmem:[%s297 + $0x98] sm:$0xff]
  %v318 = vld [vmem:[%s297 + $0xa0] sm:$0xff]
  %v319 = vld [vmem:[%s297 + $0xa8] sm:$0xff]
  %v320 = vld [vmem:[%s297 + $0xb0] sm:$0xff]
  %v321 = vld [vmem:[%s297 + $0xb8] sm:$0xff]
  %v322 = vld [vmem:[%s297 + $0xc0] sm:$0xff]
  %v323 = vld [vmem:[%s297 + $0xc8] sm:$0xff]
  %v324 = vld [vmem:[%s297 + $0xd0] sm:$0xff]
  %v325 = vld [vmem:[%s297 + $0xd8] sm:$0xff]
  %v326 = vld [vmem:[%s297 + $0xe0] sm:$0xff]
  %v327 = vld [vmem:[%s297 + $0xe8] sm:$0xff]
  %v328 = vld [vmem:[%s297 + $0xf0] sm:$0xff]
  %v329 = vld [vmem:[%s297 + $0xf8] sm:$0xff]
  %v330 = vld [vmem:[%s297 + $0x100] sm:$0xff]
  %v331 = vld [vmem:[%s297 + $0x108] sm:$0xff]
  %v332 = vld [vmem:[%s297 + $0x110] sm:$0xff]
  %v333 = vld [vmem:[%s297 + $0x118] sm:$0xff]
  %v334 = vld [vmem:[%s297 + $0x120] sm:$0x3]
  %v335 = vld [vmem:[%s297 + $0x128] sm:$0x3]
  %v336 = vld [vmem:[%s297 + $0x130] sm:$0x3]
  %v338 = vsel %vm89, %v300, 0
  %v341 = vsel %vm89, %v303, 0
  %v344 = vsel %vm89, %v306, 0
  %v347 = vsel %vm89, %v309, 0
  %v350 = vsel %vm89, %v312, 0
  %v353 = vsel %vm89, %v315, 0
  %v356 = vsel %vm89, %v318, 0
  %v359 = vsel %vm89, %v321, 0
  %v362 = vsel %vm89, %v324, 0
  %v365 = vsel %vm89, %v327, 0
  %v368 = vsel %vm89, %v330, 0
  %v371 = vsel %vm89, %v333, 0
  %v374 = vsel %vm89, %v336, 0
  %376 = vmatpush.msra.mxu0 %v29
  %377 = vmatpush.msra.mxu0 %v28
  %378 = vmatpush.msra.mxu0 %v27
  %379 = vmatpush.msra.mxu0 %v26
  %380 = vmatpush.msra.mxu0 %v25
  %381 = vmatpush.msra.mxu0 %v24
  %382 = vmatpush.msra.mxu0 %v23
  %383 = vmatpush.msra.mxu0 %v22
  %384 = vmatpush.msra.mxu0 %v21
  %385 = vmatpush.msra.mxu0 %v20
  %386 = vmatpush.msra.mxu0 %v19
  %387 = vmatpush.msra.mxu0 %v18
  %388 = vmatpush.msra.mxu0 %v17
  %389 = vmatpush.msra.mxu0 %v16
  %390 = vmatpush.msra.mxu0 %v15
  %391 = vmatpush.msra.mxu0 %v14
  %392 = vmatmul.f32.gmra.mxu0 %v298
  %v393 = vpop.f32.mrf.mxu0
  %v394 = vadd.f32 0.0, %v393
  %395 = vmatmul.f32.gmra.mxu0 %v301
  %v396 = vpop.f32.mrf.mxu0
  %v397 = vadd.f32 0.0, %v396
  %398 = vmatmul.f32.gmra.mxu0 %v304
  %v399 = vpop.f32.mrf.mxu0
  %v400 = vadd.f32 0.0, %v399
  %401 = vmatmul.f32.gmra.mxu0 %v307
  %v402 = vpop.f32.mrf.mxu0
  %v403 = vadd.f32 0.0, %v402
  %404 = vmatmul.f32.gmra.mxu0 %v310
  %v405 = vpop.f32.mrf.mxu0
  %v406 = vadd.f32 0.0, %v405
  %407 = vmatmul.f32.gmra.mxu0 %v313
  %v408 = vpop.f32.mrf.mxu0
  %v409 = vadd.f32 0.0, %v408
  %410 = vmatmul.f32.gmra.mxu0 %v316
  %v411 = vpop.f32.mrf.mxu0
  %v412 = vadd.f32 0.0, %v411
  %413 = vmatmul.f32.gmra.mxu0 %v319
  %v414 = vpop.f32.mrf.mxu0
  %v415 = vadd.f32 0.0, %v414
  %416 = vmatmul.f32.gmra.mxu0 %v322
  %v417 = vpop.f32.mrf.mxu0
  %v418 = vadd.f32 0.0, %v417
  %419 = vmatmul.f32.gmra.mxu0 %v325
  %v420 = vpop.f32.mrf.mxu0
  %v421 = vadd.f32 0.0, %v420
  %422 = vmatmul.f32.gmra.mxu0 %v328
  %v423 = vpop.f32.mrf.mxu0
  %v424 = vadd.f32 0.0, %v423
  %425 = vmatmul.f32.gmra.mxu0 %v331
  %v426 = vpop.f32.mrf.mxu0
  %v427 = vadd.f32 0.0, %v426
  %428 = vmatmul.f32.gmra.mxu0 %v334
  %v429 = vpop.f32.mrf.mxu0
  %v430 = vadd.f32 0.0, %v429
  %431 = vdwg.mxu0
  %432 = vmatpush.msra.mxu0 %v45
  %433 = vmatpush.msra.mxu0 %v44
  %434 = vmatpush.msra.mxu0 %v43
  %435 = vmatpush.msra.mxu0 %v42
  %436 = vmatpush.msra.mxu0 %v41
  %437 = vmatpush.msra.mxu0 %v40
  %438 = vmatpush.msra.mxu0 %v39
  %439 = vmatpush.msra.mxu0 %v38
  %440 = vmatpush.msra.mxu0 %v37
  %441 = vmatpush.msra.mxu0 %v36
  %442 = vmatpush.msra.mxu0 %v35
  %443 = vmatpush.msra.mxu0 %v34
  %444 = vmatpush.msra.mxu0 %v33
  %445 = vmatpush.msra.mxu0 %v32
  %446 = vmatpush.msra.mxu0 %v31
  %447 = vmatpush.msra.mxu0 %v30
  %448 = vmatmul.f32.gmra.mxu0 %v299
  %v449 = vpop.f32.mrf.mxu0
  %v450 = vadd.f32 %v394, %v449
  %451 = vmatmul.f32.gmra.mxu0 %v302
  %v452 = vpop.f32.mrf.mxu0
  %v453 = vadd.f32 %v397, %v452
  %454 = vmatmul.f32.gmra.mxu0 %v305
  %v455 = vpop.f32.mrf.mxu0
  %v456 = vadd.f32 %v400, %v455
  %457 = vmatmul.f32.gmra.mxu0 %v308
  %v458 = vpop.f32.mrf.mxu0
  %v459 = vadd.f32 %v403, %v458
  %460 = vmatmul.f32.gmra.mxu0 %v311
  %v461 = vpop.f32.mrf.mxu0
  %v462 = vadd.f32 %v406, %v461
  %463 = vmatmul.f32.gmra.mxu0 %v314
  %v464 = vpop.f32.mrf.mxu0
  %v465 = vadd.f32 %v409, %v464
  %466 = vmatmul.f32.gmra.mxu0 %v317
  %v467 = vpop.f32.mrf.mxu0
  %v468 = vadd.f32 %v412, %v467
  %469 = vmatmul.f32.gmra.mxu0 %v320
  %v470 = vpop.f32.mrf.mxu0
  %v471 = vadd.f32 %v415, %v470
  %472 = vmatmul.f32.gmra.mxu0 %v323
  %v473 = vpop.f32.mrf.mxu0
  %v474 = vadd.f32 %v418, %v473
  %475 = vmatmul.f32.gmra.mxu0 %v326
  %v476 = vpop.f32.mrf.mxu0
  %v477 = vadd.f32 %v421, %v476
  %478 = vmatmul.f32.gmra.mxu0 %v329
  %v479 = vpop.f32.mrf.mxu0
  %v480 = vadd.f32 %v424, %v479
  %481 = vmatmul.f32.gmra.mxu0 %v332
  %v482 = vpop.f32.mrf.mxu0
  %v483 = vadd.f32 %v427, %v482
  %484 = vmatmul.f32.gmra.mxu0 %v335
  %v485 = vpop.f32.mrf.mxu0
  %v486 = vadd.f32 %v430, %v485
  %487 = vdwg.mxu0
  %488 = vmatpush.msra.mxu0 0.0
  %489 = vmatpush.msra.mxu0 0.0
  %490 = vmatpush.msra.mxu0 0.0
  %491 = vmatpush.msra.mxu0 0.0
  %492 = vmatpush.msra.mxu0 0.0
  %493 = vmatpush.msra.mxu0 0.0
  %494 = vmatpush.msra.mxu0 0.0
  %495 = vmatpush.msra.mxu0 0.0
  %496 = vmatpush.msra.mxu0 0.0
  %497 = vmatpush.msra.mxu0 0.0
  %498 = vmatpush.msra.mxu0 0.0
  %499 = vmatpush.msra.mxu0 0.0
  %500 = vmatpush.msra.mxu0 %v49
  %501 = vmatpush.msra.mxu0 %v48
  %502 = vmatpush.msra.mxu0 %v47
  %503 = vmatpush.msra.mxu0 %v46
  %504 = vmatmul.f32.gmra.mxu0 %v338
  %v505 = vpop.f32.mrf.mxu0
  %v506 = vadd.f32 %v450, %v505
  %507 = vmatmul.f32.gmra.mxu0 %v341
  %v508 = vpop.f32.mrf.mxu0
  %v509 = vadd.f32 %v453, %v508
  %510 = vmatmul.f32.gmra.mxu0 %v344
  %v511 = vpop.f32.mrf.mxu0
  %v512 = vadd.f32 %v456, %v511
  %513 = vmatmul.f32.gmra.mxu0 %v347
  %v514 = vpop.f32.mrf.mxu0
  %v515 = vadd.f32 %v459, %v514
  %516 = vmatmul.f32.gmra.mxu0 %v350
  %v517 = vpop.f32.mrf.mxu0
  %v518 = vadd.f32 %v462, %v517
  %519 = vmatmul.f32.gmra.mxu0 %v353
  %v520 = vpop.f32.mrf.mxu0
  %v521 = vadd.f32 %v465, %v520
  %522 = vmatmul.f32.gmra.mxu0 %v356
  %v523 = vpop.f32.mrf.mxu0
  %v524 = vadd.f32 %v468, %v523
  %525 = vmatmul.f32.gmra.mxu0 %v359
  %v526 = vpop.f32.mrf.mxu0
  %v527 = vadd.f32 %v471, %v526
  %528 = vmatmul.f32.gmra.mxu0 %v362
  %v529 = vpop.f32.mrf.mxu0
  %v530 = vadd.f32 %v474, %v529
  %531 = vmatmul.f32.gmra.mxu0 %v365
  %v532 = vpop.f32.mrf.mxu0
  %v533 = vadd.f32 %v477, %v532
  %534 = vmatmul.f32.gmra.mxu0 %v368
  %v535 = vpop.f32.mrf.mxu0
  %v536 = vadd.f32 %v480, %v535
  %537 = vmatmul.f32.gmra.mxu0 %v371
  %v538 = vpop.f32.mrf.mxu0
  %v539 = vadd.f32 %v483, %v538
  %540 = vmatmul.f32.gmra.mxu0 %v374
  %v541 = vpop.f32.mrf.mxu0
  %v542 = vadd.f32 %v486, %v541
  %543 = vdwg.mxu0
  %v544 = vmax.f32 %v259, %v506
  %v545 = vmax.f32 %v262, %v509
  %v546 = vmax.f32 %v265, %v512
  %v547 = vmax.f32 %v268, %v515
  %v548 = vmax.f32 %v271, %v518
  %v549 = vmax.f32 %v274, %v521
  %v550 = vmax.f32 %v277, %v524
  %v551 = vmax.f32 %v280, %v527
  %v552 = vmax.f32 %v283, %v530
  %v553 = vmax.f32 %v286, %v533
  %v554 = vmax.f32 %v289, %v536
  %v555 = vmax.f32 %v292, %v539
  %v556 = vmax.f32 %v295, %v542
  %s557 = scalar_lea.vmem %s0, 624
  %v558 = vld [vmem:[%s557] sm:$0xff]
  %v559 = vld [vmem:[%s557 + $0x8] sm:$0xff]
  %v560 = vld [vmem:[%s557 + $0x10] sm:$0xff]
  %v561 = vld [vmem:[%s557 + $0x18] sm:$0xff]
  %v562 = vld [vmem:[%s557 + $0x20] sm:$0xff]
  %v563 = vld [vmem:[%s557 + $0x28] sm:$0xff]
  %v564 = vld [vmem:[%s557 + $0x30] sm:$0xff]
  %v565 = vld [vmem:[%s557 + $0x38] sm:$0xff]
  %v566 = vld [vmem:[%s557 + $0x40] sm:$0xff]
  %v567 = vld [vmem:[%s557 + $0x48] sm:$0xff]
  %v568 = vld [vmem:[%s557 + $0x50] sm:$0xff]
  %v569 = vld [vmem:[%s557 + $0x58] sm:$0xff]
  %v570 = vld [vmem:[%s557 + $0x60] sm:$0xff]
  %v571 = vld [vmem:[%s557 + $0x68] sm:$0xff]
  %v572 = vld [vmem:[%s557 + $0x70] sm:$0xff]
  %v573 = vld [vmem:[%s557 + $0x78] sm:$0xff]
  %v574 = vld [vmem:[%s557 + $0x80] sm:$0xff]
  %v575 = vld [vmem:[%s557 + $0x88] sm:$0xff]
  %v576 = vld [vmem:[%s557 + $0x90] sm:$0xff]
  %v577 = vld [vmem:[%s557 + $0x98] sm:$0xff]
  %v578 = vld [vmem:[%s557 + $0xa0] sm:$0xff]
  %v579 = vld [vmem:[%s557 + $0xa8] sm:$0xff]
  %v580 = vld [vmem:[%s557 + $0xb0] sm:$0xff]
  %v581 = vld [vmem:[%s557 + $0xb8] sm:$0xff]
  %v582 = vld [vmem:[%s557 + $0xc0] sm:$0xff]
  %v583 = vld [vmem:[%s557 + $0xc8] sm:$0xff]
  %v584 = vld [vmem:[%s557 + $0xd0] sm:$0xff]
  %v585 = vld [vmem:[%s557 + $0xd8] sm:$0xff]
  %v586 = vld [vmem:[%s557 + $0xe0] sm:$0xff]
  %v587 = vld [vmem:[%s557 + $0xe8] sm:$0xff]
  %v588 = vld [vmem:[%s557 + $0xf0] sm:$0xff]
  %v589 = vld [vmem:[%s557 + $0xf8] sm:$0xff]
  %v590 = vld [vmem:[%s557 + $0x100] sm:$0xff]
  %v591 = vld [vmem:[%s557 + $0x108] sm:$0xff]
  %v592 = vld [vmem:[%s557 + $0x110] sm:$0xff]
  %v593 = vld [vmem:[%s557 + $0x118] sm:$0xff]
  %v594 = vld [vmem:[%s557 + $0x120] sm:$0x3]
  %v595 = vld [vmem:[%s557 + $0x128] sm:$0x3]
  %v596 = vld [vmem:[%s557 + $0x130] sm:$0x3]
  %v598 = vsel %vm89, %v560, 0
  %v601 = vsel %vm89, %v563, 0
  %v604 = vsel %vm89, %v566, 0
  %v607 = vsel %vm89, %v569, 0
  %v610 = vsel %vm89, %v572, 0
  %v613 = vsel %vm89, %v575, 0
  %v616 = vsel %vm89, %v578, 0
  %v619 = vsel %vm89, %v581, 0
  %v622 = vsel %vm89, %v584, 0
  %v625 = vsel %vm89, %v587, 0
  %v628 = vsel %vm89, %v590, 0
  %v631 = vsel %vm89, %v593, 0
  %v634 = vsel %vm89, %v596, 0
  %636 = vmatpush.msra.mxu0 %v29
  %637 = vmatpush.msra.mxu0 %v28
  %638 = vmatpush.msra.mxu0 %v27
  %639 = vmatpush.msra.mxu0 %v26
  %640 = vmatpush.msra.mxu0 %v25
  %641 = vmatpush.msra.mxu0 %v24
  %642 = vmatpush.msra.mxu0 %v23
  %643 = vmatpush.msra.mxu0 %v22
  %644 = vmatpush.msra.mxu0 %v21
  %645 = vmatpush.msra.mxu0 %v20
  %646 = vmatpush.msra.mxu0 %v19
  %647 = vmatpush.msra.mxu0 %v18
  %648 = vmatpush.msra.mxu0 %v17
  %649 = vmatpush.msra.mxu0 %v16
  %650 = vmatpush.msra.mxu0 %v15
  %651 = vmatpush.msra.mxu0 %v14
  %652 = vmatmul.f32.gmra.mxu0 %v558
  %v653 = vpop.f32.mrf.mxu0
  %v654 = vadd.f32 0.0, %v653
  %655 = vmatmul.f32.gmra.mxu0 %v561
  %v656 = vpop.f32.mrf.mxu0
  %v657 = vadd.f32 0.0, %v656
  %658 = vmatmul.f32.gmra.mxu0 %v564
  %v659 = vpop.f32.mrf.mxu0
  %v660 = vadd.f32 0.0, %v659
  %661 = vmatmul.f32.gmra.mxu0 %v567
  %v662 = vpop.f32.mrf.mxu0
  %v663 = vadd.f32 0.0, %v662
  %664 = vmatmul.f32.gmra.mxu0 %v570
  %v665 = vpop.f32.mrf.mxu0
  %v666 = vadd.f32 0.0, %v665
  %667 = vmatmul.f32.gmra.mxu0 %v573
  %v668 = vpop.f32.mrf.mxu0
  %v669 = vadd.f32 0.0, %v668
  %670 = vmatmul.f32.gmra.mxu0 %v576
  %v671 = vpop.f32.mrf.mxu0
  %v672 = vadd.f32 0.0, %v671
  %673 = vmatmul.f32.gmra.mxu0 %v579
  %v674 = vpop.f32.mrf.mxu0
  %v675 = vadd.f32 0.0, %v674
  %676 = vmatmul.f32.gmra.mxu0 %v582
  %v677 = vpop.f32.mrf.mxu0
  %v678 = vadd.f32 0.0, %v677
  %679 = vmatmul.f32.gmra.mxu0 %v585
  %v680 = vpop.f32.mrf.mxu0
  %v681 = vadd.f32 0.0, %v680
  %682 = vmatmul.f32.gmra.mxu0 %v588
  %v683 = vpop.f32.mrf.mxu0
  %v684 = vadd.f32 0.0, %v683
  %685 = vmatmul.f32.gmra.mxu0 %v591
  %v686 = vpop.f32.mrf.mxu0
  %v687 = vadd.f32 0.0, %v686
  %688 = vmatmul.f32.gmra.mxu0 %v594
  %v689 = vpop.f32.mrf.mxu0
  %v690 = vadd.f32 0.0, %v689
  %691 = vdwg.mxu0
  %692 = vmatpush.msra.mxu0 %v45
  %693 = vmatpush.msra.mxu0 %v44
  %694 = vmatpush.msra.mxu0 %v43
  %695 = vmatpush.msra.mxu0 %v42
  %696 = vmatpush.msra.mxu0 %v41
  %697 = vmatpush.msra.mxu0 %v40
  %698 = vmatpush.msra.mxu0 %v39
  %699 = vmatpush.msra.mxu0 %v38
  %700 = vmatpush.msra.mxu0 %v37
  %701 = vmatpush.msra.mxu0 %v36
  %702 = vmatpush.msra.mxu0 %v35
  %703 = vmatpush.msra.mxu0 %v34
  %704 = vmatpush.msra.mxu0 %v33
  %705 = vmatpush.msra.mxu0 %v32
  %706 = vmatpush.msra.mxu0 %v31
  %707 = vmatpush.msra.mxu0 %v30
  %708 = vmatmul.f32.gmra.mxu0 %v559
  %v709 = vpop.f32.mrf.mxu0
  %v710 = vadd.f32 %v654, %v709
  %711 = vmatmul.f32.gmra.mxu0 %v562
  %v712 = vpop.f32.mrf.mxu0
  %v713 = vadd.f32 %v657, %v712
  %714 = vmatmul.f32.gmra.mxu0 %v565
  %v715 = vpop.f32.mrf.mxu0
  %v716 = vadd.f32 %v660, %v715
  %717 = vmatmul.f32.gmra.mxu0 %v568
  %v718 = vpop.f32.mrf.mxu0
  %v719 = vadd.f32 %v663, %v718
  %720 = vmatmul.f32.gmra.mxu0 %v571
  %v721 = vpop.f32.mrf.mxu0
  %v722 = vadd.f32 %v666, %v721
  %723 = vmatmul.f32.gmra.mxu0 %v574
  %v724 = vpop.f32.mrf.mxu0
  %v725 = vadd.f32 %v669, %v724
  %726 = vmatmul.f32.gmra.mxu0 %v577
  %v727 = vpop.f32.mrf.mxu0
  %v728 = vadd.f32 %v672, %v727
  %729 = vmatmul.f32.gmra.mxu0 %v580
  %v730 = vpop.f32.mrf.mxu0
  %v731 = vadd.f32 %v675, %v730
  %732 = vmatmul.f32.gmra.mxu0 %v583
  %v733 = vpop.f32.mrf.mxu0
  %v734 = vadd.f32 %v678, %v733
  %735 = vmatmul.f32.gmra.mxu0 %v586
  %v736 = vpop.f32.mrf.mxu0
  %v737 = vadd.f32 %v681, %v736
  %738 = vmatmul.f32.gmra.mxu0 %v589
  %v739 = vpop.f32.mrf.mxu0
  %v740 = vadd.f32 %v684, %v739
  %741 = vmatmul.f32.gmra.mxu0 %v592
  %v742 = vpop.f32.mrf.mxu0
  %v743 = vadd.f32 %v687, %v742
  %744 = vmatmul.f32.gmra.mxu0 %v595
  %v745 = vpop.f32.mrf.mxu0
  %v746 = vadd.f32 %v690, %v745
  %747 = vdwg.mxu0
  %748 = vmatpush.msra.mxu0 0.0
  %749 = vmatpush.msra.mxu0 0.0
  %750 = vmatpush.msra.mxu0 0.0
  %751 = vmatpush.msra.mxu0 0.0
  %752 = vmatpush.msra.mxu0 0.0
  %753 = vmatpush.msra.mxu0 0.0
  %754 = vmatpush.msra.mxu0 0.0
  %755 = vmatpush.msra.mxu0 0.0
  %756 = vmatpush.msra.mxu0 0.0
  %757 = vmatpush.msra.mxu0 0.0
  %758 = vmatpush.msra.mxu0 0.0
  %759 = vmatpush.msra.mxu0 0.0
  %760 = vmatpush.msra.mxu0 %v49
  %761 = vmatpush.msra.mxu0 %v48
  %762 = vmatpush.msra.mxu0 %v47
  %763 = vmatpush.msra.mxu0 %v46
  %764 = vmatmul.f32.gmra.mxu0 %v598
  %v765 = vpop.f32.mrf.mxu0
  %v766 = vadd.f32 %v710, %v765
  %767 = vmatmul.f32.gmra.mxu0 %v601
  %v768 = vpop.f32.mrf.mxu0
  %v769 = vadd.f32 %v713, %v768
  %770 = vmatmul.f32.gmra.mxu0 %v604
  %v771 = vpop.f32.mrf.mxu0
  %v772 = vadd.f32 %v716, %v771
  %773 = vmatmul.f32.gmra.mxu0 %v607
  %v774 = vpop.f32.mrf.mxu0
  %v775 = vadd.f32 %v719, %v774
  %776 = vmatmul.f32.gmra.mxu0 %v610
  %v777 = vpop.f32.mrf.mxu0
  %v778 = vadd.f32 %v722, %v777
  %779 = vmatmul.f32.gmra.mxu0 %v613
  %v780 = vpop.f32.mrf.mxu0
  %v781 = vadd.f32 %v725, %v780
  %782 = vmatmul.f32.gmra.mxu0 %v616
  %v783 = vpop.f32.mrf.mxu0
  %v784 = vadd.f32 %v728, %v783
  %785 = vmatmul.f32.gmra.mxu0 %v619
  %v786 = vpop.f32.mrf.mxu0
  %v787 = vadd.f32 %v731, %v786
  %788 = vmatmul.f32.gmra.mxu0 %v622
  %v789 = vpop.f32.mrf.mxu0
  %v790 = vadd.f32 %v734, %v789
  %791 = vmatmul.f32.gmra.mxu0 %v625
  %v792 = vpop.f32.mrf.mxu0
  %v793 = vadd.f32 %v737, %v792
  %794 = vmatmul.f32.gmra.mxu0 %v628
  %v795 = vpop.f32.mrf.mxu0
  %v796 = vadd.f32 %v740, %v795
  %797 = vmatmul.f32.gmra.mxu0 %v631
  %v798 = vpop.f32.mrf.mxu0
  %v799 = vadd.f32 %v743, %v798
  %800 = vmatmul.f32.gmra.mxu0 %v634
  %v801 = vpop.f32.mrf.mxu0
  %v802 = vadd.f32 %v746, %v801
  %803 = vdwg.mxu0
  %v804 = vmax.f32 %v544, %v766
  %v805 = vmax.f32 %v545, %v769
  %v806 = vmax.f32 %v546, %v772
  %v807 = vmax.f32 %v547, %v775
  %v808 = vmax.f32 %v548, %v778
  %v809 = vmax.f32 %v549, %v781
  %v810 = vmax.f32 %v550, %v784
  %v811 = vmax.f32 %v551, %v787
  %v812 = vmax.f32 %v552, %v790
  %v813 = vmax.f32 %v553, %v793
  %v814 = vmax.f32 %v554, %v796
  %v815 = vmax.f32 %v555, %v799
  %v816 = vmax.f32 %v556, %v802
  %s817 = scalar_lea.vmem %s0, 936
  %v818 = vld [vmem:[%s817] sm:$0xff]
  %v819 = vld [vmem:[%s817 + $0x8] sm:$0xff]
  %v820 = vld [vmem:[%s817 + $0x10] sm:$0xff]
  %v821 = vld [vmem:[%s817 + $0x18] sm:$0xff]
  %v822 = vld [vmem:[%s817 + $0x20] sm:$0xff]
  %v823 = vld [vmem:[%s817 + $0x28] sm:$0xff]
  %v824 = vld [vmem:[%s817 + $0x30] sm:$0xff]
  %v825 = vld [vmem:[%s817 + $0x38] sm:$0xff]
  %v826 = vld [vmem:[%s817 + $0x40] sm:$0xff]
  %v827 = vld [vmem:[%s817 + $0x48] sm:$0xff]
  %v828 = vld [vmem:[%s817 + $0x50] sm:$0xff]
  %v829 = vld [vmem:[%s817 + $0x58] sm:$0xff]
  %v830 = vld [vmem:[%s817 + $0x60] sm:$0xff]
  %v831 = vld [vmem:[%s817 + $0x68] sm:$0xff]
  %v832 = vld [vmem:[%s817 + $0x70] sm:$0xff]
  %v833 = vld [vmem:[%s817 + $0x78] sm:$0xff]
  %v834 = vld [vmem:[%s817 + $0x80] sm:$0xff]
  %v835 = vld [vmem:[%s817 + $0x88] sm:$0xff]
  %v836 = vld [vmem:[%s817 + $0x90] sm:$0xff]
  %v837 = vld [vmem:[%s817 + $0x98] sm:$0xff]
  %v838 = vld [vmem:[%s817 + $0xa0] sm:$0xff]
  %v839 = vld [vmem:[%s817 + $0xa8] sm:$0xff]
  %v840 = vld [vmem:[%s817 + $0xb0] sm:$0xff]
  %v841 = vld [vmem:[%s817 + $0xb8] sm:$0xff]
  %v842 = vld [vmem:[%s817 + $0xc0] sm:$0xff]
  %v843 = vld [vmem:[%s817 + $0xc8] sm:$0xff]
  %v844 = vld [vmem:[%s817 + $0xd0] sm:$0xff]
  %v845 = vld [vmem:[%s817 + $0xd8] sm:$0xff]
  %v846 = vld [vmem:[%s817 + $0xe0] sm:$0xff]
  %v847 = vld [vmem:[%s817 + $0xe8] sm:$0xff]
  %v848 = vld [vmem:[%s817 + $0xf0] sm:$0xff]
  %v849 = vld [vmem:[%s817 + $0xf8] sm:$0xff]
  %v850 = vld [vmem:[%s817 + $0x100] sm:$0xff]
  %v851 = vld [vmem:[%s817 + $0x108] sm:$0xff]
  %v852 = vld [vmem:[%s817 + $0x110] sm:$0xff]
  %v853 = vld [vmem:[%s817 + $0x118] sm:$0xff]
  %v854 = vld [vmem:[%s817 + $0x120] sm:$0x3]
  %v855 = vld [vmem:[%s817 + $0x128] sm:$0x3]
  %v856 = vld [vmem:[%s817 + $0x130] sm:$0x3]
  %v858 = vsel %vm89, %v820, 0
  %v861 = vsel %vm89, %v823, 0
  %v864 = vsel %vm89, %v826, 0
  %v867 = vsel %vm89, %v829, 0
  %v870 = vsel %vm89, %v832, 0
  %v873 = vsel %vm89, %v835, 0
  %v876 = vsel %vm89, %v838, 0
  %v879 = vsel %vm89, %v841, 0
  %v882 = vsel %vm89, %v844, 0
  %v885 = vsel %vm89, %v847, 0
  %v888 = vsel %vm89, %v850, 0
  %v891 = vsel %vm89, %v853, 0
  %v894 = vsel %vm89, %v856, 0
  %896 = vmatpush.msra.mxu0 %v29
  %897 = vmatpush.msra.mxu0 %v28
  %898 = vmatpush.msra.mxu0 %v27
  %899 = vmatpush.msra.mxu0 %v26
  %900 = vmatpush.msra.mxu0 %v25
  %901 = vmatpush.msra.mxu0 %v24
  %902 = vmatpush.msra.mxu0 %v23
  %903 = vmatpush.msra.mxu0 %v22
  %904 = vmatpush.msra.mxu0 %v21
  %905 = vmatpush.msra.mxu0 %v20
  %906 = vmatpush.msra.mxu0 %v19
  %907 = vmatpush.msra.mxu0 %v18
  %908 = vmatpush.msra.mxu0 %v17
  %909 = vmatpush.msra.mxu0 %v16
  %910 = vmatpush.msra.mxu0 %v15
  %911 = vmatpush.msra.mxu0 %v14
  %912 = vmatmul.f32.gmra.mxu0 %v818
  %v913 = vpop.f32.mrf.mxu0
  %v914 = vadd.f32 0.0, %v913
  %915 = vmatmul.f32.gmra.mxu0 %v821
  %v916 = vpop.f32.mrf.mxu0
  %v917 = vadd.f32 0.0, %v916
  %918 = vmatmul.f32.gmra.mxu0 %v824
  %v919 = vpop.f32.mrf.mxu0
  %v920 = vadd.f32 0.0, %v919
  %921 = vmatmul.f32.gmra.mxu0 %v827
  %v922 = vpop.f32.mrf.mxu0
  %v923 = vadd.f32 0.0, %v922
  %924 = vmatmul.f32.gmra.mxu0 %v830
  %v925 = vpop.f32.mrf.mxu0
  %v926 = vadd.f32 0.0, %v925
  %927 = vmatmul.f32.gmra.mxu0 %v833
  %v928 = vpop.f32.mrf.mxu0
  %v929 = vadd.f32 0.0, %v928
  %930 = vmatmul.f32.gmra.mxu0 %v836
  %v931 = vpop.f32.mrf.mxu0
  %v932 = vadd.f32 0.0, %v931
  %933 = vmatmul.f32.gmra.mxu0 %v839
  %v934 = vpop.f32.mrf.mxu0
  %v935 = vadd.f32 0.0, %v934
  %936 = vmatmul.f32.gmra.mxu0 %v842
  %v937 = vpop.f32.mrf.mxu0
  %v938 = vadd.f32 0.0, %v937
  %939 = vmatmul.f32.gmra.mxu0 %v845
  %v940 = vpop.f32.mrf.mxu0
  %v941 = vadd.f32 0.0, %v940
  %942 = vmatmul.f32.gmra.mxu0 %v848
  %v943 = vpop.f32.mrf.mxu0
  %v944 = vadd.f32 0.0, %v943
  %945 = vmatmul.f32.gmra.mxu0 %v851
  %v946 = vpop.f32.mrf.mxu0
  %v947 = vadd.f32 0.0, %v946
  %948 = vmatmul.f32.gmra.mxu0 %v854
  %v949 = vpop.f32.mrf.mxu0
  %v950 = vadd.f32 0.0, %v949
  %951 = vdwg.mxu0
  %952 = vmatpush.msra.mxu0 %v45
  %953 = vmatpush.msra.mxu0 %v44
  %954 = vmatpush.msra.mxu0 %v43
  %955 = vmatpush.msra.mxu0 %v42
  %956 = vmatpush.msra.mxu0 %v41
  %957 = vmatpush.msra.mxu0 %v40
  %958 = vmatpush.msra.mxu0 %v39
  %959 = vmatpush.msra.mxu0 %v38
  %960 = vmatpush.msra.mxu0 %v37
  %961 = vmatpush.msra.mxu0 %v36
  %962 = vmatpush.msra.mxu0 %v35
  %963 = vmatpush.msra.mxu0 %v34
  %964 = vmatpush.msra.mxu0 %v33
  %965 = vmatpush.msra.mxu0 %v32
  %966 = vmatpush.msra.mxu0 %v31
  %967 = vmatpush.msra.mxu0 %v30
  %968 = vmatmul.f32.gmra.mxu0 %v819
  %v969 = vpop.f32.mrf.mxu0
  %v970 = vadd.f32 %v914, %v969
  %971 = vmatmul.f32.gmra.mxu0 %v822
  %v972 = vpop.f32.mrf.mxu0
  %v973 = vadd.f32 %v917, %v972
  %974 = vmatmul.f32.gmra.mxu0 %v825
  %v975 = vpop.f32.mrf.mxu0
  %v976 = vadd.f32 %v920, %v975
  %977 = vmatmul.f32.gmra.mxu0 %v828
  %v978 = vpop.f32.mrf.mxu0
  %v979 = vadd.f32 %v923, %v978
  %980 = vmatmul.f32.gmra.mxu0 %v831
  %v981 = vpop.f32.mrf.mxu0
  %v982 = vadd.f32 %v926, %v981
  %983 = vmatmul.f32.gmra.mxu0 %v834
  %v984 = vpop.f32.mrf.mxu0
  %v985 = vadd.f32 %v929, %v984
  %986 = vmatmul.f32.gmra.mxu0 %v837
  %v987 = vpop.f32.mrf.mxu0
  %v988 = vadd.f32 %v932, %v987
  %989 = vmatmul.f32.gmra.mxu0 %v840
  %v990 = vpop.f32.mrf.mxu0
  %v991 = vadd.f32 %v935, %v990
  %992 = vmatmul.f32.gmra.mxu0 %v843
  %v993 = vpop.f32.mrf.mxu0
  %v994 = vadd.f32 %v938, %v993
  %995 = vmatmul.f32.gmra.mxu0 %v846
  %v996 = vpop.f32.mrf.mxu0
  %v997 = vadd.f32 %v941, %v996
  %998 = vmatmul.f32.gmra.mxu0 %v849
  %v999 = vpop.f32.mrf.mxu0
  %v1000 = vadd.f32 %v944, %v999
  %1001 = vmatmul.f32.gmra.mxu0 %v852
  %v1002 = vpop.f32.mrf.mxu0
  %v1003 = vadd.f32 %v947, %v1002
  %1004 = vmatmul.f32.gmra.mxu0 %v855
  %v1005 = vpop.f32.mrf.mxu0
  %v1006 = vadd.f32 %v950, %v1005
  %1007 = vdwg.mxu0
  %1008 = vmatpush.msra.mxu0 0.0
  %1009 = vmatpush.msra.mxu0 0.0
  %1010 = vmatpush.msra.mxu0 0.0
  %1011 = vmatpush.msra.mxu0 0.0
  %1012 = vmatpush.msra.mxu0 0.0
  %1013 = vmatpush.msra.mxu0 0.0
  %1014 = vmatpush.msra.mxu0 0.0
  %1015 = vmatpush.msra.mxu0 0.0
  %1016 = vmatpush.msra.mxu0 0.0
  %1017 = vmatpush.msra.mxu0 0.0
  %1018 = vmatpush.msra.mxu0 0.0
  %1019 = vmatpush.msra.mxu0 0.0
  %1020 = vmatpush.msra.mxu0 %v49
  %1021 = vmatpush.msra.mxu0 %v48
  %1022 = vmatpush.msra.mxu0 %v47
  %1023 = vmatpush.msra.mxu0 %v46
  %1024 = vmatmul.f32.gmra.mxu0 %v858
  %v1025 = vpop.f32.mrf.mxu0
  %v1026 = vadd.f32 %v970, %v1025
  %1027 = vmatmul.f32.gmra.mxu0 %v861
  %v1028 = vpop.f32.mrf.mxu0
  %v1029 = vadd.f32 %v973, %v1028
  %1030 = vmatmul.f32.gmra.mxu0 %v864
  %v1031 = vpop.f32.mrf.mxu0
  %v1032 = vadd.f32 %v976, %v1031
  %1033 = vmatmul.f32.gmra.mxu0 %v867
  %v1034 = vpop.f32.mrf.mxu0
  %v1035 = vadd.f32 %v979, %v1034
  %1036 = vmatmul.f32.gmra.mxu0 %v870
  %v1037 = vpop.f32.mrf.mxu0
  %v1038 = vadd.f32 %v982, %v1037
  %1039 = vmatmul.f32.gmra.mxu0 %v873
  %v1040 = vpop.f32.mrf.mxu0
  %v1041 = vadd.f32 %v985, %v1040
  %1042 = vmatmul.f32.gmra.mxu0 %v876
  %v1043 = vpop.f32.mrf.mxu0
  %v1044 = vadd.f32 %v988, %v1043
  %1045 = vmatmul.f32.gmra.mxu0 %v879
  %v1046 = vpop.f32.mrf.mxu0
  %v1047 = vadd.f32 %v991, %v1046
  %1048 = vmatmul.f32.gmra.mxu0 %v882
  %v1049 = vpop.f32.mrf.mxu0
  %v1050 = vadd.f32 %v994, %v1049
  %1051 = vmatmul.f32.gmra.mxu0 %v885
  %v1052 = vpop.f32.mrf.mxu0
  %v1053 = vadd.f32 %v997, %v1052
  %1054 = vmatmul.f32.gmra.mxu0 %v888
  %v1055 = vpop.f32.mrf.mxu0
  %v1056 = vadd.f32 %v1000, %v1055
  %1057 = vmatmul.f32.gmra.mxu0 %v891
  %v1058 = vpop.f32.mrf.mxu0
  %v1059 = vadd.f32 %v1003, %v1058
  %1060 = vmatmul.f32.gmra.mxu0 %v894
  %v1061 = vpop.f32.mrf.mxu0
  %v1062 = vadd.f32 %v1006, %v1061
  %1063 = vdwg.mxu0
  %v1064 = vmax.f32 %v804, %v1026
  %v1065 = vmax.f32 %v805, %v1029
  %v1066 = vmax.f32 %v806, %v1032
  %v1067 = vmax.f32 %v807, %v1035
  %v1068 = vmax.f32 %v808, %v1038
  %v1069 = vmax.f32 %v809, %v1041
  %v1070 = vmax.f32 %v810, %v1044
  %v1071 = vmax.f32 %v811, %v1047
  %v1072 = vmax.f32 %v812, %v1050
  %v1073 = vmax.f32 %v813, %v1053
  %v1074 = vmax.f32 %v814, %v1056
  %v1075 = vmax.f32 %v815, %v1059
  %v1076 = vmax.f32 %v816, %v1062
  %v1077 = vld [vmem:[%s2] sm:$0x1]
  %v1079 = vperm.slane %v1077, 0
  %v1081 = vadd.f32 %v1064, %v1079
  %v1082 = vadd.f32 %v1065, %v1079
  %v1083 = vadd.f32 %v1066, %v1079
  %v1084 = vadd.f32 %v1067, %v1079
  %v1085 = vadd.f32 %v1068, %v1079
  %v1086 = vadd.f32 %v1069, %v1079
  %v1087 = vadd.f32 %v1070, %v1079
  %v1088 = vadd.f32 %v1071, %v1079
  %v1089 = vadd.f32 %v1072, %v1079
  %v1090 = vadd.f32 %v1073, %v1079
  %v1091 = vadd.f32 %v1074, %v1079
  %v1092 = vadd.f32 %v1075, %v1079
  %v1093 = vadd.f32 %v1076, %v1079
  %v1094 = vmax.f32 %v1081, 0.0
  %v1095 = vmax.f32 %v1082, 0.0
  %v1096 = vmax.f32 %v1083, 0.0
  %v1097 = vmax.f32 %v1084, 0.0
  %v1098 = vmax.f32 %v1085, 0.0
  %v1099 = vmax.f32 %v1086, 0.0
  %v1100 = vmax.f32 %v1087, 0.0
  %v1101 = vmax.f32 %v1088, 0.0
  %v1102 = vmax.f32 %v1089, 0.0
  %v1103 = vmax.f32 %v1090, 0.0
  %v1104 = vmax.f32 %v1091, 0.0
  %v1105 = vmax.f32 %v1092, 0.0
  %v1106 = vmax.f32 %v1093, 0.0
  %vm1107 = vcmask 523264
  %1108 = vst.msk [vmem:[%s3] sm:$0xff] %vm1107, %v1094
  %1109 = vst.msk [vmem:[%s3 + $0x8] sm:$0xff] %vm1107, %v1095
  %1110 = vst.msk [vmem:[%s3 + $0x10] sm:$0xff] %vm1107, %v1096
  %1111 = vst.msk [vmem:[%s3 + $0x18] sm:$0xff] %vm1107, %v1097
  %1112 = vst.msk [vmem:[%s3 + $0x20] sm:$0xff] %vm1107, %v1098
  %1113 = vst.msk [vmem:[%s3 + $0x28] sm:$0xff] %vm1107, %v1099
  %1114 = vst.msk [vmem:[%s3 + $0x30] sm:$0xff] %vm1107, %v1100
  %1115 = vst.msk [vmem:[%s3 + $0x38] sm:$0xff] %vm1107, %v1101
  %1116 = vst.msk [vmem:[%s3 + $0x40] sm:$0xff] %vm1107, %v1102
  %1117 = vst.msk [vmem:[%s3 + $0x48] sm:$0xff] %vm1107, %v1103
  %1118 = vst.msk [vmem:[%s3 + $0x50] sm:$0xff] %vm1107, %v1104
  %1119 = vst.msk [vmem:[%s3 + $0x58] sm:$0xff] %vm1107, %v1105
  %vm1120 = vcmask 517120
  %1121 = vst.msk [vmem:[%s3 + $0x60] sm:$0x3] %vm1120, %v1106
  // Predicated region
  $region14: #{cnn_forward.4} parent=0 // pred_check
    _
  $region15: #{cnn_forward.4} parent=0 // pred_check_branch
    %1123 = sbr.rel (0) target = $region17
  $region16: #{cnn_forward.4} parent=0 // pred_region
    _
  $region17: #{cnn_forward.4} parent=0 // pred_fallthru
    _
  // Predicated region
  $region18: #{cnn_forward.4} parent=0 // pred_check
    _
  $region19: #{cnn_forward.4} parent=0 // pred_check_branch
    %1125 = sbr.rel (0) target = $region21
  $region20: #{cnn_forward.4} parent=0 // pred_region
    _
  $region21: #{cnn_forward.4} parent=0 // pred_fallthru
    _

// kernel: cnn_forward.5
$region0: #{cnn_forward.5}
  #allocation0 [shape = 'u32[]', space=smem, size = 0x4, offset = 0x4, fixed_abs, tag = 'smem constant byte address 0x4 - core index']
  #allocation1 [shape = 'u32[72,128]{1,0:T(1,128)}', space=vmem, size = 0x9000, scoped, tag = 'internal scratch']
  %s0 = inlined_call_operand.vmem [shape: f32[2,3136], index: 0, kind: input, shape index: {}]
  %s1 = inlined_call_operand.vmem [shape: f32[3136,128], index: 1, kind: input, shape index: {}]
  %s2 = inlined_call_operand.vmem [shape: f32[1,128], index: 2, kind: input, shape index: {}]
  %s3 = inlined_call_operand.vmem [shape: f32[128,128], index: 3, kind: input, shape index: {}]
  %s4 = inlined_call_operand.vmem [shape: f32[1,128], index: 4, kind: input, shape index: {}]
  %s5 = inlined_call_operand.hbm [shape: f32[2,128], index: 5, kind: output, shape index: {0}]
  %s6 = inlined_call_operand.hbm [shape: f32[2,128], index: 6, kind: output, shape index: {1}]
  %7 = xla_tuple %s5, %s6
  %s8 = sld [smem:[#allocation0]]
  $region38: #{cnn_forward.5} parent=0
    _
  %s10 = ssub.s32 1, %s8
  %s11 = scalar_select 0, %s10, %s8
  $region1: #{cnn_forward.5} parent=0
    #allocation2 [shape = 'u8[1024]{0}', space=vmem, size = 0x400, scoped, tag = 'output window, operand 0, single buffered']
    #allocation3 [shape = 's32[1]{0}', space=sflag, size = 0x4, scoped, tag = 'scoped memory for cnn_forward.5']
    #allocation4 [shape = 'u8[1024]{0}', space=vmem, size = 0x400, scoped, tag = 'output window, operand 1, single buffered']
    #allocation5 [shape = 's32[1]{0}', space=sflag, size = 0x4, scoped, tag = 'scoped memory for cnn_forward.5']
    %12 = vsyncpa [#allocation3], 0
    %13 = vsyncpa [#allocation5], 0
    // Predicated region
    $region2: #{cnn_forward.5} parent=1 // pred_check
      _
    $region3: #{cnn_forward.5} parent=1 // pred_check_branch
      %15 = sbr.rel (0) target = $region5
    $region4: #{cnn_forward.5} parent=1 // pred_region
      _
    $region5: #{cnn_forward.5} parent=1 // pred_fallthru
      _
    // Predicated region
    $region6: #{cnn_forward.5} parent=1 // pred_check
      _
    $region7: #{cnn_forward.5} parent=1 // pred_check_branch
      %17 = sbr.rel (0) target = $region9
    $region8: #{cnn_forward.5} parent=1 // pred_region
      _
    $region9: #{cnn_forward.5} parent=1 // pred_fallthru
      _
    // Predicated region
    $region10: #{cnn_forward.5} parent=1 // pred_check
      _
    $region11: #{cnn_forward.5} parent=1 // pred_check_branch
      %19 = sbr.rel (0) target = $region13
    $region12: #{cnn_forward.5} parent=1 // pred_region
      _
    $region13: #{cnn_forward.5} parent=1 // pred_fallthru
      _
    // Predicated region
    $region14: #{cnn_forward.5} parent=1 // pred_check
      _
    $region15: #{cnn_forward.5} parent=1 // pred_check_branch
      %21 = sbr.rel (0) target = $region17
    $region16: #{cnn_forward.5} parent=1 // pred_region
      _
    $region17: #{cnn_forward.5} parent=1 // pred_fallthru
      _
    // Predicated region
    $region18: #{cnn_forward.5} parent=1 // pred_check
      _
    $region19: #{cnn_forward.5} parent=1 // pred_check_branch
      %23 = sbr.rel (0) target = $region21
    $region20: #{cnn_forward.5} parent=1 // pred_region
      _
    $region21: #{cnn_forward.5} parent=1 // pred_fallthru
      _
    %v24 = vld [vmem:[%s0] sm:$0xff]
    %v25 = vld [vmem:[%s0 + $0x8] sm:$0xff]
    %v26 = vld [vmem:[%s0 + $0x10] sm:$0xff]
    %v27 = vld [vmem:[%s0 + $0x18] sm:$0xff]
    %v28 = vld [vmem:[%s0 + $0x20] sm:$0xff]
    %v29 = vld [vmem:[%s0 + $0x28] sm:$0xff]
    %v30 = vld [vmem:[%s0 + $0x30] sm:$0x3]
    %v31 = vld [vmem:[%s1] sm:$0xff]
    %v32 = vld [vmem:[%s1 + $0x8] sm:$0xff]
    %v33 = vld [vmem:[%s1 + $0x10] sm:$0xff]
    %v34 = vld [vmem:[%s1 + $0x18] sm:$0xff]
    %v35 = vld [vmem:[%s1 + $0x20] sm:$0xff]
    %v36 = vld [vmem:[%s1 + $0x28] sm:$0xff]
    %v37 = vld [vmem:[%s1 + $0x30] sm:$0xff]
    %v38 = vld [vmem:[%s1 + $0x38] sm:$0xff]
    %v39 = vld [vmem:[%s1 + $0x40] sm:$0xff]
    %v40 = vld [vmem:[%s1 + $0x48] sm:$0xff]
    %v41 = vld [vmem:[%s1 + $0x50] sm:$0xff]
    %v42 = vld [vmem:[%s1 + $0x58] sm:$0xff]
    %v43 = vld [vmem:[%s1 + $0x60] sm:$0xff]
    %v44 = vld [vmem:[%s1 + $0x68] sm:$0xff]
    %v45 = vld [vmem:[%s1 + $0x70] sm:$0xff]
    %v46 = vld [vmem:[%s1 + $0x78] sm:$0xff]
    %v47 = vld [vmem:[%s1 + $0x80] sm:$0xff]
    %v48 = vld [vmem:[%s1 + $0x88] sm:$0xff]
    %v49 = vld [vmem:[%s1 + $0x90] sm:$0xff]
    %v50 = vld [vmem:[%s1 + $0x98] sm:$0xff]
    %v51 = vld [vmem:[%s1 + $0xa0] sm:$0xff]
    %v52 = vld [vmem:[%s1 + $0xa8] sm:$0xff]
    %v53 = vld [vmem:[%s1 + $0xb0] sm:$0xff]
    %v54 = vld [vmem:[%s1 + $0xb8] sm:$0xff]
    %v55 = vld [vmem:[%s1 + $0xc0] sm:$0xff]
    %v56 = vld [vmem:[%s1 + $0xc8] sm:$0xff]
    %v57 = vld [vmem:[%s1 + $0xd0] sm:$0xff]
    %v58 = vld [vmem:[%s1 + $0xd8] sm:$0xff]
    %v59 = vld [vmem:[%s1 + $0xe0] sm:$0xff]
    %v60 = vld [vmem:[%s1 + $0xe8] sm:$0xff]
    %v61 = vld [vmem:[%s1 + $0xf0] sm:$0xff]
    %v62 = vld [vmem:[%s1 + $0xf8] sm:$0xff]
    %v63 = vld [vmem:[%s1 + $0x100] sm:$0xff]
    %v64 = vld [vmem:[%s1 + $0x108] sm:$0xff]
    %v65 = vld [vmem:[%s1 + $0x110] sm:$0xff]
    %v66 = vld [vmem:[%s1 + $0x118] sm:$0xff]
    %v67 = vld [vmem:[%s1 + $0x120] sm:$0xff]
    %v68 = vld [vmem:[%s1 + $0x128] sm:$0xff]
    %v69 = vld [vmem:[%s1 + $0x130] sm:$0xff]
    %v70 = vld [vmem:[%s1 + $0x138] sm:$0xff]
    %v71 = vld [vmem:[%s1 + $0x140] sm:$0xff]
    %v72 = vld [vmem:[%s1 + $0x148] sm:$0xff]
    %v73 = vld [vmem:[%s1 + $0x150] sm:$0xff]
    %v74 = vld [vmem:[%s1 + $0x158] sm:$0xff]
    %v75 = vld [vmem:[%s1 + $0x160] sm:$0xff]
    %v76 = vld [vmem:[%s1 + $0x168] sm:$0xff]
    %v77 = vld [vmem:[%s1 + $0x170] sm:$0xff]
    %v78 = vld [vmem:[%s1 + $0x178] sm:$0xff]
    %v79 = vld [vmem:[%s1 + $0x180] sm:$0xff]
    %v80 = vld [vmem:[%s1 + $0x188] sm:$0xff]
    %v81 = vld [vmem:[%s1 + $0x190] sm:$0xff]
    %v82 = vld [vmem:[%s1 + $0x198] sm:$0xff]
    %v83 = vld [vmem:[%s1 + $0x1a0] sm:$0xff]
    %v84 = vld [vmem:[%s1 + $0x1a8] sm:$0xff]
    %v85 = vld [vmem:[%s1 + $0x1b0] sm:$0xff]
    %v86 = vld [vmem:[%s1 + $0x1b8] sm:$0xff]
    %v87 = vld [vmem:[%s1 + $0x1c0] sm:$0xff]
    %v88 = vld [vmem:[%s1 + $0x1c8] sm:$0xff]
    %v89 = vld [vmem:[%s1 + $0x1d0] sm:$0xff]
    %v90 = vld [vmem:[%s1 + $0x1d8] sm:$0xff]
    %v91 = vld [vmem:[%s1 + $0x1e0] sm:$0xff]
    %v92 = vld [vmem:[%s1 + $0x1e8] sm:$0xff]
    %v93 = vld [vmem:[%s1 + $0x1f0] sm:$0xff]
    %v94 = vld [vmem:[%s1 + $0x1f8] sm:$0xff]
    %v95 = vld [vmem:[%s1 + $0x200] sm:$0xff]
    %v96 = vld [vmem:[%s1 + $0x208] sm:$0xff]
    %v97 = vld [vmem:[%s1 + $0x210] sm:$0xff]
    %v98 = vld [vmem:[%s1 + $0x218] sm:$0xff]
    %v99 = vld [vmem:[%s1 + $0x220] sm:$0xff]
    %v100 = vld [vmem:[%s1 + $0x228] sm:$0xff]
    %v101 = vld [vmem:[%s1 + $0x230] sm:$0xff]
    %v102 = vld [vmem:[%s1 + $0x238] sm:$0xff]
    %v103 = vld [vmem:[%s1 + $0x240] sm:$0xff]
    %v104 = vld [vmem:[%s1 + $0x248] sm:$0xff]
    %v105 = vld [vmem:[%s1 + $0x250] sm:$0xff]
    %v106 = vld [vmem:[%s1 + $0x258] sm:$0xff]
    %v107 = vld [vmem:[%s1 + $0x260] sm:$0xff]
    %v108 = vld [vmem:[%s1 + $0x268] sm:$0xff]
    %v109 = vld [vmem:[%s1 + $0x270] sm:$0xff]
    %v110 = vld [vmem:[%s1 + $0x278] sm:$0xff]
    %v111 = vld [vmem:[%s1 + $0x280] sm:$0xff]
    %v112 = vld [vmem:[%s1 + $0x288] sm:$0xff]
    %v113 = vld [vmem:[%s1 + $0x290] sm:$0xff]
    %v114 = vld [vmem:[%s1 + $0x298] sm:$0xff]
    %v115 = vld [vmem:[%s1 + $0x2a0] sm:$0xff]
    %v116 = vld [vmem:[%s1 + $0x2a8] sm:$0xff]
    %v117 = vld [vmem:[%s1 + $0x2b0] sm:$0xff]
    %v118 = vld [vmem:[%s1 + $0x2b8] sm:$0xff]
    %v119 = vld [vmem:[%s1 + $0x2c0] sm:$0xff]
    %v120 = vld [vmem:[%s1 + $0x2c8] sm:$0xff]
    %v121 = vld [vmem:[%s1 + $0x2d0] sm:$0xff]
    %v122 = vld [vmem:[%s1 + $0x2d8] sm:$0xff]
    %v123 = vld [vmem:[%s1 + $0x2e0] sm:$0xff]
    %v124 = vld [vmem:[%s1 + $0x2e8] sm:$0xff]
    %v125 = vld [vmem:[%s1 + $0x2f0] sm:$0xff]
    %v126 = vld [vmem:[%s1 + $0x2f8] sm:$0xff]
    %v127 = vld [vmem:[%s1 + $0x300] sm:$0xff]
    %v128 = vld [vmem:[%s1 + $0x308] sm:$0xff]
    %v129 = vld [vmem:[%s1 + $0x310] sm:$0xff]
    %v130 = vld [vmem:[%s1 + $0x318] sm:$0xff]
    %v131 = vld [vmem:[%s1 + $0x320] sm:$0xff]
    %v132 = vld [vmem:[%s1 + $0x328] sm:$0xff]
    %v133 = vld [vmem:[%s1 + $0x330] sm:$0xff]
    %v134 = vld [vmem:[%s1 + $0x338] sm:$0xff]
    %v135 = vld [vmem:[%s1 + $0x340] sm:$0xff]
    %v136 = vld [vmem:[%s1 + $0x348] sm:$0xff]
    %v137 = vld [vmem:[%s1 + $0x350] sm:$0xff]
    %v138 = vld [vmem:[%s1 + $0x358] sm:$0xff]
    %v139 = vld [vmem:[%s1 + $0x360] sm:$0xff]
    %v140 = vld [vmem:[%s1 + $0x368] sm:$0xff]
    %v141 = vld [vmem:[%s1 + $0x370] sm:$0xff]
    %v142 = vld [vmem:[%s1 + $0x378] sm:$0xff]
    %v143 = vld [vmem:[%s1 + $0x380] sm:$0xff]
    %v144 = vld [vmem:[%s1 + $0x388] sm:$0xff]
    %v145 = vld [vmem:[%s1 + $0x390] sm:$0xff]
    %v146 = vld [vmem:[%s1 + $0x398] sm:$0xff]
    %v147 = vld [vmem:[%s1 + $0x3a0] sm:$0xff]
    %v148 = vld [vmem:[%s1 + $0x3a8] sm:$0xff]
    %v149 = vld [vmem:[%s1 + $0x3b0] sm:$0xff]
    %v150 = vld [vmem:[%s1 + $0x3b8] sm:$0xff]
    %v151 = vld [vmem:[%s1 + $0x3c0] sm:$0xff]
    %v152 = vld [vmem:[%s1 + $0x3c8] sm:$0xff]
    %v153 = vld [vmem:[%s1 + $0x3d0] sm:$0xff]
    %v154 = vld [vmem:[%s1 + $0x3d8] sm:$0xff]
    %v155 = vld [vmem:[%s1 + $0x3e0] sm:$0xff]
    %v156 = vld [vmem:[%s1 + $0x3e8] sm:$0xff]
    %v157 = vld [vmem:[%s1 + $0x3f0] sm:$0xff]
    %v158 = vld [vmem:[%s1 + $0x3f8] sm:$0xff]
    %v159 = vld [vmem:[%s1 + $0x400] sm:$0xff]
    %v160 = vld [vmem:[%s1 + $0x408] sm:$0xff]
    %v161 = vld [vmem:[%s1 + $0x410] sm:$0xff]
    %v162 = vld [vmem:[%s1 + $0x418] sm:$0xff]
    %v163 = vld [vmem:[%s1 + $0x420] sm:$0xff]
    %v164 = vld [vmem:[%s1 + $0x428] sm:$0xff]
    %v165 = vld [vmem:[%s1 + $0x430] sm:$0xff]
    %v166 = vld [vmem:[%s1 + $0x438] sm:$0xff]
    %v167 = vld [vmem:[%s1 + $0x440] sm:$0xff]
    %v168 = vld [vmem:[%s1 + $0x448] sm:$0xff]
    %v169 = vld [vmem:[%s1 + $0x450] sm:$0xff]
    %v170 = vld [vmem:[%s1 + $0x458] sm:$0xff]
    %v171 = vld [vmem:[%s1 + $0x460] sm:$0xff]
    %v172 = vld [vmem:[%s1 + $0x468] sm:$0xff]
    %v173 = vld [vmem:[%s1 + $0x470] sm:$0xff]
    %v174 = vld [vmem:[%s1 + $0x478] sm:$0xff]
    %v175 = vld [vmem:[%s1 + $0x480] sm:$0xff]
    %v176 = vld [vmem:[%s1 + $0x488] sm:$0xff]
    %v177 = vld [vmem:[%s1 + $0x490] sm:$0xff]
    %v178 = vld [vmem:[%s1 + $0x498] sm:$0xff]
    %v179 = vld [vmem:[%s1 + $0x4a0] sm:$0xff]
    %v180 = vld [vmem:[%s1 + $0x4a8] sm:$0xff]
    %v181 = vld [vmem:[%s1 + $0x4b0] sm:$0xff]
    %v182 = vld [vmem:[%s1 + $0x4b8] sm:$0xff]
    %v183 = vld [vmem:[%s1 + $0x4c0] sm:$0xff]
    %v184 = vld [vmem:[%s1 + $0x4c8] sm:$0xff]
    %v185 = vld [vmem:[%s1 + $0x4d0] sm:$0xff]
    %v186 = vld [vmem:[%s1 + $0x4d8] sm:$0xff]
    %v187 = vld [vmem:[%s1 + $0x4e0] sm:$0xff]
    %v188 = vld [vmem:[%s1 + $0x4e8] sm:$0xff]
    %v189 = vld [vmem:[%s1 + $0x4f0] sm:$0xff]
    %v190 = vld [vmem:[%s1 + $0x4f8] sm:$0xff]
    %v191 = vld [vmem:[%s1 + $0x500] sm:$0xff]
    %v192 = vld [vmem:[%s1 + $0x508] sm:$0xff]
    %v193 = vld [vmem:[%s1 + $0x510] sm:$0xff]
    %v194 = vld [vmem:[%s1 + $0x518] sm:$0xff]
    %v195 = vld [vmem:[%s1 + $0x520] sm:$0xff]
    %v196 = vld [vmem:[%s1 + $0x528] sm:$0xff]
    %v197 = vld [vmem:[%s1 + $0x530] sm:$0xff]
    %v198 = vld [vmem:[%s1 + $0x538] sm:$0xff]
    %v199 = vld [vmem:[%s1 + $0x540] sm:$0xff]
    %v200 = vld [vmem:[%s1 + $0x548] sm:$0xff]
    %v201 = vld [vmem:[%s1 + $0x550] sm:$0xff]
    %v202 = vld [vmem:[%s1 + $0x558] sm:$0xff]
    %v203 = vld [vmem:[%s1 + $0x560] sm:$0xff]
    %v204 = vld [vmem:[%s1 + $0x568] sm:$0xff]
    %v205 = vld [vmem:[%s1 + $0x570] sm:$0xff]
    %v206 = vld [vmem:[%s1 + $0x578] sm:$0xff]
    %v207 = vld [vmem:[%s1 + $0x580] sm:$0xff]
    %v208 = vld [vmem:[%s1 + $0x588] sm:$0xff]
    %v209 = vld [vmem:[%s1 + $0x590] sm:$0xff]
    %v210 = vld [vmem:[%s1 + $0x598] sm:$0xff]
    %v211 = vld [vmem:[%s1 + $0x5a0] sm:$0xff]
    %v212 = vld [vmem:[%s1 + $0x5a8] sm:$0xff]
    %v213 = vld [vmem:[%s1 + $0x5b0] sm:$0xff]
    %v214 = vld [vmem:[%s1 + $0x5b8] sm:$0xff]
    %v215 = vld [vmem:[%s1 + $0x5c0] sm:$0xff]
    %v216 = vld [vmem:[%s1 + $0x5c8] sm:$0xff]
    %v217 = vld [vmem:[%s1 + $0x5d0] sm:$0xff]
    %v218 = vld [vmem:[%s1 + $0x5d8] sm:$0xff]
    %v219 = vld [vmem:[%s1 + $0x5e0] sm:$0xff]
    %v220 = vld [vmem:[%s1 + $0x5e8] sm:$0xff]
    %v221 = vld [vmem:[%s1 + $0x5f0] sm:$0xff]
    %v222 = vld [vmem:[%s1 + $0x5f8] sm:$0xff]
    %v223 = vld [vmem:[%s1 + $0x600] sm:$0xff]
    %v224 = vld [vmem:[%s1 + $0x608] sm:$0xff]
    %v225 = vld [vmem:[%s1 + $0x610] sm:$0xff]
    %v226 = vld [vmem:[%s1 + $0x618] sm:$0xff]
    %v227 = vld [vmem:[%s1 + $0x620] sm:$0xff]
    %v228 = vld [vmem:[%s1 + $0x628] sm:$0xff]
    %v229 = vld [vmem:[%s1 + $0x630] sm:$0xff]
    %v230 = vld [vmem:[%s1 + $0x638] sm:$0xff]
    %v231 = vld [vmem:[%s1 + $0x640] sm:$0xff]
    %v232 = vld [vmem:[%s1 + $0x648] sm:$0xff]
    %v233 = vld [vmem:[%s1 + $0x650] sm:$0xff]
    %v234 = vld [vmem:[%s1 + $0x658] sm:$0xff]
    %v235 = vld [vmem:[%s1 + $0x660] sm:$0xff]
    %v236 = vld [vmem:[%s1 + $0x668] sm:$0xff]
    %v237 = vld [vmem:[%s1 + $0x670] sm:$0xff]
    %v238 = vld [vmem:[%s1 + $0x678] sm:$0xff]
    %v239 = vld [vmem:[%s1 + $0x680] sm:$0xff]
    %v240 = vld [vmem:[%s1 + $0x688] sm:$0xff]
    %v241 = vld [vmem:[%s1 + $0x690] sm:$0xff]
    %v242 = vld [vmem:[%s1 + $0x698] sm:$0xff]
    %v243 = vld [vmem:[%s1 + $0x6a0] sm:$0xff]
    %v244 = vld [vmem:[%s1 + $0x6a8] sm:$0xff]
    %v245 = vld [vmem:[%s1 + $0x6b0] sm:$0xff]
    %v246 = vld [vmem:[%s1 + $0x6b8] sm:$0xff]
    %v247 = vld [vmem:[%s1 + $0x6c0] sm:$0xff]
    %v248 = vld [vmem:[%s1 + $0x6c8] sm:$0xff]
    %v249 = vld [vmem:[%s1 + $0x6d0] sm:$0xff]
    %v250 = vld [vmem:[%s1 + $0x6d8] sm:$0xff]
    %v251 = vld [vmem:[%s1 + $0x6e0] sm:$0xff]
    %v252 = vld [vmem:[%s1 + $0x6e8] sm:$0xff]
    %v253 = vld [vmem:[%s1 + $0x6f0] sm:$0xff]
    %v254 = vld [vmem:[%s1 + $0x6f8] sm:$0xff]
    %v255 = vld [vmem:[%s1 + $0x700] sm:$0xff]
    %v256 = vld [vmem:[%s1 + $0x708] sm:$0xff]
    %v257 = vld [vmem:[%s1 + $0x710] sm:$0xff]
    %v258 = vld [vmem:[%s1 + $0x718] sm:$0xff]
    %v259 = vld [vmem:[%s1 + $0x720] sm:$0xff]
    %v260 = vld [vmem:[%s1 + $0x728] sm:$0xff]
    %v261 = vld [vmem:[%s1 + $0x730] sm:$0xff]
    %v262 = vld [vmem:[%s1 + $0x738] sm:$0xff]
    %v263 = vld [vmem:[%s1 + $0x740] sm:$0xff]
    %v264 = vld [vmem:[%s1 + $0x748] sm:$0xff]
    %v265 = vld [vmem:[%s1 + $0x750] sm:$0xff]
    %v266 = vld [vmem:[%s1 + $0x758] sm:$0xff]
    %v267 = vld [vmem:[%s1 + $0x760] sm:$0xff]
    %v268 = vld [vmem:[%s1 + $0x768] sm:$0xff]
    %v269 = vld [vmem:[%s1 + $0x770] sm:$0xff]
    %v270 = vld [vmem:[%s1 + $0x778] sm:$0xff]
    %v271 = vld [vmem:[%s1 + $0x780] sm:$0xff]
    %v272 = vld [vmem:[%s1 + $0x788] sm:$0xff]
    %v273 = vld [vmem:[%s1 + $0x790] sm:$0xff]
    %v274 = vld [vmem:[%s1 + $0x798] sm:$0xff]
    %v275 = vld [vmem:[%s1 + $0x7a0] sm:$0xff]
    %v276 = vld [vmem:[%s1 + $0x7a8] sm:$0xff]
    %v277 = vld [vmem:[%s1 + $0x7b0] sm:$0xff]
    %v278 = vld [vmem:[%s1 + $0x7b8] sm:$0xff]
    %v279 = vld [vmem:[%s1 + $0x7c0] sm:$0xff]
    %v280 = vld [vmem:[%s1 + $0x7c8] sm:$0xff]
    %v281 = vld [vmem:[%s1 + $0x7d0] sm:$0xff]
    %v282 = vld [vmem:[%s1 + $0x7d8] sm:$0xff]
    %v283 = vld [vmem:[%s1 + $0x7e0] sm:$0xff]
    %v284 = vld [vmem:[%s1 + $0x7e8] sm:$0xff]
    %v285 = vld [vmem:[%s1 + $0x7f0] sm:$0xff]
    %v286 = vld [vmem:[%s1 + $0x7f8] sm:$0xff]
    %v287 = vld [vmem:[%s1 + $0x800] sm:$0xff]
    %v288 = vld [vmem:[%s1 + $0x808] sm:$0xff]
    %v289 = vld [vmem:[%s1 + $0x810] sm:$0xff]
    %v290 = vld [vmem:[%s1 + $0x818] sm:$0xff]
    %v291 = vld [vmem:[%s1 + $0x820] sm:$0xff]
    %v292 = vld [vmem:[%s1 + $0x828] sm:$0xff]
    %v293 = vld [vmem:[%s1 + $0x830] sm:$0xff]
    %v294 = vld [vmem:[%s1 + $0x838] sm:$0xff]
    %v295 = vld [vmem:[%s1 + $0x840] sm:$0xff]
    %v296 = vld [vmem:[%s1 + $0x848] sm:$0xff]
    %v297 = vld [vmem:[%s1 + $0x850] sm:$0xff]
    %v298 = vld [vmem:[%s1 + $0x858] sm:$0xff]
    %v299 = vld [vmem:[%s1 + $0x860] sm:$0xff]
    %v300 = vld [vmem:[%s1 + $0x868] sm:$0xff]
    %v301 = vld [vmem:[%s1 + $0x870] sm:$0xff]
    %v302 = vld [vmem:[%s1 + $0x878] sm:$0xff]
    %v303 = vld [vmem:[%s1 + $0x880] sm:$0xff]
    %v304 = vld [vmem:[%s1 + $0x888] sm:$0xff]
    %v305 = vld [vmem:[%s1 + $0x890] sm:$0xff]
    %v306 = vld [vmem:[%s1 + $0x898] sm:$0xff]
    %v307 = vld [vmem:[%s1 + $0x8a0] sm:$0xff]
    %v308 = vld [vmem:[%s1 + $0x8a8] sm:$0xff]
    %v309 = vld [vmem:[%s1 + $0x8b0] sm:$0xff]
    %v310 = vld [vmem:[%s1 + $0x8b8] sm:$0xff]
    %v311 = vld [vmem:[%s1 + $0x8c0] sm:$0xff]
    %v312 = vld [vmem:[%s1 + $0x8c8] sm:$0xff]
    %v313 = vld [vmem:[%s1 + $0x8d0] sm:$0xff]
    %v314 = vld [vmem:[%s1 + $0x8d8] sm:$0xff]
    %v315 = vld [vmem:[%s1 + $0x8e0] sm:$0xff]
    %v316 = vld [vmem:[%s1 + $0x8e8] sm:$0xff]
    %v317 = vld [vmem:[%s1 + $0x8f0] sm:$0xff]
    %v318 = vld [vmem:[%s1 + $0x8f8] sm:$0xff]
    %v319 = vld [vmem:[%s1 + $0x900] sm:$0xff]
    %v320 = vld [vmem:[%s1 + $0x908] sm:$0xff]
    %v321 = vld [vmem:[%s1 + $0x910] sm:$0xff]
    %v322 = vld [vmem:[%s1 + $0x918] sm:$0xff]
    %v323 = vld [vmem:[%s1 + $0x920] sm:$0xff]
    %v324 = vld [vmem:[%s1 + $0x928] sm:$0xff]
    %v325 = vld [vmem:[%s1 + $0x930] sm:$0xff]
    %v326 = vld [vmem:[%s1 + $0x938] sm:$0xff]
    %v327 = vld [vmem:[%s1 + $0x940] sm:$0xff]
    %v328 = vld [vmem:[%s1 + $0x948] sm:$0xff]
    %v329 = vld [vmem:[%s1 + $0x950] sm:$0xff]
    %v330 = vld [vmem:[%s1 + $0x958] sm:$0xff]
    %v331 = vld [vmem:[%s1 + $0x960] sm:$0xff]
    %v332 = vld [vmem:[%s1 + $0x968] sm:$0xff]
    %v333 = vld [vmem:[%s1 + $0x970] sm:$0xff]
    %v334 = vld [vmem:[%s1 + $0x978] sm:$0xff]
    %v335 = vld [vmem:[%s1 + $0x980] sm:$0xff]
    %v336 = vld [vmem:[%s1 + $0x988] sm:$0xff]
    %v337 = vld [vmem:[%s1 + $0x990] sm:$0xff]
    %v338 = vld [vmem:[%s1 + $0x998] sm:$0xff]
    %v339 = vld [vmem:[%s1 + $0x9a0] sm:$0xff]
    %v340 = vld [vmem:[%s1 + $0x9a8] sm:$0xff]
    %v341 = vld [vmem:[%s1 + $0x9b0] sm:$0xff]
    %v342 = vld [vmem:[%s1 + $0x9b8] sm:$0xff]
    %v343 = vld [vmem:[%s1 + $0x9c0] sm:$0xff]
    %v344 = vld [vmem:[%s1 + $0x9c8] sm:$0xff]
    %v345 = vld [vmem:[%s1 + $0x9d0] sm:$0xff]
    %v346 = vld [vmem:[%s1 + $0x9d8] sm:$0xff]
    %v347 = vld [vmem:[%s1 + $0x9e0] sm:$0xff]
    %v348 = vld [vmem:[%s1 + $0x9e8] sm:$0xff]
    %v349 = vld [vmem:[%s1 + $0x9f0] sm:$0xff]
    %v350 = vld [vmem:[%s1 + $0x9f8] sm:$0xff]
    %v351 = vld [vmem:[%s1 + $0xa00] sm:$0xff]
    %v352 = vld [vmem:[%s1 + $0xa08] sm:$0xff]
    %v353 = vld [vmem:[%s1 + $0xa10] sm:$0xff]
    %v354 = vld [vmem:[%s1 + $0xa18] sm:$0xff]
    %v355 = vld [vmem:[%s1 + $0xa20] sm:$0xff]
    %v356 = vld [vmem:[%s1 + $0xa28] sm:$0xff]
    %v357 = vld [vmem:[%s1 + $0xa30] sm:$0xff]
    %v358 = vld [vmem:[%s1 + $0xa38] sm:$0xff]
    %v359 = vld [vmem:[%s1 + $0xa40] sm:$0xff]
    %v360 = vld [vmem:[%s1 + $0xa48] sm:$0xff]
    %v361 = vld [vmem:[%s1 + $0xa50] sm:$0xff]
    %v362 = vld [vmem:[%s1 + $0xa58] sm:$0xff]
    %v363 = vld [vmem:[%s1 + $0xa60] sm:$0xff]
    %v364 = vld [vmem:[%s1 + $0xa68] sm:$0xff]
    %v365 = vld [vmem:[%s1 + $0xa70] sm:$0xff]
    %v366 = vld [vmem:[%s1 + $0xa78] sm:$0xff]
    %v367 = vld [vmem:[%s1 + $0xa80] sm:$0xff]
    %v368 = vld [vmem:[%s1 + $0xa88] sm:$0xff]
    %v369 = vld [vmem:[%s1 + $0xa90] sm:$0xff]
    %v370 = vld [vmem:[%s1 + $0xa98] sm:$0xff]
    %v371 = vld [vmem:[%s1 + $0xaa0] sm:$0xff]
    %v372 = vld [vmem:[%s1 + $0xaa8] sm:$0xff]
    %v373 = vld [vmem:[%s1 + $0xab0] sm:$0xff]
    %v374 = vld [vmem:[%s1 + $0xab8] sm:$0xff]
    %v375 = vld [vmem:[%s1 + $0xac0] sm:$0xff]
    %v376 = vld [vmem:[%s1 + $0xac8] sm:$0xff]
    %v377 = vld [vmem:[%s1 + $0xad0] sm:$0xff]
    %v378 = vld [vmem:[%s1 + $0xad8] sm:$0xff]
    %v379 = vld [vmem:[%s1 + $0xae0] sm:$0xff]
    %v380 = vld [vmem:[%s1 + $0xae8] sm:$0xff]
    %v381 = vld [vmem:[%s1 + $0xaf0] sm:$0xff]
    %v382 = vld [vmem:[%s1 + $0xaf8] sm:$0xff]
    %v383 = vld [vmem:[%s1 + $0xb00] sm:$0xff]
    %v384 = vld [vmem:[%s1 + $0xb08] sm:$0xff]
    %v385 = vld [vmem:[%s1 + $0xb10] sm:$0xff]
    %v386 = vld [vmem:[%s1 + $0xb18] sm:$0xff]
    %v387 = vld [vmem:[%s1 + $0xb20] sm:$0xff]
    %v388 = vld [vmem:[%s1 + $0xb28] sm:$0xff]
    %v389 = vld [vmem:[%s1 + $0xb30] sm:$0xff]
    %v390 = vld [vmem:[%s1 + $0xb38] sm:$0xff]
    %v391 = vld [vmem:[%s1 + $0xb40] sm:$0xff]
    %v392 = vld [vmem:[%s1 + $0xb48] sm:$0xff]
    %v393 = vld [vmem:[%s1 + $0xb50] sm:$0xff]
    %v394 = vld [vmem:[%s1 + $0xb58] sm:$0xff]
    %v395 = vld [vmem:[%s1 + $0xb60] sm:$0xff]
    %v396 = vld [vmem:[%s1 + $0xb68] sm:$0xff]
    %v397 = vld [vmem:[%s1 + $0xb70] sm:$0xff]
    %v398 = vld [vmem:[%s1 + $0xb78] sm:$0xff]
    %v399 = vld [vmem:[%s1 + $0xb80] sm:$0xff]
    %v400 = vld [vmem:[%s1 + $0xb88] sm:$0xff]
    %v401 = vld [vmem:[%s1 + $0xb90] sm:$0xff]
    %v402 = vld [vmem:[%s1 + $0xb98] sm:$0xff]
    %v403 = vld [vmem:[%s1 + $0xba0] sm:$0xff]
    %v404 = vld [vmem:[%s1 + $0xba8] sm:$0xff]
    %v405 = vld [vmem:[%s1 + $0xbb0] sm:$0xff]
    %v406 = vld [vmem:[%s1 + $0xbb8] sm:$0xff]
    %v407 = vld [vmem:[%s1 + $0xbc0] sm:$0xff]
    %v408 = vld [vmem:[%s1 + $0xbc8] sm:$0xff]
    %v409 = vld [vmem:[%s1 + $0xbd0] sm:$0xff]
    %v410 = vld [vmem:[%s1 + $0xbd8] sm:$0xff]
    %v411 = vld [vmem:[%s1 + $0xbe0] sm:$0xff]
    %v412 = vld [vmem:[%s1 + $0xbe8] sm:$0xff]
    %v413 = vld [vmem:[%s1 + $0xbf0] sm:$0xff]
    %v414 = vld [vmem:[%s1 + $0xbf8] sm:$0xff]
    %v415 = vld [vmem:[%s1 + $0xc00] sm:$0xff]
    %v416 = vld [vmem:[%s1 + $0xc08] sm:$0xff]
    %v417 = vld [vmem:[%s1 + $0xc10] sm:$0xff]
    %v418 = vld [vmem:[%s1 + $0xc18] sm:$0xff]
    %v419 = vld [vmem:[%s1 + $0xc20] sm:$0xff]
    %v420 = vld [vmem:[%s1 + $0xc28] sm:$0xff]
    %v421 = vld [vmem:[%s1 + $0xc30] sm:$0xff]
    %v422 = vld [vmem:[%s1 + $0xc38] sm:$0xff]
    %v423 = vld [vmem:[%s2] sm:$0x1]
    %v425 = vperm.slane %v423, 0
    %434 = vst [vmem:[#allocation1] ss:$4 sm:$0xff] %v24
    %s435 = scalar_lea.vmem [#allocation1], 32
    %436 = vst [vmem:[%s435] ss:$4 sm:$0xff] %v25
    %v437 = vld.sshfl [vmem:[#allocation1] sm:$0xff pattern:$0x73625140]
    %v438 = vld.sshfl [vmem:[#allocation1 + $0x8] sm:$0xff pattern:$0x73625140]
    %v439 = vld.sshfl [vmem:[#allocation1 + $0x10] sm:$0xff pattern:$0x73625140]
    %v440 = vld.sshfl [vmem:[#allocation1 + $0x18] sm:$0xff pattern:$0x73625140]
    %v441 = vld.sshfl [vmem:[#allocation1 + $0x20] sm:$0xff pattern:$0x73625140]
    %v442 = vld.sshfl [vmem:[#allocation1 + $0x28] sm:$0xff pattern:$0x73625140]
    %v443 = vld.sshfl [vmem:[#allocation1 + $0x30] sm:$0xff pattern:$0x73625140]
    %v444 = vld.sshfl [vmem:[#allocation1 + $0x38] sm:$0xff pattern:$0x73625140]
    %445 = vst [vmem:[#allocation1] ss:$4 sm:$0xff] %v26
    %446 = vst [vmem:[%s435] ss:$4 sm:$0xff] %v27
    %v447 = vld.sshfl [vmem:[#allocation1] sm:$0xff pattern:$0x73625140]
    %v448 = vld.sshfl [vmem:[#allocation1 + $0x8] sm:$0xff pattern:$0x73625140]
    %v449 = vld.sshfl [vmem:[#allocation1 + $0x10] sm:$0xff pattern:$0x73625140]
    %v450 = vld.sshfl [vmem:[#allocation1 + $0x18] sm:$0xff pattern:$0x73625140]
    %v451 = vld.sshfl [vmem:[#allocation1 + $0x20] sm:$0xff pattern:$0x73625140]
    %v452 = vld.sshfl [vmem:[#allocation1 + $0x28] sm:$0xff pattern:$0x73625140]
    %v453 = vld.sshfl [vmem:[#allocation1 + $0x30] sm:$0xff pattern:$0x73625140]
    %v454 = vld.sshfl [vmem:[#allocation1 + $0x38] sm:$0xff pattern:$0x73625140]
    %455 = vst [vmem:[#allocation1] ss:$4 sm:$0xff] %v28
    %456 = vst [vmem:[%s435] ss:$4 sm:$0xff] %v29
    %v457 = vld.sshfl [vmem:[#allocation1] sm:$0xff pattern:$0x73625140]
    %v458 = vld.sshfl [vmem:[#allocation1 + $0x8] sm:$0xff pattern:$0x73625140]
    %v459 = vld.sshfl [vmem:[#allocation1 + $0x10] sm:$0xff pattern:$0x73625140]
    %v460 = vld.sshfl [vmem:[#allocation1 + $0x18] sm:$0xff pattern:$0x73625140]
    %v461 = vld.sshfl [vmem:[#allocation1 + $0x20] sm:$0xff pattern:$0x73625140]
    %v462 = vld.sshfl [vmem:[#allocation1 + $0x28] sm:$0xff pattern:$0x73625140]
    %v463 = vld.sshfl [vmem:[#allocation1 + $0x30] sm:$0xff pattern:$0x73625140]
    %v464 = vld.sshfl [vmem:[#allocation1 + $0x38] sm:$0xff pattern:$0x73625140]
    %465 = vst [vmem:[#allocation1] ss:$4 sm:$0xff] %v30
    %v466 = vld.sshfl [vmem:[#allocation1] sm:$0xff pattern:$0x73625140]
    %vm491 = vcmask 523264
    %v492 = vsel %vm491, %v466, 0
    %494 = vmatpush.msra.mxu0 %v46
    %495 = vmatpush.msra.mxu0 %v45
    %496 = vmatpush.msra.mxu0 %v44
    %497 = vmatpush.msra.mxu0 %v43
    %498 = vmatpush.msra.mxu0 %v42
    %499 = vmatpush.msra.mxu0 %v41
    %500 = vmatpush.msra.mxu0 %v40
    %501 = vmatpush.msra.mxu0 %v39
    %502 = vmatpush.msra.mxu0 %v38
    %503 = vmatpush.msra.mxu0 %v37
    %504 = vmatpush.msra.mxu0 %v36
    %505 = vmatpush.msra.mxu0 %v35
    %506 = vmatpush.msra.mxu0 %v34
    %507 = vmatpush.msra.mxu0 %v33
    %508 = vmatpush.msra.mxu0 %v32
    %509 = vmatpush.msra.mxu0 %v31
    %510 = vmatmul.f32.gmra.mxu0 %v437
    %v511 = vpop.f32.mrf.mxu0
    %v512 = vadd.f32 %v425, %v511
    %513 = vdwg.mxu0
    %514 = vmatpush.msra.mxu0 %v62
    %515 = vmatpush.msra.mxu0 %v61
    %516 = vmatpush.msra.mxu0 %v60
    %517 = vmatpush.msra.mxu0 %v59
    %518 = vmatpush.msra.mxu0 %v58
    %519 = vmatpush.msra.mxu0 %v57
    %520 = vmatpush.msra.mxu0 %v56
    %521 = vmatpush.msra.mxu0 %v55
    %522 = vmatpush.msra.mxu0 %v54
    %523 = vmatpush.msra.mxu0 %v53
    %524 = vmatpush.msra.mxu0 %v52
    %525 = vmatpush.msra.mxu0 %v51
    %526 = vmatpush.msra.mxu0 %v50
    %527 = vmatpush.msra.mxu0 %v49
    %528 = vmatpush.msra.mxu0 %v48
    %529 = vmatpush.msra.mxu0 %v47
    %530 = vmatmul.f32.gmra.mxu0 %v438
    %v531 = vpop.f32.mrf.mxu0
    %v532 = vadd.f32 %v512, %v531
    %533 = vdwg.mxu0
    %534 = vmatpush.msra.mxu0 %v78
    %535 = vmatpush.msra.mxu0 %v77
    %536 = vmatpush.msra.mxu0 %v76
    %537 = vmatpush.msra.mxu0 %v75
    %538 = vmatpush.msra.mxu0 %v74
    %539 = vmatpush.msra.mxu0 %v73
    %540 = vmatpush.msra.mxu0 %v72
    %541 = vmatpush.msra.mxu0 %v71
    %542 = vmatpush.msra.mxu0 %v70
    %543 = vmatpush.msra.mxu0 %v69
    %544 = vmatpush.msra.mxu0 %v68
    %545 = vmatpush.msra.mxu0 %v67
    %546 = vmatpush.msra.mxu0 %v66
    %547 = vmatpush.msra.mxu0 %v65
    %548 = vmatpush.msra.mxu0 %v64
    %549 = vmatpush.msra.mxu0 %v63
    %550 = vmatmul.f32.gmra.mxu0 %v439
    %v551 = vpop.f32.mrf.mxu0
    %v552 = vadd.f32 %v532, %v551
    %553 = vdwg.mxu0
    %554 = vmatpush.msra.mxu0 %v94
    %555 = vmatpush.msra.mxu0 %v93
    %556 = vmatpush.msra.mxu0 %v92
    %557 = vmatpush.msra.mxu0 %v91
    %558 = vmatpush.msra.mxu0 %v90
    %559 = vmatpush.msra.mxu0 %v89
    %560 = vmatpush.msra.mxu0 %v88
    %561 = vmatpush.msra.mxu0 %v87
    %562 = vmatpush.msra.mxu0 %v86
    %563 = vmatpush.msra.mxu0 %v85
    %564 = vmatpush.msra.mxu0 %v84
    %565 = vmatpush.msra.mxu0 %v83
    %566 = vmatpush.msra.mxu0 %v82
    %567 = vmatpush.msra.mxu0 %v81
    %568 = vmatpush.msra.mxu0 %v80
    %569 = vmatpush.msra.mxu0 %v79
    %570 = vmatmul.f32.gmra.mxu0 %v440
    %v571 = vpop.f32.mrf.mxu0
    %v572 = vadd.f32 %v552, %v571
    %573 = vdwg.mxu0
    %574 = vmatpush.msra.mxu0 %v110
    %575 = vmatpush.msra.mxu0 %v109
    %576 = vmatpush.msra.mxu0 %v108
    %577 = vmatpush.msra.mxu0 %v107
    %578 = vmatpush.msra.mxu0 %v106
    %579 = vmatpush.msra.mxu0 %v105
    %580 = vmatpush.msra.mxu0 %v104
    %581 = vmatpush.msra.mxu0 %v103
    %582 = vmatpush.msra.mxu0 %v102
    %583 = vmatpush.msra.mxu0 %v101
    %584 = vmatpush.msra.mxu0 %v100
    %585 = vmatpush.msra.mxu0 %v99
    %586 = vmatpush.msra.mxu0 %v98
    %587 = vmatpush.msra.mxu0 %v97
    %588 = vmatpush.msra.mxu0 %v96
    %589 = vmatpush.msra.mxu0 %v95
    %590 = vmatmul.f32.gmra.mxu0 %v441
    %v591 = vpop.f32.mrf.mxu0
    %v592 = vadd.f32 %v572, %v591
    %593 = vdwg.mxu0
    %594 = vmatpush.msra.mxu0 %v126
    %595 = vmatpush.msra.mxu0 %v125
    %596 = vmatpush.msra.mxu0 %v124
    %597 = vmatpush.msra.mxu0 %v123
    %598 = vmatpush.msra.mxu0 %v122
    %599 = vmatpush.msra.mxu0 %v121
    %600 = vmatpush.msra.mxu0 %v120
    %601 = vmatpush.msra.mxu0 %v119
    %602 = vmatpush.msra.mxu0 %v118
    %603 = vmatpush.msra.mxu0 %v117
    %604 = vmatpush.msra.mxu0 %v116
    %605 = vmatpush.msra.mxu0 %v115
    %606 = vmatpush.msra.mxu0 %v114
    %607 = vmatpush.msra.mxu0 %v113
    %608 = vmatpush.msra.mxu0 %v112
    %609 = vmatpush.msra.mxu0 %v111
    %610 = vmatmul.f32.gmra.mxu0 %v442
    %v611 = vpop.f32.mrf.mxu0
    %v612 = vadd.f32 %v592, %v611
    %613 = vdwg.mxu0
    %614 = vmatpush.msra.mxu0 %v142
    %615 = vmatpush.msra.mxu0 %v141
    %616 = vmatpush.msra.mxu0 %v140
    %617 = vmatpush.msra.mxu0 %v139
    %618 = vmatpush.msra.mxu0 %v138
    %619 = vmatpush.msra.mxu0 %v137
    %620 = vmatpush.msra.mxu0 %v136
    %621 = vmatpush.msra.mxu0 %v135
    %622 = vmatpush.msra.mxu0 %v134
    %623 = vmatpush.msra.mxu0 %v133
    %624 = vmatpush.msra.mxu0 %v132
    %625 = vmatpush.msra.mxu0 %v131
    %626 = vmatpush.msra.mxu0 %v130
    %627 = vmatpush.msra.mxu0 %v129
    %628 = vmatpush.msra.mxu0 %v128
    %629 = vmatpush.msra.mxu0 %v127
    %630 = vmatmul.f32.gmra.mxu0 %v443
    %v631 = vpop.f32.mrf.mxu0
    %v632 = vadd.f32 %v612, %v631
    %633 = vdwg.mxu0
    %634 = vmatpush.msra.mxu0 %v158
    %635 = vmatpush.msra.mxu0 %v157
    %636 = vmatpush.msra.mxu0 %v156
    %637 = vmatpush.msra.mxu0 %v155
    %638 = vmatpush.msra.mxu0 %v154
    %639 = vmatpush.msra.mxu0 %v153
    %640 = vmatpush.msra.mxu0 %v152
    %641 = vmatpush.msra.mxu0 %v151
    %642 = vmatpush.msra.mxu0 %v150
    %643 = vmatpush.msra.mxu0 %v149
    %644 = vmatpush.msra.mxu0 %v148
    %645 = vmatpush.msra.mxu0 %v147
    %646 = vmatpush.msra.mxu0 %v146
    %647 = vmatpush.msra.mxu0 %v145
    %648 = vmatpush.msra.mxu0 %v144
    %649 = vmatpush.msra.mxu0 %v143
    %650 = vmatmul.f32.gmra.mxu0 %v444
    %v651 = vpop.f32.mrf.mxu0
    %v652 = vadd.f32 %v632, %v651
    %653 = vdwg.mxu0
    %654 = vmatpush.msra.mxu0 %v174
    %655 = vmatpush.msra.mxu0 %v173
    %656 = vmatpush.msra.mxu0 %v172
    %657 = vmatpush.msra.mxu0 %v171
    %658 = vmatpush.msra.mxu0 %v170
    %659 = vmatpush.msra.mxu0 %v169
    %660 = vmatpush.msra.mxu0 %v168
    %661 = vmatpush.msra.mxu0 %v167
    %662 = vmatpush.msra.mxu0 %v166
    %663 = vmatpush.msra.mxu0 %v165
    %664 = vmatpush.msra.mxu0 %v164
    %665 = vmatpush.msra.mxu0 %v163
    %666 = vmatpush.msra.mxu0 %v162
    %667 = vmatpush.msra.mxu0 %v161
    %668 = vmatpush.msra.mxu0 %v160
    %669 = vmatpush.msra.mxu0 %v159
    %670 = vmatmul.f32.gmra.mxu0 %v447
    %v671 = vpop.f32.mrf.mxu0
    %v672 = vadd.f32 %v652, %v671
    %673 = vdwg.mxu0
    %674 = vmatpush.msra.mxu0 %v190
    %675 = vmatpush.msra.mxu0 %v189
    %676 = vmatpush.msra.mxu0 %v188
    %677 = vmatpush.msra.mxu0 %v187
    %678 = vmatpush.msra.mxu0 %v186
    %679 = vmatpush.msra.mxu0 %v185
    %680 = vmatpush.msra.mxu0 %v184
    %681 = vmatpush.msra.mxu0 %v183
    %682 = vmatpush.msra.mxu0 %v182
    %683 = vmatpush.msra.mxu0 %v181
    %684 = vmatpush.msra.mxu0 %v180
    %685 = vmatpush.msra.mxu0 %v179
    %686 = vmatpush.msra.mxu0 %v178
    %687 = vmatpush.msra.mxu0 %v177
    %688 = vmatpush.msra.mxu0 %v176
    %689 = vmatpush.msra.mxu0 %v175
    %690 = vmatmul.f32.gmra.mxu0 %v448
    %v691 = vpop.f32.mrf.mxu0
    %v692 = vadd.f32 %v672, %v691
    %693 = vdwg.mxu0
    %694 = vmatpush.msra.mxu0 %v206
    %695 = vmatpush.msra.mxu0 %v205
    %696 = vmatpush.msra.mxu0 %v204
    %697 = vmatpush.msra.mxu0 %v203
    %698 = vmatpush.msra.mxu0 %v202
    %699 = vmatpush.msra.mxu0 %v201
    %700 = vmatpush.msra.mxu0 %v200
    %701 = vmatpush.msra.mxu0 %v199
    %702 = vmatpush.msra.mxu0 %v198
    %703 = vmatpush.msra.mxu0 %v197
    %704 = vmatpush.msra.mxu0 %v196
    %705 = vmatpush.msra.mxu0 %v195
    %706 = vmatpush.msra.mxu0 %v194
    %707 = vmatpush.msra.mxu0 %v193
    %708 = vmatpush.msra.mxu0 %v192
    %709 = vmatpush.msra.mxu0 %v191
    %710 = vmatmul.f32.gmra.mxu0 %v449
    %v711 = vpop.f32.mrf.mxu0
    %v712 = vadd.f32 %v692, %v711
    %713 = vdwg.mxu0
    %714 = vmatpush.msra.mxu0 %v222
    %715 = vmatpush.msra.mxu0 %v221
    %716 = vmatpush.msra.mxu0 %v220
    %717 = vmatpush.msra.mxu0 %v219
    %718 = vmatpush.msra.mxu0 %v218
    %719 = vmatpush.msra.mxu0 %v217
    %720 = vmatpush.msra.mxu0 %v216
    %721 = vmatpush.msra.mxu0 %v215
    %722 = vmatpush.msra.mxu0 %v214
    %723 = vmatpush.msra.mxu0 %v213
    %724 = vmatpush.msra.mxu0 %v212
    %725 = vmatpush.msra.mxu0 %v211
    %726 = vmatpush.msra.mxu0 %v210
    %727 = vmatpush.msra.mxu0 %v209
    %728 = vmatpush.msra.mxu0 %v208
    %729 = vmatpush.msra.mxu0 %v207
    %730 = vmatmul.f32.gmra.mxu0 %v450
    %v731 = vpop.f32.mrf.mxu0
    %v732 = vadd.f32 %v712, %v731
    %733 = vdwg.mxu0
    %734 = vmatpush.msra.mxu0 %v238
    %735 = vmatpush.msra.mxu0 %v237
    %736 = vmatpush.msra.mxu0 %v236
    %737 = vmatpush.msra.mxu0 %v235
    %738 = vmatpush.msra.mxu0 %v234
    %739 = vmatpush.msra.mxu0 %v233
    %740 = vmatpush.msra.mxu0 %v232
    %741 = vmatpush.msra.mxu0 %v231
    %742 = vmatpush.msra.mxu0 %v230
    %743 = vmatpush.msra.mxu0 %v229
    %744 = vmatpush.msra.mxu0 %v228
    %745 = vmatpush.msra.mxu0 %v227
    %746 = vmatpush.msra.mxu0 %v226
    %747 = vmatpush.msra.mxu0 %v225
    %748 = vmatpush.msra.mxu0 %v224
    %749 = vmatpush.msra.mxu0 %v223
    %750 = vmatmul.f32.gmra.mxu0 %v451
    %v751 = vpop.f32.mrf.mxu0
    %v752 = vadd.f32 %v732, %v751
    %753 = vdwg.mxu0
    %754 = vmatpush.msra.mxu0 %v254
    %755 = vmatpush.msra.mxu0 %v253
    %756 = vmatpush.msra.mxu0 %v252
    %757 = vmatpush.msra.mxu0 %v251
    %758 = vmatpush.msra.mxu0 %v250
    %759 = vmatpush.msra.mxu0 %v249
    %760 = vmatpush.msra.mxu0 %v248
    %761 = vmatpush.msra.mxu0 %v247
    %762 = vmatpush.msra.mxu0 %v246
    %763 = vmatpush.msra.mxu0 %v245
    %764 = vmatpush.msra.mxu0 %v244
    %765 = vmatpush.msra.mxu0 %v243
    %766 = vmatpush.msra.mxu0 %v242
    %767 = vmatpush.msra.mxu0 %v241
    %768 = vmatpush.msra.mxu0 %v240
    %769 = vmatpush.msra.mxu0 %v239
    %770 = vmatmul.f32.gmra.mxu0 %v452
    %v771 = vpop.f32.mrf.mxu0
    %v772 = vadd.f32 %v752, %v771
    %773 = vdwg.mxu0
    %774 = vmatpush.msra.mxu0 %v270
    %775 = vmatpush.msra.mxu0 %v269
    %776 = vmatpush.msra.mxu0 %v268
    %777 = vmatpush.msra.mxu0 %v267
    %778 = vmatpush.msra.mxu0 %v266
    %779 = vmatpush.msra.mxu0 %v265
    %780 = vmatpush.msra.mxu0 %v264
    %781 = vmatpush.msra.mxu0 %v263
    %782 = vmatpush.msra.mxu0 %v262
    %783 = vmatpush.msra.mxu0 %v261
    %784 = vmatpush.msra.mxu0 %v260
    %785 = vmatpush.msra.mxu0 %v259
    %786 = vmatpush.msra.mxu0 %v258
    %787 = vmatpush.msra.mxu0 %v257
    %788 = vmatpush.msra.mxu0 %v256
    %789 = vmatpush.msra.mxu0 %v255
    %790 = vmatmul.f32.gmra.mxu0 %v453
    %v791 = vpop.f32.mrf.mxu0
    %v792 = vadd.f32 %v772, %v791
    %793 = vdwg.mxu0
    %794 = vmatpush.msra.mxu0 %v286
    %795 = vmatpush.msra.mxu0 %v285
    %796 = vmatpush.msra.mxu0 %v284
    %797 = vmatpush.msra.mxu0 %v283
    %798 = vmatpush.msra.mxu0 %v282
    %799 = vmatpush.msra.mxu0 %v281
    %800 = vmatpush.msra.mxu0 %v280
    %801 = vmatpush.msra.mxu0 %v279
    %802 = vmatpush.msra.mxu0 %v278
    %803 = vmatpush.msra.mxu0 %v277
    %804 = vmatpush.msra.mxu0 %v276
    %805 = vmatpush.msra.mxu0 %v275
    %806 = vmatpush.msra.mxu0 %v274
    %807 = vmatpush.msra.mxu0 %v273
    %808 = vmatpush.msra.mxu0 %v272
    %809 = vmatpush.msra.mxu0 %v271
    %810 = vmatmul.f32.gmra.mxu0 %v454
    %v811 = vpop.f32.mrf.mxu0
    %v812 = vadd.f32 %v792, %v811
    %813 = vdwg.mxu0
    %814 = vmatpush.msra.mxu0 %v302
    %815 = vmatpush.msra.mxu0 %v301
    %816 = vmatpush.msra.mxu0 %v300
    %817 = vmatpush.msra.mxu0 %v299
    %818 = vmatpush.msra.mxu0 %v298
    %819 = vmatpush.msra.mxu0 %v297
    %820 = vmatpush.msra.mxu0 %v296
    %821 = vmatpush.msra.mxu0 %v295
    %822 = vmatpush.msra.mxu0 %v294
    %823 = vmatpush.msra.mxu0 %v293
    %824 = vmatpush.msra.mxu0 %v292
    %825 = vmatpush.msra.mxu0 %v291
    %826 = vmatpush.msra.mxu0 %v290
    %827 = vmatpush.msra.mxu0 %v289
    %828 = vmatpush.msra.mxu0 %v288
    %829 = vmatpush.msra.mxu0 %v287
    %830 = vmatmul.f32.gmra.mxu0 %v457
    %v831 = vpop.f32.mrf.mxu0
    %v832 = vadd.f32 %v812, %v831
    %833 = vdwg.mxu0
    %834 = vmatpush.msra.mxu0 %v318
    %835 = vmatpush.msra.mxu0 %v317
    %836 = vmatpush.msra.mxu0 %v316
    %837 = vmatpush.msra.mxu0 %v315
    %838 = vmatpush.msra.mxu0 %v314
    %839 = vmatpush.msra.mxu0 %v313
    %840 = vmatpush.msra.mxu0 %v312
    %841 = vmatpush.msra.mxu0 %v311
    %842 = vmatpush.msra.mxu0 %v310
    %843 = vmatpush.msra.mxu0 %v309
    %844 = vmatpush.msra.mxu0 %v308
    %845 = vmatpush.msra.mxu0 %v307
    %846 = vmatpush.msra.mxu0 %v306
    %847 = vmatpush.msra.mxu0 %v305
    %848 = vmatpush.msra.mxu0 %v304
    %849 = vmatpush.msra.mxu0 %v303
    %850 = vmatmul.f32.gmra.mxu0 %v458
    %v851 = vpop.f32.mrf.mxu0
    %v852 = vadd.f32 %v832, %v851
    %853 = vdwg.mxu0
    %854 = vmatpush.msra.mxu0 %v334
    %855 = vmatpush.msra.mxu0 %v333
    %856 = vmatpush.msra.mxu0 %v332
    %857 = vmatpush.msra.mxu0 %v331
    %858 = vmatpush.msra.mxu0 %v330
    %859 = vmatpush.msra.mxu0 %v329
    %860 = vmatpush.msra.mxu0 %v328
    %861 = vmatpush.msra.mxu0 %v327
    %862 = vmatpush.msra.mxu0 %v326
    %863 = vmatpush.msra.mxu0 %v325
    %864 = vmatpush.msra.mxu0 %v324
    %865 = vmatpush.msra.mxu0 %v323
    %866 = vmatpush.msra.mxu0 %v322
    %867 = vmatpush.msra.mxu0 %v321
    %868 = vmatpush.msra.mxu0 %v320
    %869 = vmatpush.msra.mxu0 %v319
    %870 = vmatmul.f32.gmra.mxu0 %v459
    %v871 = vpop.f32.mrf.mxu0
    %v872 = vadd.f32 %v852, %v871
    %873 = vdwg.mxu0
    %874 = vmatpush.msra.mxu0 %v350
    %875 = vmatpush.msra.mxu0 %v349
    %876 = vmatpush.msra.mxu0 %v348
    %877 = vmatpush.msra.mxu0 %v347
    %878 = vmatpush.msra.mxu0 %v346
    %879 = vmatpush.msra.mxu0 %v345
    %880 = vmatpush.msra.mxu0 %v344
    %881 = vmatpush.msra.mxu0 %v343
    %882 = vmatpush.msra.mxu0 %v342
    %883 = vmatpush.msra.mxu0 %v341
    %884 = vmatpush.msra.mxu0 %v340
    %885 = vmatpush.msra.mxu0 %v339
    %886 = vmatpush.msra.mxu0 %v338
    %887 = vmatpush.msra.mxu0 %v337
    %888 = vmatpush.msra.mxu0 %v336
    %889 = vmatpush.msra.mxu0 %v335
    %890 = vmatmul.f32.gmra.mxu0 %v460
    %v891 = vpop.f32.mrf.mxu0
    %v892 = vadd.f32 %v872, %v891
    %893 = vdwg.mxu0
    %894 = vmatpush.msra.mxu0 %v366
    %895 = vmatpush.msra.mxu0 %v365
    %896 = vmatpush.msra.mxu0 %v364
    %897 = vmatpush.msra.mxu0 %v363
    %898 = vmatpush.msra.mxu0 %v362
    %899 = vmatpush.msra.mxu0 %v361
    %900 = vmatpush.msra.mxu0 %v360
    %901 = vmatpush.msra.mxu0 %v359
    %902 = vmatpush.msra.mxu0 %v358
    %903 = vmatpush.msra.mxu0 %v357
    %904 = vmatpush.msra.mxu0 %v356
    %905 = vmatpush.msra.mxu0 %v355
    %906 = vmatpush.msra.mxu0 %v354
    %907 = vmatpush.msra.mxu0 %v353
    %908 = vmatpush.msra.mxu0 %v352
    %909 = vmatpush.msra.mxu0 %v351
    %910 = vmatmul.f32.gmra.mxu0 %v461
    %v911 = vpop.f32.mrf.mxu0
    %v912 = vadd.f32 %v892, %v911
    %913 = vdwg.mxu0
    %914 = vmatpush.msra.mxu0 %v382
    %915 = vmatpush.msra.mxu0 %v381
    %916 = vmatpush.msra.mxu0 %v380
    %917 = vmatpush.msra.mxu0 %v379
    %918 = vmatpush.msra.mxu0 %v378
    %919 = vmatpush.msra.mxu0 %v377
    %920 = vmatpush.msra.mxu0 %v376
    %921 = vmatpush.msra.mxu0 %v375
    %922 = vmatpush.msra.mxu0 %v374
    %923 = vmatpush.msra.mxu0 %v373
    %924 = vmatpush.msra.mxu0 %v372
    %925 = vmatpush.msra.mxu0 %v371
    %926 = vmatpush.msra.mxu0 %v370
    %927 = vmatpush.msra.mxu0 %v369
    %928 = vmatpush.msra.mxu0 %v368
    %929 = vmatpush.msra.mxu0 %v367
    %930 = vmatmul.f32.gmra.mxu0 %v462
    %v931 = vpop.f32.mrf.mxu0
    %v932 = vadd.f32 %v912, %v931
    %933 = vdwg.mxu0
    %934 = vmatpush.msra.mxu0 %v398
    %935 = vmatpush.msra.mxu0 %v397
    %936 = vmatpush.msra.mxu0 %v396
    %937 = vmatpush.msra.mxu0 %v395
    %938 = vmatpush.msra.mxu0 %v394
    %939 = vmatpush.msra.mxu0 %v393
    %940 = vmatpush.msra.mxu0 %v392
    %941 = vmatpush.msra.mxu0 %v391
    %942 = vmatpush.msra.mxu0 %v390
    %943 = vmatpush.msra.mxu0 %v389
    %944 = vmatpush.msra.mxu0 %v388
    %945 = vmatpush.msra.mxu0 %v387
    %946 = vmatpush.msra.mxu0 %v386
    %947 = vmatpush.msra.mxu0 %v385
    %948 = vmatpush.msra.mxu0 %v384
    %949 = vmatpush.msra.mxu0 %v383
    %950 = vmatmul.f32.gmra.mxu0 %v463
    %v951 = vpop.f32.mrf.mxu0
    %v952 = vadd.f32 %v932, %v951
    %953 = vdwg.mxu0
    %954 = vmatpush.msra.mxu0 %v414
    %955 = vmatpush.msra.mxu0 %v413
    %956 = vmatpush.msra.mxu0 %v412
    %957 = vmatpush.msra.mxu0 %v411
    %958 = vmatpush.msra.mxu0 %v410
    %959 = vmatpush.msra.mxu0 %v409
    %960 = vmatpush.msra.mxu0 %v408
    %961 = vmatpush.msra.mxu0 %v407
    %962 = vmatpush.msra.mxu0 %v406
    %963 = vmatpush.msra.mxu0 %v405
    %964 = vmatpush.msra.mxu0 %v404
    %965 = vmatpush.msra.mxu0 %v403
    %966 = vmatpush.msra.mxu0 %v402
    %967 = vmatpush.msra.mxu0 %v401
    %968 = vmatpush.msra.mxu0 %v400
    %969 = vmatpush.msra.mxu0 %v399
    %970 = vmatmul.f32.gmra.mxu0 %v464
    %v971 = vpop.f32.mrf.mxu0
    %v972 = vadd.f32 %v952, %v971
    %973 = vdwg.mxu0
    %974 = vmatpush.msra.mxu0 0.0
    %975 = vmatpush.msra.mxu0 0.0
    %976 = vmatpush.msra.mxu0 0.0
    %977 = vmatpush.msra.mxu0 0.0
    %978 = vmatpush.msra.mxu0 0.0
    %979 = vmatpush.msra.mxu0 0.0
    %980 = vmatpush.msra.mxu0 0.0
    %981 = vmatpush.msra.mxu0 0.0
    %982 = vmatpush.msra.mxu0 %v422
    %983 = vmatpush.msra.mxu0 %v421
    %984 = vmatpush.msra.mxu0 %v420
    %985 = vmatpush.msra.mxu0 %v419
    %986 = vmatpush.msra.mxu0 %v418
    %987 = vmatpush.msra.mxu0 %v417
    %988 = vmatpush.msra.mxu0 %v416
    %989 = vmatpush.msra.mxu0 %v415
    %990 = vmatmul.f32.gmra.mxu0 %v492
    %v991 = vpop.f32.mrf.mxu0
    %v992 = vadd.f32 %v972, %v991
    %993 = vdwg.mxu0
    %v994 = vmax.f32 %v992, 0.0
    %995 = vst [vmem:[#allocation2] sm:$0x3] %v994
    %v996 = vld [vmem:[%s3] sm:$0xff]
    %v997 = vld [vmem:[%s3 + $0x8] sm:$0xff]
    %v998 = vld [vmem:[%s3 + $0x10] sm:$0xff]
    %v999 = vld [vmem:[%s3 + $0x18] sm:$0xff]
    %v1000 = vld [vmem:[%s3 + $0x20] sm:$0xff]
    %v1001 = vld [vmem:[%s3 + $0x28] sm:$0xff]
    %v1002 = vld [vmem:[%s3 + $0x30] sm:$0xff]
    %v1003 = vld [vmem:[%s3 + $0x38] sm:$0xff]
    %v1004 = vld [vmem:[%s3 + $0x40] sm:$0xff]
    %v1005 = vld [vmem:[%s3 + $0x48] sm:$0xff]
    %v1006 = vld [vmem:[%s3 + $0x50] sm:$0xff]
    %v1007 = vld [vmem:[%s3 + $0x58] sm:$0xff]
    %v1008 = vld [vmem:[%s3 + $0x60] sm:$0xff]
    %v1009 = vld [vmem:[%s3 + $0x68] sm:$0xff]
    %v1010 = vld [vmem:[%s3 + $0x70] sm:$0xff]
    %v1011 = vld [vmem:[%s3 + $0x78] sm:$0xff]
    %v1012 = vld [vmem:[%s4] sm:$0x1]
    %v1014 = vperm.slane %v1012, 0
    %1016 = vmatpush.msra.mxu0 %v1011
    %1017 = vmatpush.msra.mxu0 %v1010
    %1018 = vmatpush.msra.mxu0 %v1009
    %1019 = vmatpush.msra.mxu0 %v1008
    %1020 = vmatpush.msra.mxu0 %v1007
    %1021 = vmatpush.msra.mxu0 %v1006
    %1022 = vmatpush.msra.mxu0 %v1005
    %1023 = vmatpush.msra.mxu0 %v1004
    %1024 = vmatpush.msra.mxu0 %v1003
    %1025 = vmatpush.msra.mxu0 %v1002
    %1026 = vmatpush.msra.mxu0 %v1001
    %1027 = vmatpush.msra.mxu0 %v1000
    %1028 = vmatpush.msra.mxu0 %v999
    %1029 = vmatpush.msra.mxu0 %v998
    %1030 = vmatpush.msra.mxu0 %v997
    %1031 = vmatpush.msra.mxu0 %v996
    %1032 = vmatmul.f32.gmra.mxu0 %v994
    %v1033 = vpop.f32.mrf.mxu0
    %v1034 = vadd.f32 %v1014, %v1033
    %1035 = vdwg.mxu0
    %1036 = vst [vmem:[#allocation4] sm:$0x3] %v1034
    // Predicated region
    $region22: #{cnn_forward.5} parent=1 // pred_check
      _
    $region23: #{cnn_forward.5} parent=1 // pred_check_branch
      %1038 = sbr.rel (0) target = $region25
    $region24: #{cnn_forward.5} parent=1 // pred_region
      %1040 = vsyncadd [#allocation3], 0
      %s1042 = sshll.u32 [#allocation2], 4
      %s1043 = int_to_ptr.vmem [resolvable:$true] %s1042
      %s1044 = sshll.u32 %s5, 4
      %s1045 = int_to_ptr.hbm [resolvable:$true] %s1044
      %1047 = dma.vmem_to_hbm [thread:$0]  %s1043, 32, %s1045, [#allocation3]
    $region25: #{cnn_forward.5} parent=1 // pred_fallthru
      _
    // Predicated region
    $region26: #{cnn_forward.5} parent=1 // pred_check
      _
    $region27: #{cnn_forward.5} parent=1 // pred_check_branch
      %1049 = sbr.rel (0) target = $region29
    $region28: #{cnn_forward.5} parent=1 // pred_region
      %1051 = vsyncadd [#allocation5], 0
      %s1053 = sshll.u32 [#allocation4], 4
      %s1054 = int_to_ptr.vmem [resolvable:$true] %s1053
      %s1055 = sshll.u32 %s6, 4
      %s1056 = int_to_ptr.hbm [resolvable:$true] %s1055
      %1058 = dma.vmem_to_hbm [thread:$0]  %s1054, 32, %s1056, [#allocation5]
    $region29: #{cnn_forward.5} parent=1 // pred_fallthru
      _
    // Predicated region
    $region30: #{cnn_forward.5} parent=1 // pred_check
      _
    $region31: #{cnn_forward.5} parent=1 // pred_check_branch
      %1060 = sbr.rel (0) target = $region33
    $region32: #{cnn_forward.5} parent=1 // pred_region
      %1062 = dma.done [#allocation3], 32
    $region33: #{cnn_forward.5} parent=1 // pred_fallthru
      _
    // Predicated region
    $region34: #{cnn_forward.5} parent=1 // pred_check
      _
    $region35: #{cnn_forward.5} parent=1 // pred_check_branch
      %1064 = sbr.rel (0) target = $region37
    $region36: #{cnn_forward.5} parent=1 // pred_region
      %1066 = dma.done [#allocation5], 32
    $region37: #{cnn_forward.5} parent=1 // pred_fallthru
      _
    %1067 = vsyncpa [#allocation3], 1
    %1068 = vsyncpa [#allocation5], 1

</llo_original>
